<compile_context>
chip_gen: v5e
topology: v5e:2x2
jax: 0.10.0
libtpu: 0.0.40
codegen_flags: <defaults>
</compile_context>

<pallas_src>
import functools

import jax
import jax.numpy as jnp
import numpy as np
from jax.experimental import pallas as pl
from jax.experimental.pallas import tpu as pltpu

_HIGHEST = jax.lax.Precision.HIGHEST


def _graphnorm_kernel(x_ref, sc_ref, ec_ref, sr_ref, er_ref, invn_ref,
                      invnm1_ref, gamma_ref, beta_ref, o_ref,
                      sum_ref, sq_ref, *, eps):
    # grid = (feature_tile, phase, row_block); row_block varies fastest.
    phase = pl.program_id(1)        # 0: accumulate stats, 1: normalize/store
    blk = pl.program_id(2)          # row-block index
    nblk = pl.num_programs(2)

    gpad = sum_ref.shape[0]
    brows = x_ref.shape[0]
    row0 = blk * brows              # global row offset of this block

    @pl.when((phase == 0) & (blk == 0))
    def _init():
        sum_ref[...] = jnp.zeros_like(sum_ref)
        sq_ref[...] = jnp.zeros_like(sq_ref)

    @pl.when(phase == 0)
    def _accumulate():
        x = x_ref[...]                                       # (brows, Ftile)
        # Build the (Gpad, brows) 0/1 segment-membership matrix in-kernel
        # from per-graph [start, end) row offsets (no dense one-hot in HBM).
        rows = jax.lax.broadcasted_iota(jnp.int32, (gpad, brows), 1) + row0
        oh = jnp.where((rows >= sc_ref[...]) & (rows < ec_ref[...]),
                       1.0, 0.0).astype(jnp.float32)
        sum_ref[...] += jnp.dot(oh, x, preferred_element_type=jnp.float32,
                                precision=_HIGHEST)
        sq_ref[...] += jnp.dot(oh, x * x, preferred_element_type=jnp.float32,
                               precision=_HIGHEST)

    @pl.when((phase == 0) & (blk == nblk - 1))
    def _finalize_stats():
        s = sum_ref[...]                                     # per-graph sum
        q = sq_ref[...]                                      # per-graph sum x^2
        mean = s * invn_ref[...]
        # unbiased variance (torch.std default, ddof=1) via E[x^2] form;
        # clamp tiny negatives from cancellation.
        var = jnp.maximum((q - s * mean) * invnm1_ref[...], 0.0)
        scale = 1.0 / (jnp.sqrt(var) + eps)                  # O(G*F) divide only
        # Fold gamma/beta here so phase 1 is a bare multiply-subtract:
        #   out = gamma*(x - mean)*scale + beta = a*x - b
        a = gamma_ref[...] * scale
        b = a * mean - beta_ref[...]
        sum_ref[...] = a                                     # reuse scratch
        sq_ref[...] = b

    @pl.when(phase == 1)
    def _normalize():
        x = x_ref[...]                                       # (brows, Ftile)
        rows = jax.lax.broadcasted_iota(jnp.int32, (brows, gpad), 0) + row0
        oht = jnp.where((rows >= sr_ref[...]) & (rows < er_ref[...]),
                        1.0, 0.0).astype(jnp.float32)        # (brows, Gpad)
        # Broadcast folded per-graph stats to nodes via MXU row selection.
        a_n = jnp.dot(oht, sum_ref[...], preferred_element_type=jnp.float32,
                      precision=_HIGHEST)
        b_n = jnp.dot(oht, sq_ref[...], preferred_element_type=jnp.float32,
                      precision=_HIGHEST)
        o_ref[...] = x * a_n - b_n


def _round_up(v, m):
    return ((v + m - 1) // m) * m


def graph_norm(x, graph_sizes, gamma, beta, eps=1e-5, block_rows=512):
    """GraphNorm forward. x: [N, F] float32; graph_sizes: python ints, sum == N."""
    N, F = x.shape
    G = len(graph_sizes)
    assert sum(graph_sizes) == N and G >= 1

    # ---- tiling ------------------------------------------------------------
    Fpad = _round_up(F, 128)                      # lane-dense feature axis
    if Fpad <= 512:
        Ftile = Fpad
    else:
        units = Fpad // 128                       # largest divisor giving <=512
        div = max(d for d in range(1, 5) if units % d == 0)
        Ftile = div * 128
    n_ft = Fpad // Ftile

    brows = _round_up(min(block_rows, N), 128)    # row block (multiple of 128)
    Npad = _round_up(N, brows)
    nblk = Npad // brows
    Gpad = _round_up(G, 8)

    # ---- host-side (numpy) segment metadata: tiny constants -----------------
    sizes = np.asarray(graph_sizes, np.int64)
    offs = np.concatenate([[0], np.cumsum(sizes)])
    starts_c = np.zeros((Gpad, 1), np.int32)
    ends_c = np.zeros((Gpad, 1), np.int32)        # padded graphs: start==end==0
    starts_c[:G, 0] = offs[:G]
    ends_c[:G, 0] = offs[1:G + 1]
    starts_r = np.ascontiguousarray(starts_c.reshape(1, Gpad))
    ends_r = np.ascontiguousarray(ends_c.reshape(1, Gpad))

    inv_n = np.zeros((Gpad, 1), np.float32)
    inv_n[:G, 0] = np.where(sizes > 0, 1.0 / np.maximum(sizes, 1), 0.0)
    inv_nm1 = np.zeros((Gpad, 1), np.float32)
    # torch.std(ddof=1) is NaN for single-node graphs; we return a finite
    # result (output == beta) instead of propagating NaN.
    inv_nm1[:G, 0] = np.where(sizes > 1, 1.0 / np.maximum(sizes - 1, 1), 0.0)

    # ---- pad only when needed; single slice out -----------------------------
    x_p = x.astype(jnp.float32)
    if Npad != N or Fpad != F:
        x_p = jnp.pad(x_p, ((0, Npad - N), (0, Fpad - F)))
    gamma_p = gamma.astype(jnp.float32).reshape(1, F)
    beta_p = beta.astype(jnp.float32).reshape(1, F)
    if Fpad != F:
        gamma_p = jnp.pad(gamma_p, ((0, 0), (0, Fpad - F)))
        beta_p = jnp.pad(beta_p, ((0, 0), (0, Fpad - F)))

    # ---- explicit VMEM budget (valid on v7x 64 MiB / v5e 16 MiB scoped) -----
    step_bytes = 4 * (2 * brows * Ftile           # x block, double-buffered
                      + 2 * brows * Ftile         # out block, double-buffered
                      + 2 * Gpad * Ftile          # stats scratch
                      + 2 * brows * Gpad          # in-kernel one-hot temps
                      + brows * Ftile)            # x*x temporary
    vmem_limit = int(min(max(step_bytes + (8 << 20), 32 << 20), 64 << 20))

    out_p = pl.pallas_call(
        functools.partial(_graphnorm_kernel, eps=eps),
        out_shape=jax.ShapeDtypeStruct((Npad, Fpad), jnp.float32),
        grid_spec=pltpu.PrefetchScalarGridSpec(
            num_scalar_prefetch=0,
            grid=(n_ft, 2, nblk),                             # (ftile, phase, block)
            in_specs=[
                pl.BlockSpec((brows, Ftile), lambda f, p, b: (b, f)),   # x
                pl.BlockSpec((Gpad, 1), lambda f, p, b: (0, 0)),        # starts col
                pl.BlockSpec((Gpad, 1), lambda f, p, b: (0, 0)),        # ends col
                pl.BlockSpec((1, Gpad), lambda f, p, b: (0, 0)),        # starts row
                pl.BlockSpec((1, Gpad), lambda f, p, b: (0, 0)),        # ends row
                pl.BlockSpec((Gpad, 1), lambda f, p, b: (0, 0)),        # 1/n
                pl.BlockSpec((Gpad, 1), lambda f, p, b: (0, 0)),        # 1/(n-1)
                pl.BlockSpec((1, Ftile), lambda f, p, b: (0, f)),       # gamma
                pl.BlockSpec((1, Ftile), lambda f, p, b: (0, f)),       # beta
            ],
            # Phase 0 parks on output block (0, f) (never written, only copied
            # out after phase 1 rewrites it); phase 1 writes each lane-dense
            # block exactly once.  Relies on the row-block axis being the
            # innermost (fastest) grid axis and phases staying sequential.
            out_specs=pl.BlockSpec((brows, Ftile), lambda f, p, b: (p * b, f)),
            scratch_shapes=[pltpu.VMEM((Gpad, Ftile), jnp.float32),
                            pltpu.VMEM((Gpad, Ftile), jnp.float32)],
        ),
        compiler_params=pltpu.CompilerParams(
            # Feature tiles are independent -> shard across TCs on v7x.
            # Phase/block axes carry a VMEM-scratch reduction -> sequential.
            dimension_semantics=("parallel", "arbitrary", "arbitrary"),
            vmem_limit_bytes=vmem_limit),
    )(x_p, jnp.asarray(starts_c), jnp.asarray(ends_c),
      jnp.asarray(starts_r), jnp.asarray(ends_r),
      jnp.asarray(inv_n), jnp.asarray(inv_nm1), gamma_p, beta_p)

    if Npad != N or Fpad != F:
        return out_p[:N, :F]
    return out_p


def _reference_graph_norm(x, graph_sizes, gamma, beta, eps=1e-5):
    outs = []
    off = 0
    for sz in graph_sizes:
        xi = x[off:off + sz]
        mean = xi.mean(axis=0, keepdims=True)
        std = xi.std(axis=0, ddof=1, keepdims=True)     # torch.std default
        outs.append((xi - mean) / (std + eps))
        off += sz
    return gamma * jnp.concatenate(outs, axis=0) + beta


if __name__ == "__main__":
    key = jax.random.PRNGKey(0)
    kx, kg, kb = jax.random.split(key, 3)

    num_features = 32
    graph_sizes = [13, 37, 22, 41, 9, 30, 25, 23]       # 8 graphs, 200 nodes
    total_nodes = sum(graph_sizes)

    x = jax.random.normal(kx, (total_nodes, num_features), dtype=jnp.float32)
    # Module init is gamma=1, beta=0; use non-trivial values so the affine
    # path is actually exercised.
    gamma = 1.0 + 0.1 * jax.random.normal(kg, (num_features,), dtype=jnp.float32)
    beta = 0.1 * jax.random.normal(kb, (num_features,), dtype=jnp.float32)

    out = graph_norm(x, graph_sizes, gamma, beta, eps=1e-5)
    out = jax.block_until_ready(out)

    ref = _reference_graph_norm(x, graph_sizes, gamma, beta, eps=1e-5)
    np.testing.assert_allclose(np.asarray(out), np.asarray(ref),
                               rtol=1e-4, atol=1e-4)
    print("KERNEL_OK")
</pallas_src>

<mosaic_0001>
module attributes {stable_mosaic.version = 11 : i64} {
  func.func @_graphnorm_kernel(%arg0: i32, %arg1: i32, %arg2: i32, %arg3: memref<256x128xf32, #tpu.memory_space<vmem>>, %arg4: memref<8x1xi32, #tpu.memory_space<vmem>>, %arg5: memref<8x1xi32, #tpu.memory_space<vmem>>, %arg6: memref<1x8xi32, #tpu.memory_space<vmem>>, %arg7: memref<1x8xi32, #tpu.memory_space<vmem>>, %arg8: memref<8x1xf32, #tpu.memory_space<vmem>>, %arg9: memref<8x1xf32, #tpu.memory_space<vmem>>, %arg10: memref<1x128xf32, #tpu.memory_space<vmem>>, %arg11: memref<1x128xf32, #tpu.memory_space<vmem>>, %arg12: memref<256x128xf32, #tpu.memory_space<vmem>>, %arg13: memref<8x128xf32, #tpu.memory_space<vmem>>, %arg14: memref<8x128xf32, #tpu.memory_space<vmem>>) attributes {dimension_semantics = [#tpu.dimension_semantics<parallel>, #tpu.dimension_semantics<arbitrary>, #tpu.dimension_semantics<arbitrary>], iteration_bounds = array<i64: 1, 2, 1>, scalar_prefetch = 0 : i64, scratch_operands = 2 : i64, tpu.core_type = #tpu.core_type<tc>, window_params = [{transform_indices = @transform_0, window_bounds = array<i64: 256, 128>}, {pipeline_mode = #tpu.pipeline_mode<synchronous>, transform_indices = @transform_1, window_bounds = array<i64: 8, 1>}, {pipeline_mode = #tpu.pipeline_mode<synchronous>, transform_indices = @transform_2, window_bounds = array<i64: 8, 1>}, {pipeline_mode = #tpu.pipeline_mode<synchronous>, transform_indices = @transform_3, window_bounds = array<i64: 1, 8>}, {pipeline_mode = #tpu.pipeline_mode<synchronous>, transform_indices = @transform_4, window_bounds = array<i64: 1, 8>}, {pipeline_mode = #tpu.pipeline_mode<synchronous>, transform_indices = @transform_5, window_bounds = array<i64: 8, 1>}, {pipeline_mode = #tpu.pipeline_mode<synchronous>, transform_indices = @transform_6, window_bounds = array<i64: 8, 1>}, {transform_indices = @transform_7, window_bounds = array<i64: 1, 128>}, {transform_indices = @transform_8, window_bounds = array<i64: 1, 128>}, {transform_indices = @transform_9, window_bounds = array<i64: 256, 128>}]} {
    %c256_i32 = arith.constant 256 : i32
    %0 = arith.muli %arg2, %c256_i32 : i32
    %c0_i32 = arith.constant 0 : i32
    %1 = arith.cmpi eq, %arg1, %c0_i32 : i32
    %c0_i32_0 = arith.constant 0 : i32
    %2 = arith.cmpi eq, %arg2, %c0_i32_0 : i32
    %3 = arith.andi %1, %2 : i1
    %4 = arith.extui %3 : i1 to i32
    %c0_i32_1 = arith.constant 0 : i32
    %5 = arith.cmpi ne, %4, %c0_i32_1 : i32
    scf.if %5 {
      %cst = arith.constant 0.000000e+00 : f32
      %17 = vector.broadcast %cst : f32 to vector<8x128xf32>
      %c0 = arith.constant 0 : index
      %c0_8 = arith.constant 0 : index
      %18 = vector.load %arg13[%c0, %c0_8] : memref<8x128xf32, #tpu.memory_space<vmem>>, vector<8x128xf32>
      tpu.vector_store %arg13[%c0, %c0_8], %17 {strides = array<i32>} : memref<8x128xf32, #tpu.memory_space<vmem>>, vector<8x128xf32>,
      %cst_9 = arith.constant 0.000000e+00 : f32
      %19 = vector.broadcast %cst_9 : f32 to vector<8x128xf32>
      %c0_10 = arith.constant 0 : index
      %c0_11 = arith.constant 0 : index
      %20 = vector.load %arg14[%c0_10, %c0_11] : memref<8x128xf32, #tpu.memory_space<vmem>>, vector<8x128xf32>
      tpu.vector_store %arg14[%c0_10, %c0_11], %19 {strides = array<i32>} : memref<8x128xf32, #tpu.memory_space<vmem>>, vector<8x128xf32>,
    } else {
    }
    %c0_i32_2 = arith.constant 0 : i32
    %6 = arith.cmpi eq, %arg1, %c0_i32_2 : i32
    %7 = arith.extui %6 : i1 to i32
    %c0_i32_3 = arith.constant 0 : i32
    %8 = arith.cmpi ne, %7, %c0_i32_3 : i32
    scf.if %8 {
      %c0 = arith.constant 0 : index
      %c0_8 = arith.constant 0 : index
      %17 = vector.load %arg3[%c0, %c0_8] : memref<256x128xf32, #tpu.memory_space<vmem>>, vector<256x128xf32>
      %18 = tpu.iota {dimensions = array<i32: 1>} : vector<8x256xi32>
      %19 = vector.broadcast %0 : i32 to vector<8x256xi32>
      %20 = arith.addi %18, %19 : vector<8x256xi32>
      %c0_9 = arith.constant 0 : index
      %c0_10 = arith.constant 0 : index
      %21 = vector.load %arg4[%c0_9, %c0_10] : memref<8x1xi32, #tpu.memory_space<vmem>>, vector<8x1xi32>
      %22 = vector.broadcast %21 : vector<8x1xi32> to vector<8x256xi32>
      %23 = arith.cmpi sge, %20, %22 : vector<8x256xi32>
      %c0_11 = arith.constant 0 : index
      %c0_12 = arith.constant 0 : index
      %24 = vector.load %arg5[%c0_11, %c0_12] : memref<8x1xi32, #tpu.memory_space<vmem>>, vector<8x1xi32>
      %25 = vector.broadcast %24 : vector<8x1xi32> to vector<8x256xi32>
      %26 = arith.cmpi slt, %20, %25 : vector<8x256xi32>
      %27 = arith.andi %23, %26 : vector<8x256xi1>
      %cst = arith.constant 1.000000e+00 : f32
      %cst_13 = arith.constant 0.000000e+00 : f32
      %28 = vector.broadcast %cst : f32 to vector<8x256xf32>
      %29 = vector.broadcast %cst_13 : f32 to vector<8x256xf32>
      %30 = arith.select %27, %28, %29 : vector<8x256xi1>, vector<8x256xf32>
      %c0_14 = arith.constant 0 : index
      %c0_15 = arith.constant 0 : index
      %31 = vector.load %arg13[%c0_14, %c0_15] : memref<8x128xf32, #tpu.memory_space<vmem>>, vector<8x128xf32>
      %cst_16 = arith.constant dense<0.000000e+00> : vector<8x128xf32>
      %32 = tpu.matmul %30, %17, %cst_16 {dimension_numbers = #tpu.dot_dimension_numbers<[1], [0], [0], [1], [0, 0, 1, 1], [], []>, precision = #tpu.contract_precision<fp32>} : vector<8x256xf32>, vector<256x128xf32>, vector<8x128xf32> -> vector<8x128xf32>
      %33 = arith.addf %31, %32 : vector<8x128xf32>
      %c0_17 = arith.constant 0 : index
      %c0_18 = arith.constant 0 : index
      %34 = vector.load %arg13[%c0_17, %c0_18] : memref<8x128xf32, #tpu.memory_space<vmem>>, vector<8x128xf32>
      tpu.vector_store %arg13[%c0_17, %c0_18], %33 {strides = array<i32>} : memref<8x128xf32, #tpu.memory_space<vmem>>, vector<8x128xf32>,
      %c0_19 = arith.constant 0 : index
      %c0_20 = arith.constant 0 : index
      %35 = vector.load %arg14[%c0_19, %c0_20] : memref<8x128xf32, #tpu.memory_space<vmem>>, vector<8x128xf32>
      %36 = arith.mulf %17, %17 : vector<256x128xf32>
      %cst_21 = arith.constant dense<0.000000e+00> : vector<8x128xf32>
      %37 = tpu.matmul %30, %36, %cst_21 {dimension_numbers = #tpu.dot_dimension_numbers<[1], [0], [0], [1], [0, 0, 1, 1], [], []>, precision = #tpu.contract_precision<fp32>} : vector<8x256xf32>, vector<256x128xf32>, vector<8x128xf32> -> vector<8x128xf32>
      %38 = arith.addf %35, %37 : vector<8x128xf32>
      %c0_22 = arith.constant 0 : index
      %c0_23 = arith.constant 0 : index
      %39 = vector.load %arg14[%c0_22, %c0_23] : memref<8x128xf32, #tpu.memory_space<vmem>>, vector<8x128xf32>
      tpu.vector_store %arg14[%c0_22, %c0_23], %38 {strides = array<i32>} : memref<8x128xf32, #tpu.memory_space<vmem>>, vector<8x128xf32>,
    } else {
    }
    %c0_i32_4 = arith.constant 0 : i32
    %9 = arith.cmpi eq, %arg1, %c0_i32_4 : i32
    %c0_i32_5 = arith.constant 0 : i32
    %10 = arith.cmpi eq, %arg2, %c0_i32_5 : i32
    %11 = arith.andi %9, %10 : i1
    %12 = arith.extui %11 : i1 to i32
    %c0_i32_6 = arith.constant 0 : i32
    %13 = arith.cmpi ne, %12, %c0_i32_6 : i32
    scf.if %13 {
      %c0 = arith.constant 0 : index
      %c0_8 = arith.constant 0 : index
      %17 = vector.load %arg13[%c0, %c0_8] : memref<8x128xf32, #tpu.memory_space<vmem>>, vector<8x128xf32>
      %c0_9 = arith.constant 0 : index
      %c0_10 = arith.constant 0 : index
      %18 = vector.load %arg14[%c0_9, %c0_10] : memref<8x128xf32, #tpu.memory_space<vmem>>, vector<8x128xf32>
      %c0_11 = arith.constant 0 : index
      %c0_12 = arith.constant 0 : index
      %19 = vector.load %arg8[%c0_11, %c0_12] : memref<8x1xf32, #tpu.memory_space<vmem>>, vector<8x1xf32>
      %20 = vector.broadcast %19 : vector<8x1xf32> to vector<8x128xf32>
      %21 = arith.mulf %17, %20 : vector<8x128xf32>
      %22 = arith.mulf %17, %21 : vector<8x128xf32>
      %23 = arith.subf %18, %22 : vector<8x128xf32>
      %c0_13 = arith.constant 0 : index
      %c0_14 = arith.constant 0 : index
      %24 = vector.load %arg9[%c0_13, %c0_14] : memref<8x1xf32, #tpu.memory_space<vmem>>, vector<8x1xf32>
      %25 = vector.broadcast %24 : vector<8x1xf32> to vector<8x128xf32>
      %26 = arith.mulf %23, %25 : vector<8x128xf32>
      %cst = arith.constant 0.000000e+00 : f32
      %27 = vector.broadcast %cst : f32 to vector<8x128xf32>
      %28 = arith.maximumf %26, %27 : vector<8x128xf32>
      %29 = math.sqrt %28 : vector<8x128xf32>
      %cst_15 = arith.constant 9.99999974E-6 : f32
      %30 = vector.broadcast %cst_15 : f32 to vector<8x128xf32>
      %31 = arith.addf %29, %30 : vector<8x128xf32>
      %cst_16 = arith.constant 1.000000e+00 : f32
      %32 = vector.broadcast %cst_16 : f32 to vector<8x128xf32>
      %33 = arith.divf %32, %31 : vector<8x128xf32>
      %c0_17 = arith.constant 0 : index
      %c0_18 = arith.constant 0 : index
      %34 = vector.load %arg10[%c0_17, %c0_18] : memref<1x128xf32, #tpu.memory_space<vmem>>, vector<1x128xf32>
      %35 = vector.broadcast %34 : vector<1x128xf32> to vector<8x128xf32>
      %36 = arith.mulf %35, %33 : vector<8x128xf32>
      %37 = arith.mulf %36, %21 : vector<8x128xf32>
      %c0_19 = arith.constant 0 : index
      %c0_20 = arith.constant 0 : index
      %38 = vector.load %arg11[%c0_19, %c0_20] : memref<1x128xf32, #tpu.memory_space<vmem>>, vector<1x128xf32>
      %39 = vector.broadcast %38 : vector<1x128xf32> to vector<8x128xf32>
      %40 = arith.subf %37, %39 : vector<8x128xf32>
      %c0_21 = arith.constant 0 : index
      %c0_22 = arith.constant 0 : index
      %41 = vector.load %arg13[%c0_21, %c0_22] : memref<8x128xf32, #tpu.memory_space<vmem>>, vector<8x128xf32>
      tpu.vector_store %arg13[%c0_21, %c0_22], %36 {strides = array<i32>} : memref<8x128xf32, #tpu.memory_space<vmem>>, vector<8x128xf32>,
      %c0_23 = arith.constant 0 : index
      %c0_24 = arith.constant 0 : index
      %42 = vector.load %arg14[%c0_23, %c0_24] : memref<8x128xf32, #tpu.memory_space<vmem>>, vector<8x128xf32>
      tpu.vector_store %arg14[%c0_23, %c0_24], %40 {strides = array<i32>} : memref<8x128xf32, #tpu.memory_space<vmem>>, vector<8x128xf32>,
    } else {
    }
    %c1_i32 = arith.constant 1 : i32
    %14 = arith.cmpi eq, %arg1, %c1_i32 : i32
    %15 = arith.extui %14 : i1 to i32
    %c0_i32_7 = arith.constant 0 : i32
    %16 = arith.cmpi ne, %15, %c0_i32_7 : i32
    scf.if %16 {
      %c0 = arith.constant 0 : index
      %c0_8 = arith.constant 0 : index
      %17 = vector.load %arg3[%c0, %c0_8] : memref<256x128xf32, #tpu.memory_space<vmem>>, vector<256x128xf32>
      %18 = tpu.iota {dimensions = array<i32: 0>} : vector<256x8xi32>
      %19 = vector.broadcast %0 : i32 to vector<256x8xi32>
      %20 = arith.addi %18, %19 : vector<256x8xi32>
      %c0_9 = arith.constant 0 : index
      %c0_10 = arith.constant 0 : index
      %21 = vector.load %arg6[%c0_9, %c0_10] : memref<1x8xi32, #tpu.memory_space<vmem>>, vector<1x8xi32>
      %22 = vector.broadcast %21 : vector<1x8xi32> to vector<256x8xi32>
      %23 = arith.cmpi sge, %20, %22 : vector<256x8xi32>
      %c0_11 = arith.constant 0 : index
      %c0_12 = arith.constant 0 : index
      %24 = vector.load %arg7[%c0_11, %c0_12] : memref<1x8xi32, #tpu.memory_space<vmem>>, vector<1x8xi32>
      %25 = vector.broadcast %24 : vector<1x8xi32> to vector<256x8xi32>
      %26 = arith.cmpi slt, %20, %25 : vector<256x8xi32>
      %27 = arith.andi %23, %26 : vector<256x8xi1>
      %cst = arith.constant 1.000000e+00 : f32
      %cst_13 = arith.constant 0.000000e+00 : f32
      %28 = vector.broadcast %cst : f32 to vector<256x8xf32>
      %29 = vector.broadcast %cst_13 : f32 to vector<256x8xf32>
      %30 = arith.select %27, %28, %29 : vector<256x8xi1>, vector<256x8xf32>
      %c0_14 = arith.constant 0 : index
      %c0_15 = arith.constant 0 : index
      %31 = vector.load %arg13[%c0_14, %c0_15] : memref<8x128xf32, #tpu.memory_space<vmem>>, vector<8x128xf32>
      %cst_16 = arith.constant dense<0.000000e+00> : vector<256x128xf32>
      %32 = tpu.matmul %30, %31, %cst_16 {dimension_numbers = #tpu.dot_dimension_numbers<[1], [0], [0], [1], [0, 0, 1, 1], [], []>, precision = #tpu.contract_precision<fp32>} : vector<256x8xf32>, vector<8x128xf32>, vector<256x128xf32> -> vector<256x128xf32>
      %c0_17 = arith.constant 0 : index
      %c0_18 = arith.constant 0 : index
      %33 = vector.load %arg14[%c0_17, %c0_18] : memref<8x128xf32, #tpu.memory_space<vmem>>, vector<8x128xf32>
      %cst_19 = arith.constant dense<0.000000e+00> : vector<256x128xf32>
      %34 = tpu.matmul %30, %33, %cst_19 {dimension_numbers = #tpu.dot_dimension_numbers<[1], [0], [0], [1], [0, 0, 1, 1], [], []>, precision = #tpu.contract_precision<fp32>} : vector<256x8xf32>, vector<8x128xf32>, vector<256x128xf32> -> vector<256x128xf32>
      %35 = arith.mulf %17, %32 : vector<256x128xf32>
      %36 = arith.subf %35, %34 : vector<256x128xf32>
      %c0_20 = arith.constant 0 : index
      %c0_21 = arith.constant 0 : index
      %37 = vector.load %arg12[%c0_20, %c0_21] : memref<256x128xf32, #tpu.memory_space<vmem>>, vector<256x128xf32>
      tpu.vector_store %arg12[%c0_20, %c0_21], %36 {strides = array<i32>} : memref<256x128xf32, #tpu.memory_space<vmem>>, vector<256x128xf32>,
    } else {
    }
    return
  }
  func.func @transform_0(%arg0: i32, %arg1: i32, %arg2: i32) -> (i32, i32) {
    %c0_i32 = arith.constant 0 : i32
    return %arg2, %arg0 : i32, i32
  }
  func.func @transform_1(%arg0: i32, %arg1: i32, %arg2: i32) -> (i32, i32) {
    %c0_i32 = arith.constant 0 : i32
    %c0_i32_0 = arith.constant 0 : i32
    %c0_i32_1 = arith.constant 0 : i32
    return %c0_i32, %c0_i32_0 : i32, i32
  }
  func.func @transform_2(%arg0: i32, %arg1: i32, %arg2: i32) -> (i32, i32) {
    %c0_i32 = arith.constant 0 : i32
    %c0_i32_0 = arith.constant 0 : i32
    %c0_i32_1 = arith.constant 0 : i32
    return %c0_i32, %c0_i32_0 : i32, i32
  }
  func.func @transform_3(%arg0: i32, %arg1: i32, %arg2: i32) -> (i32, i32) {
    %c0_i32 = arith.constant 0 : i32
    %c0_i32_0 = arith.constant 0 : i32
    %c0_i32_1 = arith.constant 0 : i32
    return %c0_i32, %c0_i32_0 : i32, i32
  }
  func.func @transform_4(%arg0: i32, %arg1: i32, %arg2: i32) -> (i32, i32) {
    %c0_i32 = arith.constant 0 : i32
    %c0_i32_0 = arith.constant 0 : i32
    %c0_i32_1 = arith.constant 0 : i32
    return %c0_i32, %c0_i32_0 : i32, i32
  }
  func.func @transform_5(%arg0: i32, %arg1: i32, %arg2: i32) -> (i32, i32) {
    %c0_i32 = arith.constant 0 : i32
    %c0_i32_0 = arith.constant 0 : i32
    %c0_i32_1 = arith.constant 0 : i32
    return %c0_i32, %c0_i32_0 : i32, i32
  }
  func.func @transform_6(%arg0: i32, %arg1: i32, %arg2: i32) -> (i32, i32) {
    %c0_i32 = arith.constant 0 : i32
    %c0_i32_0 = arith.constant 0 : i32
    %c0_i32_1 = arith.constant 0 : i32
    return %c0_i32, %c0_i32_0 : i32, i32
  }
  func.func @transform_7(%arg0: i32, %arg1: i32, %arg2: i32) -> (i32, i32) {
    %c0_i32 = arith.constant 0 : i32
    %c0_i32_0 = arith.constant 0 : i32
    return %c0_i32, %arg0 : i32, i32
  }
  func.func @transform_8(%arg0: i32, %arg1: i32, %arg2: i32) -> (i32, i32) {
    %c0_i32 = arith.constant 0 : i32
    %c0_i32_0 = arith.constant 0 : i32
    return %c0_i32, %arg0 : i32, i32
  }
  func.func @transform_9(%arg0: i32, %arg1: i32, %arg2: i32) -> (i32, i32) {
    %0 = arith.muli %arg1, %arg2 : i32
    %c0_i32 = arith.constant 0 : i32
    return %0, %arg0 : i32, i32
  }
}

</mosaic_0001>

<llo_original>
// kernel: tpu_custom_call.1
$region0: #{tpu_custom_call.1}
  #allocation0 [shape = 'u32[]', space=smem, size = 0x4, offset = 0x4, fixed_abs, tag = 'smem constant byte address 0x4 - core index']
  #allocation1 [shape = 'u32[72,128]{1,0:T(1,128)}', space=vmem, size = 0x9000, scoped, tag = 'internal scratch']
  #allocation2 [shape = 'f32[8,128]{1,0:T(8,128)}', space=vmem, size = 0x1000, scoped, tag = 'scratch operand']
  #allocation3 [shape = 'f32[8,128]{1,0:T(8,128)}', space=vmem, size = 0x1000, scoped, tag = 'scratch operand']
  %s0 = inlined_call_operand.hbm [shape: f32[256,128], index: 0, kind: input, shape index: {}]
  %s1 = inlined_call_operand.vmem [shape: s32[8,1], index: 1, kind: input, shape index: {}]
  %s2 = inlined_call_operand.vmem [shape: s32[8,1], index: 2, kind: input, shape index: {}]
  %s3 = inlined_call_operand.vmem [shape: s32[1,8], index: 3, kind: input, shape index: {}]
  %s4 = inlined_call_operand.vmem [shape: s32[1,8], index: 4, kind: input, shape index: {}]
  %s5 = inlined_call_operand.vmem [shape: f32[8,1], index: 5, kind: input, shape index: {}]
  %s6 = inlined_call_operand.vmem [shape: f32[8,1], index: 6, kind: input, shape index: {}]
  %s7 = inlined_call_operand.vmem [shape: f32[1,128], index: 7, kind: input, shape index: {}]
  %s8 = inlined_call_operand.vmem [shape: f32[1,128], index: 8, kind: input, shape index: {}]
  %s9 = inlined_call_operand.hbm [shape: f32[256,128], index: 9, kind: output, shape index: {}]
  %s10 = sld [smem:[#allocation0]]
  $region89: #{tpu_custom_call.1} parent=0
    _
  %s12 = ssub.s32 1, %s10
  %s13 = scalar_select 0, %s12, %s10
  $region1: #{tpu_custom_call.1} parent=0
    #allocation4 [shape = 'u8[131072]{0}', space=vmem, size = 0x20000, scoped, tag = 'input window, operand 0, single buffered']
    #allocation5 [shape = 's32[2]{0}', space=sflag, size = 0x8, scoped, tag = 'scoped memory for tpu_custom_call.1']
    #allocation6 [shape = 's32[2]{0}', space=sflag, size = 0x8, scoped, tag = 'scoped memory for tpu_custom_call.1']
    #allocation7 [shape = 'u8[262144]{0}', space=vmem, size = 0x40000, scoped, tag = 'output window, operand 0']
    %14 = vsyncpa [#allocation5], 0
    %15 = vsyncpa [#allocation6], 0
    %s16 = scalar_lea.sflag [#allocation6], 1
    %17 = vsyncpa %s16, 0
    loop: start=0, step=1, limit=4
    $region2: #{tpu_custom_call.1} parent=1 // loop_pre_header
      _
    $region3: #{tpu_custom_call.1} parent=1 // loop_header
      %s19 = sphi 0, %s23
      %p20 = scmp.ge.s32.totalorder %s19, 4
      %s26 = sphi 0, %s45
      %s27 = sphi 0, %s41
      %s28 = sphi 0, %s37
      %s29 = sphi 0, %s26
      %s30 = sphi 0, %s27
      %s31 = sphi 0, %s28
      %s32 = sphi 0, %s29
      %s33 = sphi 0, %s30
      %s34 = sphi 0, %s31
      %s50 = sphi 0, %s52
      %s53 = sphi 0, %s50
      %s54 = sphi 0, %s53
      %s70 = sphi 0, %s54
      %s74 = sphi 0, %s74
      %s76 = sphi 0, %s74
      %s77 = sphi 0, %s76
      %s91 = sphi 0, %s77
      %s95 = sphi 0, %s95
      %s97 = sphi 0, %s95
      %s98 = sphi 0, %s97
      %s112 = sphi 0, %s98
      %s116 = sphi 0, %s116
      %s118 = sphi 0, %s116
      %s119 = sphi 0, %s118
      %s133 = sphi 0, %s119
      %s137 = sphi 0, %s137
      %s139 = sphi 0, %s137
      %s140 = sphi 0, %s139
      %s154 = sphi 0, %s140
      %s158 = sphi 0, %s158
      %s160 = sphi 0, %s158
      %s161 = sphi 0, %s160
      %s175 = sphi 0, %s161
      %s179 = sphi 0, %s179
      %s181 = sphi 0, %s179
      %s182 = sphi 0, %s181
      %s196 = sphi 0, %s182
      %s202 = sphi 0, %s204
      %s205 = sphi 0, %s202
      %s206 = sphi 0, %s205
      %s222 = sphi 0, %s206
      %s228 = sphi 0, %s230
      %s231 = sphi 0, %s228
      %s232 = sphi 0, %s231
      %s248 = sphi 0, %s232
      %s258 = sphi 0, %s260
      %s261 = sphi 0, %s258
      %s262 = sphi 0, %s261
      %s278 = sphi 0, %s262
    $region4: #{tpu_custom_call.1} parent=1 // loop_header_branch
      %22 = sbr.rel (%p20) target = $region8
    $region5: #{tpu_custom_call.1} parent=1 // loop_body
      %s24 = ssub.s32 %s19, 1
      %s25 = ssub.s32 %s19, 2
      %s35 = sadd.s32 1, %s28
      %p36 = scmp.ge.s32.totalorder %s35, 1
      %s37 = scalar_select %p36, 0, %s35
      %s38 = sadd.s32 1, %s27
      %s39 = scalar_select %p36, %s38, %s27
      %p40 = scmp.ge.s32.totalorder %s39, 2
      %s41 = scalar_select %p40, 0, %s39
      %s42 = sadd.s32 1, %s26
      %s43 = scalar_select %p40, %s42, %s26
      %p44 = scmp.ge.s32.totalorder %s43, 1
      %s45 = scalar_select %p44, 0, %s43
      %s46 = ssub.s32 %s28, %s37
      %s47 = ssub.s32 %s26, %s45
      %s48 = sor.u32 %s46, %s47
      %p49 = scmp.eq.s32.totalorder %s48, 0
      %s51 = sadd.s32 %s50, 1
      %s52 = scalar_select %p49, %s50, %s51
      %p55 = pneg %p49
      %p56 = scmp.eq.s32.totalorder %s19, 1
      %p57 = por %p55, %p56
      %p58 = scmp.ne.s32.totalorder %s50, %s53
      %p59 = scmp.eq.s32.totalorder %s19, 0
      %p60 = por %p58, %p59
      %p61 = scmp.ne.s32.totalorder %s50, %s53
      %p62 = scmp.eq.s32.totalorder %s24, 1
      %p63 = por %p61, %p62
      %p64 = scmp.ne.s32.totalorder %s53, %s54
      %p65 = scmp.eq.s32.totalorder %s24, 0
      %p66 = por %p64, %p65
      %p67 = scmp.ne.s32.totalorder %s53, %s54
      %p68 = scmp.eq.s32.totalorder %s25, 1
      %p69 = por %p67, %p68
      %p71 = scmp.ne.s32.totalorder %s54, %s70
      %p72 = scmp.eq.s32.totalorder %s25, 0
      %p73 = por %p71, %p72
      %s75 = sadd.s32 %s74, 1
      %p78 = scmp.eq.s32.totalorder %s19, 1
      %p79 = scmp.ne.s32.totalorder %s74, %s76
      %p80 = scmp.eq.s32.totalorder %s19, 0
      %p81 = por %p79, %p80
      %p82 = scmp.ne.s32.totalorder %s74, %s76
      %p83 = scmp.eq.s32.totalorder %s24, 1
      %p84 = por %p82, %p83
      %p85 = scmp.ne.s32.totalorder %s76, %s77
      %p86 = scmp.eq.s32.totalorder %s24, 0
      %p87 = por %p85, %p86
      %p88 = scmp.ne.s32.totalorder %s76, %s77
      %p89 = scmp.eq.s32.totalorder %s25, 1
      %p90 = por %p88, %p89
      %p92 = scmp.ne.s32.totalorder %s77, %s91
      %p93 = scmp.eq.s32.totalorder %s25, 0
      %p94 = por %p92, %p93
      %s96 = sadd.s32 %s95, 1
      %p99 = scmp.eq.s32.totalorder %s19, 1
      %p100 = scmp.ne.s32.totalorder %s95, %s97
      %p101 = scmp.eq.s32.totalorder %s19, 0
      %p102 = por %p100, %p101
      %p103 = scmp.ne.s32.totalorder %s95, %s97
      %p104 = scmp.eq.s32.totalorder %s24, 1
      %p105 = por %p103, %p104
      %p106 = scmp.ne.s32.totalorder %s97, %s98
      %p107 = scmp.eq.s32.totalorder %s24, 0
      %p108 = por %p106, %p107
      %p109 = scmp.ne.s32.totalorder %s97, %s98
      %p110 = scmp.eq.s32.totalorder %s25, 1
      %p111 = por %p109, %p110
      %p113 = scmp.ne.s32.totalorder %s98, %s112
      %p114 = scmp.eq.s32.totalorder %s25, 0
      %p115 = por %p113, %p114
      %s117 = sadd.s32 %s116, 1
      %p120 = scmp.eq.s32.totalorder %s19, 1
      %p121 = scmp.ne.s32.totalorder %s116, %s118
      %p122 = scmp.eq.s32.totalorder %s19, 0
      %p123 = por %p121, %p122
      %p124 = scmp.ne.s32.totalorder %s116, %s118
      %p125 = scmp.eq.s32.totalorder %s24, 1
      %p126 = por %p124, %p125
      %p127 = scmp.ne.s32.totalorder %s118, %s119
      %p128 = scmp.eq.s32.totalorder %s24, 0
      %p129 = por %p127, %p128
      %p130 = scmp.ne.s32.totalorder %s118, %s119
      %p131 = scmp.eq.s32.totalorder %s25, 1
      %p132 = por %p130, %p131
      %p134 = scmp.ne.s32.totalorder %s119, %s133
      %p135 = scmp.eq.s32.totalorder %s25, 0
      %p136 = por %p134, %p135
      %s138 = sadd.s32 %s137, 1
      %p141 = scmp.eq.s32.totalorder %s19, 1
      %p142 = scmp.ne.s32.totalorder %s137, %s139
      %p143 = scmp.eq.s32.totalorder %s19, 0
      %p144 = por %p142, %p143
      %p145 = scmp.ne.s32.totalorder %s137, %s139
      %p146 = scmp.eq.s32.totalorder %s24, 1
      %p147 = por %p145, %p146
      %p148 = scmp.ne.s32.totalorder %s139, %s140
      %p149 = scmp.eq.s32.totalorder %s24, 0
      %p150 = por %p148, %p149
      %p151 = scmp.ne.s32.totalorder %s139, %s140
      %p152 = scmp.eq.s32.totalorder %s25, 1
      %p153 = por %p151, %p152
      %p155 = scmp.ne.s32.totalorder %s140, %s154
      %p156 = scmp.eq.s32.totalorder %s25, 0
      %p157 = por %p155, %p156
      %s159 = sadd.s32 %s158, 1
      %p162 = scmp.eq.s32.totalorder %s19, 1
      %p163 = scmp.ne.s32.totalorder %s158, %s160
      %p164 = scmp.eq.s32.totalorder %s19, 0
      %p165 = por %p163, %p164
      %p166 = scmp.ne.s32.totalorder %s158, %s160
      %p167 = scmp.eq.s32.totalorder %s24, 1
      %p168 = por %p166, %p167
      %p169 = scmp.ne.s32.totalorder %s160, %s161
      %p170 = scmp.eq.s32.totalorder %s24, 0
      %p171 = por %p169, %p170
      %p172 = scmp.ne.s32.totalorder %s160, %s161
      %p173 = scmp.eq.s32.totalorder %s25, 1
      %p174 = por %p172, %p173
      %p176 = scmp.ne.s32.totalorder %s161, %s175
      %p177 = scmp.eq.s32.totalorder %s25, 0
      %p178 = por %p176, %p177
      %s180 = sadd.s32 %s179, 1
      %p183 = scmp.eq.s32.totalorder %s19, 1
      %p184 = scmp.ne.s32.totalorder %s179, %s181
      %p185 = scmp.eq.s32.totalorder %s19, 0
      %p186 = por %p184, %p185
      %p187 = scmp.ne.s32.totalorder %s179, %s181
      %p188 = scmp.eq.s32.totalorder %s24, 1
      %p189 = por %p187, %p188
      %p190 = scmp.ne.s32.totalorder %s181, %s182
      %p191 = scmp.eq.s32.totalorder %s24, 0
      %p192 = por %p190, %p191
      %p193 = scmp.ne.s32.totalorder %s181, %s182
      %p194 = scmp.eq.s32.totalorder %s25, 1
      %p195 = por %p193, %p194
      %p197 = scmp.ne.s32.totalorder %s182, %s196
      %p198 = scmp.eq.s32.totalorder %s25, 0
      %p199 = por %p197, %p198
      %s200 = ssub.s32 %s26, %s45
      %p201 = scmp.eq.s32.totalorder %s200, 0
      %s203 = sadd.s32 %s202, 1
      %s204 = scalar_select %p201, %s202, %s203
      %p207 = pneg %p201
      %p208 = scmp.eq.s32.totalorder %s19, 1
      %p209 = por %p207, %p208
      %p210 = scmp.ne.s32.totalorder %s202, %s205
      %p211 = scmp.eq.s32.totalorder %s19, 0
      %p212 = por %p210, %p211
      %p213 = scmp.ne.s32.totalorder %s202, %s205
      %p214 = scmp.eq.s32.totalorder %s24, 1
      %p215 = por %p213, %p214
      %p216 = scmp.ne.s32.totalorder %s205, %s206
      %p217 = scmp.eq.s32.totalorder %s24, 0
      %p218 = por %p216, %p217
      %p219 = scmp.ne.s32.totalorder %s205, %s206
      %p220 = scmp.eq.s32.totalorder %s25, 1
      %p221 = por %p219, %p220
      %p223 = scmp.ne.s32.totalorder %s206, %s222
      %p224 = scmp.eq.s32.totalorder %s25, 0
      %p225 = por %p223, %p224
      %s226 = ssub.s32 %s26, %s45
      %p227 = scmp.eq.s32.totalorder %s226, 0
      %s229 = sadd.s32 %s228, 1
      %s230 = scalar_select %p227, %s228, %s229
      %p233 = pneg %p227
      %p234 = scmp.eq.s32.totalorder %s19, 1
      %p235 = por %p233, %p234
      %p236 = scmp.ne.s32.totalorder %s228, %s231
      %p237 = scmp.eq.s32.totalorder %s19, 0
      %p238 = por %p236, %p237
      %p239 = scmp.ne.s32.totalorder %s228, %s231
      %p240 = scmp.eq.s32.totalorder %s24, 1
      %p241 = por %p239, %p240
      %p242 = scmp.ne.s32.totalorder %s231, %s232
      %p243 = scmp.eq.s32.totalorder %s24, 0
      %p244 = por %p242, %p243
      %p245 = scmp.ne.s32.totalorder %s231, %s232
      %p246 = scmp.eq.s32.totalorder %s25, 1
      %p247 = por %p245, %p246
      %p249 = scmp.ne.s32.totalorder %s232, %s248
      %p250 = scmp.eq.s32.totalorder %s25, 0
      %p251 = por %p249, %p250
      %s252 = smul.u32 %s27, %s28
      %s253 = smul.u32 %s41, %s37
      %s254 = ssub.s32 %s252, %s253
      %s255 = ssub.s32 %s26, %s45
      %s256 = sor.u32 %s254, %s255
      %p257 = scmp.eq.s32.totalorder %s256, 0
      %s259 = sadd.s32 %s258, 1
      %s260 = scalar_select %p257, %s258, %s259
      %p263 = pneg %p257
      %p264 = scmp.eq.s32.totalorder %s19, 1
      %p265 = por %p263, %p264
      %p266 = scmp.ne.s32.totalorder %s258, %s261
      %p267 = scmp.eq.s32.totalorder %s19, 0
      %p268 = por %p266, %p267
      %p269 = scmp.ne.s32.totalorder %s258, %s261
      %p270 = scmp.eq.s32.totalorder %s24, 1
      %p271 = por %p269, %p270
      %p272 = scmp.ne.s32.totalorder %s261, %s262
      %p273 = scmp.eq.s32.totalorder %s24, 0
      %p274 = por %p272, %p273
      %p275 = scmp.ne.s32.totalorder %s261, %s262
      %p276 = scmp.eq.s32.totalorder %s25, 1
      %p277 = por %p275, %p276
      %p279 = scmp.ne.s32.totalorder %s262, %s278
      %p280 = scmp.eq.s32.totalorder %s25, 0
      %p281 = por %p279, %p280
      %p282 = scmp.le.s32.totalorder 1, %s19
      %p283 = scmp.lt.s32.totalorder %s19, 3
      %p284 = pnand %p282, %p283
      %p285 = pneg %p284
      // Predicated region
      $region9: #{tpu_custom_call.1} parent=5 // pred_check
        _
      $region10: #{tpu_custom_call.1} parent=5 // pred_check_branch
        %287 = sbr.rel (%p284) target = $region12
      $region11: #{tpu_custom_call.1} parent=5 // pred_region
        %s288 = ssub.s32 %s19, 1
        // Predicated region
        $region13: #{tpu_custom_call.1} parent=11 // pred_check
          %p289 = pneg %p66
        $region14: #{tpu_custom_call.1} parent=11 // pred_check_branch
          %291 = sbr.rel (%p289) target = $region16
        $region15: #{tpu_custom_call.1} parent=11 // pred_region
          %s292 = smul.u32 32, %s31
          %294 = vsyncadd [#allocation5], 0
          %s295 = sadd.s32 %s29, %s292
          %s296 = smul.addr %s295, 8
          %s297 = scalar_lea.hbm %s0, %s296
          %s298 = sshll.u32 %s297, 4
          %s299 = int_to_ptr.hbm [resolvable:$true] %s298
          %s300 = sshll.u32 [#allocation4], 4
          %s301 = int_to_ptr.vmem [resolvable:$true] %s300
          %306 = dma.hbm_to_vmem [thread:$0]  %s299, 4096, %s301, [#allocation5], 128, 128, 8
        $region16: #{tpu_custom_call.1} parent=11 // pred_fallthru
          _
        // Predicated region
        $region17: #{tpu_custom_call.1} parent=11 // pred_check
          %p307 = pneg %p87
        $region18: #{tpu_custom_call.1} parent=11 // pred_check_branch
          %309 = sbr.rel (%p307) target = $region20
        $region19: #{tpu_custom_call.1} parent=11 // pred_region
          _
        $region20: #{tpu_custom_call.1} parent=11 // pred_fallthru
          _
        // Predicated region
        $region21: #{tpu_custom_call.1} parent=11 // pred_check
          %p310 = pneg %p108
        $region22: #{tpu_custom_call.1} parent=11 // pred_check_branch
          %312 = sbr.rel (%p310) target = $region24
        $region23: #{tpu_custom_call.1} parent=11 // pred_region
          _
        $region24: #{tpu_custom_call.1} parent=11 // pred_fallthru
          _
        // Predicated region
        $region25: #{tpu_custom_call.1} parent=11 // pred_check
          %p313 = pneg %p129
        $region26: #{tpu_custom_call.1} parent=11 // pred_check_branch
          %315 = sbr.rel (%p313) target = $region28
        $region27: #{tpu_custom_call.1} parent=11 // pred_region
          _
        $region28: #{tpu_custom_call.1} parent=11 // pred_fallthru
          _
        // Predicated region
        $region29: #{tpu_custom_call.1} parent=11 // pred_check
          %p316 = pneg %p150
        $region30: #{tpu_custom_call.1} parent=11 // pred_check_branch
          %318 = sbr.rel (%p316) target = $region32
        $region31: #{tpu_custom_call.1} parent=11 // pred_region
          _
        $region32: #{tpu_custom_call.1} parent=11 // pred_fallthru
          _
        // Predicated region
        $region33: #{tpu_custom_call.1} parent=11 // pred_check
          %p319 = pneg %p171
        $region34: #{tpu_custom_call.1} parent=11 // pred_check_branch
          %321 = sbr.rel (%p319) target = $region36
        $region35: #{tpu_custom_call.1} parent=11 // pred_region
          _
        $region36: #{tpu_custom_call.1} parent=11 // pred_fallthru
          _
        // Predicated region
        $region37: #{tpu_custom_call.1} parent=11 // pred_check
          %p322 = pneg %p192
        $region38: #{tpu_custom_call.1} parent=11 // pred_check_branch
          %324 = sbr.rel (%p322) target = $region40
        $region39: #{tpu_custom_call.1} parent=11 // pred_region
          _
        $region40: #{tpu_custom_call.1} parent=11 // pred_fallthru
          _
        // Predicated region
        $region41: #{tpu_custom_call.1} parent=11 // pred_check
          %p325 = pneg %p218
        $region42: #{tpu_custom_call.1} parent=11 // pred_check_branch
          %327 = sbr.rel (%p325) target = $region44
        $region43: #{tpu_custom_call.1} parent=11 // pred_region
          %p328 = scmp.lt.s32.totalorder %s29, 0
          %s329 = scalar_select %p328, %s29, 0
          %s330 = scalar_lea.vmem %s7, %s329
        $region44: #{tpu_custom_call.1} parent=11 // pred_fallthru
          _
        // Predicated region
        $region45: #{tpu_custom_call.1} parent=11 // pred_check
          %p331 = pneg %p244
        $region46: #{tpu_custom_call.1} parent=11 // pred_check_branch
          %333 = sbr.rel (%p331) target = $region48
        $region47: #{tpu_custom_call.1} parent=11 // pred_region
          %p334 = scmp.lt.s32.totalorder %s29, 0
          %s335 = scalar_select %p334, %s29, 0
          %s336 = scalar_lea.vmem %s8, %s335
        $region48: #{tpu_custom_call.1} parent=11 // pred_fallthru
          _
      $region12: #{tpu_custom_call.1} parent=5 // pred_fallthru
        _
      %p337 = scmp.lt.s32.totalorder %s19, 2
      // Predicated region
      $region49: #{tpu_custom_call.1} parent=5 // pred_check
        %p338 = pneg %p337
      $region50: #{tpu_custom_call.1} parent=5 // pred_check_branch
        %340 = sbr.rel (%p338) target = $region52
      $region51: #{tpu_custom_call.1} parent=5 // pred_region
        _
      $region52: #{tpu_custom_call.1} parent=5 // pred_fallthru
        _
      %p341 = scmp.le.s32.totalorder 1, %s19
      %p342 = scmp.lt.s32.totalorder %s19, 3
      %p343 = pnand %p341, %p342
      %p344 = pneg %p343
      // Predicated region
      $region53: #{tpu_custom_call.1} parent=5 // pred_check
        _
      $region54: #{tpu_custom_call.1} parent=5 // pred_check_branch
        %346 = sbr.rel (%p343) target = $region56
      $region55: #{tpu_custom_call.1} parent=5 // pred_region
        %s347 = ssub.s32 %s19, 1
        // Predicated region
        $region57: #{tpu_custom_call.1} parent=55 // pred_check
          %p348 = pneg %p66
        $region58: #{tpu_custom_call.1} parent=55 // pred_check_branch
          %350 = sbr.rel (%p348) target = $region60
        $region59: #{tpu_custom_call.1} parent=55 // pred_region
          %352 = dma.done [#allocation5], 4096
        $region60: #{tpu_custom_call.1} parent=55 // pred_fallthru
          _
        %p353 = pneg %p66
        %p354 = pneg %p63
        %p355 = pneg %p87
        %p356 = pneg %p84
        %p357 = pneg %p108
        %p358 = pneg %p105
        %p359 = pneg %p129
        %p360 = pneg %p126
        %p361 = pneg %p150
        %p362 = pneg %p147
        %p363 = pneg %p171
        %p364 = pneg %p168
        %p365 = pneg %p192
        %p366 = pneg %p189
        %p367 = scmp.lt.s32.totalorder %s29, 0
        %s368 = scalar_select %p367, %s29, 0
        %s369 = scalar_lea.vmem %s7, %s368
        %p370 = pneg %p218
        %p371 = pneg %p215
        %p372 = scmp.lt.s32.totalorder %s29, 0
        %s373 = scalar_select %p372, %s29, 0
        %s374 = scalar_lea.vmem %s8, %s373
        %p375 = pneg %p244
        %p376 = pneg %p241
        %p377 = pneg %p274
        %p378 = pneg %p271
        %s379 = sand.u32 %s261, 1
        %s380 = scalar_lea.sflag [#allocation6], %s379
        %s381 = sand.u32 %s261, 1
        %s382 = smul.addr %s381, 256
        %s383 = scalar_lea.vmem [#allocation7], %s382
        %s384 = smul.u32 32, %s31
        %p385 = scmp.lt.s32.totalorder %s29, 0
        %s386 = scalar_select %p385, %s29, 0
        %s387 = scalar_lea.vmem %s7, %s386
        %p388 = scmp.lt.s32.totalorder %s29, 0
        %s389 = scalar_select %p388, %s29, 0
        %s390 = scalar_lea.vmem %s8, %s389
        %s391 = smul.u32 %s30, %s31
        %s392 = smul.u32 32, %s391
        %s393 = smul.u32 %s31, 256
        %p394 = scmp.eq.s32.totalorder %s30, 0
        %p395 = scmp.eq.s32.totalorder %s31, 0
        %p396 = pnand %p394, %p395
        %p397 = pneg %p396
        // Predicated region
        $region61: #{tpu_custom_call.1} parent=55 // pred_check
          _
        $region62: #{tpu_custom_call.1} parent=55 // pred_check_branch
          %399 = sbr.rel (%p396) target = $region64
        $region63: #{tpu_custom_call.1} parent=55 // pred_region
          %400 = vst [vmem:[#allocation2] sm:$0xff] 0.0
          %401 = vst [vmem:[#allocation3] sm:$0xff] 0.0
        $region64: #{tpu_custom_call.1} parent=55 // pred_fallthru
          _
        // Predicated region
        $region65: #{tpu_custom_call.1} parent=55 // pred_check
          %p402 = pneg %p394
        $region66: #{tpu_custom_call.1} parent=55 // pred_check_branch
          %404 = sbr.rel (%p402) target = $region68
        $region67: #{tpu_custom_call.1} parent=55 // pred_region
          %v405 = vld [vmem:[#allocation4] sm:$0xff]
          %v406 = vld [vmem:[#allocation4 + $0x8] sm:$0xff]
          %v407 = vld [vmem:[#allocation4 + $0x10] sm:$0xff]
          %v408 = vld [vmem:[#allocation4 + $0x18] sm:$0xff]
          %v409 = vld [vmem:[#allocation4 + $0x20] sm:$0xff]
          %v410 = vld [vmem:[#allocation4 + $0x28] sm:$0xff]
          %v411 = vld [vmem:[#allocation4 + $0x30] sm:$0xff]
          %v412 = vld [vmem:[#allocation4 + $0x38] sm:$0xff]
          %v413 = vld [vmem:[#allocation4 + $0x40] sm:$0xff]
          %v414 = vld [vmem:[#allocation4 + $0x48] sm:$0xff]
          %v415 = vld [vmem:[#allocation4 + $0x50] sm:$0xff]
          %v416 = vld [vmem:[#allocation4 + $0x58] sm:$0xff]
          %v417 = vld [vmem:[#allocation4 + $0x60] sm:$0xff]
          %v418 = vld [vmem:[#allocation4 + $0x68] sm:$0xff]
          %v419 = vld [vmem:[#allocation4 + $0x70] sm:$0xff]
          %v420 = vld [vmem:[#allocation4 + $0x78] sm:$0xff]
          %v421 = vld [vmem:[#allocation4 + $0x80] sm:$0xff]
          %v422 = vld [vmem:[#allocation4 + $0x88] sm:$0xff]
          %v423 = vld [vmem:[#allocation4 + $0x90] sm:$0xff]
          %v424 = vld [vmem:[#allocation4 + $0x98] sm:$0xff]
          %v425 = vld [vmem:[#allocation4 + $0xa0] sm:$0xff]
          %v426 = vld [vmem:[#allocation4 + $0xa8] sm:$0xff]
          %v427 = vld [vmem:[#allocation4 + $0xb0] sm:$0xff]
          %v428 = vld [vmem:[#allocation4 + $0xb8] sm:$0xff]
          %v429 = vld [vmem:[#allocation4 + $0xc0] sm:$0xff]
          %v430 = vld [vmem:[#allocation4 + $0xc8] sm:$0xff]
          %v431 = vld [vmem:[#allocation4 + $0xd0] sm:$0xff]
          %v432 = vld [vmem:[#allocation4 + $0xd8] sm:$0xff]
          %v433 = vld [vmem:[#allocation4 + $0xe0] sm:$0xff]
          %v434 = vld [vmem:[#allocation4 + $0xe8] sm:$0xff]
          %v435 = vld [vmem:[#allocation4 + $0xf0] sm:$0xff]
          %v436 = vld [vmem:[#allocation4 + $0xf8] sm:$0xff]
          %v437 = vlaneseq
          %v438 = vand.u32 %v437, 127
          %v439 = vadd.s32 %v438, 128
          %v440 = vstv %s393
          %v441 = vadd.s32 %v438, %v440
          %v442 = vadd.s32 %v439, %v440
          %v443 = vld [vmem:[%s1] sm:$0xff]
          %444 = vset.pattern.permute.xlu0 0
          %445 = vperm.xlu0 %444, %v443
          %v446 = vpop.permute.xlu0 %445
          %vm447 = vcmp.ge.s32.totalorder %v441, %v446
          %vm448 = vcmp.ge.s32.totalorder %v442, %v446
          %v449 = vld [vmem:[%s2] sm:$0xff]
          %450 = vset.pattern.permute.xlu0 0
          %451 = vperm.xlu0 %450, %v449
          %v452 = vpop.permute.xlu0 %451
          %vm453 = vcmp.lt.s32.totalorder %v441, %v452
          %vm454 = vcmp.lt.s32.totalorder %v442, %v452
          %vm455 = vmand %vm447, %vm453
          %vm456 = vmand %vm448, %vm454
          %v457 = vsel %vm455, 1.0, 0.0
          %v458 = vsel %vm456, 1.0, 0.0
          %v459 = vld [vmem:[#allocation2] sm:$0xff]
          %v460 = vand.u32 %v420, 4294901760
          %461 = vmatpush.msra.mxu0 %v460
          %v462 = vand.u32 %v419, 4294901760
          %463 = vmatpush.msra.mxu0 %v462
          %v464 = vand.u32 %v418, 4294901760
          %465 = vmatpush.msra.mxu0 %v464
          %v466 = vand.u32 %v417, 4294901760
          %467 = vmatpush.msra.mxu0 %v466
          %v468 = vand.u32 %v416, 4294901760
          %469 = vmatpush.msra.mxu0 %v468
          %v470 = vand.u32 %v415, 4294901760
          %471 = vmatpush.msra.mxu0 %v470
          %v472 = vand.u32 %v414, 4294901760
          %473 = vmatpush.msra.mxu0 %v472
          %v474 = vand.u32 %v413, 4294901760
          %475 = vmatpush.msra.mxu0 %v474
          %v476 = vand.u32 %v412, 4294901760
          %477 = vmatpush.msra.mxu0 %v476
          %v478 = vand.u32 %v411, 4294901760
          %479 = vmatpush.msra.mxu0 %v478
          %v480 = vand.u32 %v410, 4294901760
          %481 = vmatpush.msra.mxu0 %v480
          %v482 = vand.u32 %v409, 4294901760
          %483 = vmatpush.msra.mxu0 %v482
          %v484 = vand.u32 %v408, 4294901760
          %485 = vmatpush.msra.mxu0 %v484
          %v486 = vand.u32 %v407, 4294901760
          %487 = vmatpush.msra.mxu0 %v486
          %v488 = vand.u32 %v406, 4294901760
          %489 = vmatpush.msra.mxu0 %v488
          %v490 = vand.u32 %v405, 4294901760
          %491 = vmatpush.msra.mxu0 %v490
          %v492 = vsub.f32 %v457, %v457
          %v493 = vand.u32 %v492, 4294901760
          %v494 = vsub.f32 %v492, %v493
          %v495 = vand.u32 %v494, 4294901760
          %496 = vmatmul.f32.gmra.mxu0 %v495
          %v497 = vpop.f32.mrf.mxu0
          %v498 = vadd.f32 0.0, %v497
          %499 = vdwg.mxu0
          %v500 = vand.u32 %v420, 4294901760
          %v501 = vsub.f32 %v420, %v500
          %v502 = vand.u32 %v501, 4294901760
          %v503 = vsub.f32 %v501, %v502
          %v504 = vand.u32 %v503, 4294901760
          %505 = vmatpush.msra.mxu0 %v504
          %v506 = vand.u32 %v419, 4294901760
          %v507 = vsub.f32 %v419, %v506
          %v508 = vand.u32 %v507, 4294901760
          %v509 = vsub.f32 %v507, %v508
          %v510 = vand.u32 %v509, 4294901760
          %511 = vmatpush.msra.mxu0 %v510
          %v512 = vand.u32 %v418, 4294901760
          %v513 = vsub.f32 %v418, %v512
          %v514 = vand.u32 %v513, 4294901760
          %v515 = vsub.f32 %v513, %v514
          %v516 = vand.u32 %v515, 4294901760
          %517 = vmatpush.msra.mxu0 %v516
          %v518 = vand.u32 %v417, 4294901760
          %v519 = vsub.f32 %v417, %v518
          %v520 = vand.u32 %v519, 4294901760
          %v521 = vsub.f32 %v519, %v520
          %v522 = vand.u32 %v521, 4294901760
          %523 = vmatpush.msra.mxu0 %v522
          %v524 = vand.u32 %v416, 4294901760
          %v525 = vsub.f32 %v416, %v524
          %v526 = vand.u32 %v525, 4294901760
          %v527 = vsub.f32 %v525, %v526
          %v528 = vand.u32 %v527, 4294901760
          %529 = vmatpush.msra.mxu0 %v528
          %v530 = vand.u32 %v415, 4294901760
          %v531 = vsub.f32 %v415, %v530
          %v532 = vand.u32 %v531, 4294901760
          %v533 = vsub.f32 %v531, %v532
          %v534 = vand.u32 %v533, 4294901760
          %535 = vmatpush.msra.mxu0 %v534
          %v536 = vand.u32 %v414, 4294901760
          %v537 = vsub.f32 %v414, %v536
          %v538 = vand.u32 %v537, 4294901760
          %v539 = vsub.f32 %v537, %v538
          %v540 = vand.u32 %v539, 4294901760
          %541 = vmatpush.msra.mxu0 %v540
          %v542 = vand.u32 %v413, 4294901760
          %v543 = vsub.f32 %v413, %v542
          %v544 = vand.u32 %v543, 4294901760
          %v545 = vsub.f32 %v543, %v544
          %v546 = vand.u32 %v545, 4294901760
          %547 = vmatpush.msra.mxu0 %v546
          %v548 = vand.u32 %v412, 4294901760
          %v549 = vsub.f32 %v412, %v548
          %v550 = vand.u32 %v549, 4294901760
          %v551 = vsub.f32 %v549, %v550
          %v552 = vand.u32 %v551, 4294901760
          %553 = vmatpush.msra.mxu0 %v552
          %v554 = vand.u32 %v411, 4294901760
          %v555 = vsub.f32 %v411, %v554
          %v556 = vand.u32 %v555, 4294901760
          %v557 = vsub.f32 %v555, %v556
          %v558 = vand.u32 %v557, 4294901760
          %559 = vmatpush.msra.mxu0 %v558
          %v560 = vand.u32 %v410, 4294901760
          %v561 = vsub.f32 %v410, %v560
          %v562 = vand.u32 %v561, 4294901760
          %v563 = vsub.f32 %v561, %v562
          %v564 = vand.u32 %v563, 4294901760
          %565 = vmatpush.msra.mxu0 %v564
          %v566 = vand.u32 %v409, 4294901760
          %v567 = vsub.f32 %v409, %v566
          %v568 = vand.u32 %v567, 4294901760
          %v569 = vsub.f32 %v567, %v568
          %v570 = vand.u32 %v569, 4294901760
          %571 = vmatpush.msra.mxu0 %v570
          %v572 = vand.u32 %v408, 4294901760
          %v573 = vsub.f32 %v408, %v572
          %v574 = vand.u32 %v573, 4294901760
          %v575 = vsub.f32 %v573, %v574
          %v576 = vand.u32 %v575, 4294901760
          %577 = vmatpush.msra.mxu0 %v576
          %v578 = vand.u32 %v407, 4294901760
          %v579 = vsub.f32 %v407, %v578
          %v580 = vand.u32 %v579, 4294901760
          %v581 = vsub.f32 %v579, %v580
          %v582 = vand.u32 %v581, 4294901760
          %583 = vmatpush.msra.mxu0 %v582
          %v584 = vand.u32 %v406, 4294901760
          %v585 = vsub.f32 %v406, %v584
          %v586 = vand.u32 %v585, 4294901760
          %v587 = vsub.f32 %v585, %v586
          %v588 = vand.u32 %v587, 4294901760
          %589 = vmatpush.msra.mxu0 %v588
          %v590 = vand.u32 %v405, 4294901760
          %v591 = vsub.f32 %v405, %v590
          %v592 = vand.u32 %v591, 4294901760
          %v593 = vsub.f32 %v591, %v592
          %v594 = vand.u32 %v593, 4294901760
          %595 = vmatpush.msra.mxu0 %v594
          %596 = vmatmul.f32.gmra.mxu0 %v457
          %v597 = vpop.f32.mrf.mxu0
          %v598 = vadd.f32 %v498, %v597
          %599 = vdwg.mxu0
          %v600 = vand.u32 %v420, 4294901760
          %v601 = vsub.f32 %v420, %v600
          %602 = vmatpush.msra.mxu0 %v601
          %v603 = vand.u32 %v419, 4294901760
          %v604 = vsub.f32 %v419, %v603
          %605 = vmatpush.msra.mxu0 %v604
          %v606 = vand.u32 %v418, 4294901760
          %v607 = vsub.f32 %v418, %v606
          %608 = vmatpush.msra.mxu0 %v607
          %v609 = vand.u32 %v417, 4294901760
          %v610 = vsub.f32 %v417, %v609
          %611 = vmatpush.msra.mxu0 %v610
          %v612 = vand.u32 %v416, 4294901760
          %v613 = vsub.f32 %v416, %v612
          %614 = vmatpush.msra.mxu0 %v613
          %v615 = vand.u32 %v415, 4294901760
          %v616 = vsub.f32 %v415, %v615
          %617 = vmatpush.msra.mxu0 %v616
          %v618 = vand.u32 %v414, 4294901760
          %v619 = vsub.f32 %v414, %v618
          %620 = vmatpush.msra.mxu0 %v619
          %v621 = vand.u32 %v413, 4294901760
          %v622 = vsub.f32 %v413, %v621
          %623 = vmatpush.msra.mxu0 %v622
          %v624 = vand.u32 %v412, 4294901760
          %v625 = vsub.f32 %v412, %v624
          %626 = vmatpush.msra.mxu0 %v625
          %v627 = vand.u32 %v411, 4294901760
          %v628 = vsub.f32 %v411, %v627
          %629 = vmatpush.msra.mxu0 %v628
          %v630 = vand.u32 %v410, 4294901760
          %v631 = vsub.f32 %v410, %v630
          %632 = vmatpush.msra.mxu0 %v631
          %v633 = vand.u32 %v409, 4294901760
          %v634 = vsub.f32 %v409, %v633
          %635 = vmatpush.msra.mxu0 %v634
          %v636 = vand.u32 %v408, 4294901760
          %v637 = vsub.f32 %v408, %v636
          %638 = vmatpush.msra.mxu0 %v637
          %v639 = vand.u32 %v407, 4294901760
          %v640 = vsub.f32 %v407, %v639
          %641 = vmatpush.msra.mxu0 %v640
          %v642 = vand.u32 %v406, 4294901760
          %v643 = vsub.f32 %v406, %v642
          %644 = vmatpush.msra.mxu0 %v643
          %v645 = vand.u32 %v405, 4294901760
          %v646 = vsub.f32 %v405, %v645
          %647 = vmatpush.msra.mxu0 %v646
          %v648 = vsub.f32 %v457, %v457
          %649 = vmatmul.f32.gmra.mxu0 %v648
          %v650 = vpop.f32.mrf.mxu0
          %v651 = vadd.f32 %v598, %v650
          %652 = vdwg.mxu0
          %v653 = vand.u32 %v420, 4294901760
          %654 = vmatpush.msra.mxu0 %v653
          %v655 = vand.u32 %v419, 4294901760
          %656 = vmatpush.msra.mxu0 %v655
          %v657 = vand.u32 %v418, 4294901760
          %658 = vmatpush.msra.mxu0 %v657
          %v659 = vand.u32 %v417, 4294901760
          %660 = vmatpush.msra.mxu0 %v659
          %v661 = vand.u32 %v416, 4294901760
          %662 = vmatpush.msra.mxu0 %v661
          %v663 = vand.u32 %v415, 4294901760
          %664 = vmatpush.msra.mxu0 %v663
          %v665 = vand.u32 %v414, 4294901760
          %666 = vmatpush.msra.mxu0 %v665
          %v667 = vand.u32 %v413, 4294901760
          %668 = vmatpush.msra.mxu0 %v667
          %v669 = vand.u32 %v412, 4294901760
          %670 = vmatpush.msra.mxu0 %v669
          %v671 = vand.u32 %v411, 4294901760
          %672 = vmatpush.msra.mxu0 %v671
          %v673 = vand.u32 %v410, 4294901760
          %674 = vmatpush.msra.mxu0 %v673
          %v675 = vand.u32 %v409, 4294901760
          %676 = vmatpush.msra.mxu0 %v675
          %v677 = vand.u32 %v408, 4294901760
          %678 = vmatpush.msra.mxu0 %v677
          %v679 = vand.u32 %v407, 4294901760
          %680 = vmatpush.msra.mxu0 %v679
          %v681 = vand.u32 %v406, 4294901760
          %682 = vmatpush.msra.mxu0 %v681
          %v683 = vand.u32 %v405, 4294901760
          %684 = vmatpush.msra.mxu0 %v683
          %v685 = vsub.f32 %v457, %v457
          %v686 = vand.u32 %v685, 4294901760
          %687 = vmatmul.f32.gmra.mxu0 %v686
          %v688 = vpop.f32.mrf.mxu0
          %v689 = vadd.f32 %v651, %v688
          %690 = vdwg.mxu0
          %v691 = vand.u32 %v420, 4294901760
          %v692 = vsub.f32 %v420, %v691
          %v693 = vand.u32 %v692, 4294901760
          %694 = vmatpush.msra.mxu0 %v693
          %v695 = vand.u32 %v419, 4294901760
          %v696 = vsub.f32 %v419, %v695
          %v697 = vand.u32 %v696, 4294901760
          %698 = vmatpush.msra.mxu0 %v697
          %v699 = vand.u32 %v418, 4294901760
          %v700 = vsub.f32 %v418, %v699
          %v701 = vand.u32 %v700, 4294901760
          %702 = vmatpush.msra.mxu0 %v701
          %v703 = vand.u32 %v417, 4294901760
          %v704 = vsub.f32 %v417, %v703
          %v705 = vand.u32 %v704, 4294901760
          %706 = vmatpush.msra.mxu0 %v705
          %v707 = vand.u32 %v416, 4294901760
          %v708 = vsub.f32 %v416, %v707
          %v709 = vand.u32 %v708, 4294901760
          %710 = vmatpush.msra.mxu0 %v709
          %v711 = vand.u32 %v415, 4294901760
          %v712 = vsub.f32 %v415, %v711
          %v713 = vand.u32 %v712, 4294901760
          %714 = vmatpush.msra.mxu0 %v713
          %v715 = vand.u32 %v414, 4294901760
          %v716 = vsub.f32 %v414, %v715
          %v717 = vand.u32 %v716, 4294901760
          %718 = vmatpush.msra.mxu0 %v717
          %v719 = vand.u32 %v413, 4294901760
          %v720 = vsub.f32 %v413, %v719
          %v721 = vand.u32 %v720, 4294901760
          %722 = vmatpush.msra.mxu0 %v721
          %v723 = vand.u32 %v412, 4294901760
          %v724 = vsub.f32 %v412, %v723
          %v725 = vand.u32 %v724, 4294901760
          %726 = vmatpush.msra.mxu0 %v725
          %v727 = vand.u32 %v411, 4294901760
          %v728 = vsub.f32 %v411, %v727
          %v729 = vand.u32 %v728, 4294901760
          %730 = vmatpush.msra.mxu0 %v729
          %v731 = vand.u32 %v410, 4294901760
          %v732 = vsub.f32 %v410, %v731
          %v733 = vand.u32 %v732, 4294901760
          %734 = vmatpush.msra.mxu0 %v733
          %v735 = vand.u32 %v409, 4294901760
          %v736 = vsub.f32 %v409, %v735
          %v737 = vand.u32 %v736, 4294901760
          %738 = vmatpush.msra.mxu0 %v737
          %v739 = vand.u32 %v408, 4294901760
          %v740 = vsub.f32 %v408, %v739
          %v741 = vand.u32 %v740, 4294901760
          %742 = vmatpush.msra.mxu0 %v741
          %v743 = vand.u32 %v407, 4294901760
          %v744 = vsub.f32 %v407, %v743
          %v745 = vand.u32 %v744, 4294901760
          %746 = vmatpush.msra.mxu0 %v745
          %v747 = vand.u32 %v406, 4294901760
          %v748 = vsub.f32 %v406, %v747
          %v749 = vand.u32 %v748, 4294901760
          %750 = vmatpush.msra.mxu0 %v749
          %v751 = vand.u32 %v405, 4294901760
          %v752 = vsub.f32 %v405, %v751
          %v753 = vand.u32 %v752, 4294901760
          %754 = vmatpush.msra.mxu0 %v753
          %755 = vmatmul.f32.gmra.mxu0 %v457
          %v756 = vpop.f32.mrf.mxu0
          %v757 = vadd.f32 %v689, %v756
          %758 = vdwg.mxu0
          %v759 = vand.u32 %v420, 4294901760
          %760 = vmatpush.msra.mxu0 %v759
          %v761 = vand.u32 %v419, 4294901760
          %762 = vmatpush.msra.mxu0 %v761
          %v763 = vand.u32 %v418, 4294901760
          %764 = vmatpush.msra.mxu0 %v763
          %v765 = vand.u32 %v417, 4294901760
          %766 = vmatpush.msra.mxu0 %v765
          %v767 = vand.u32 %v416, 4294901760
          %768 = vmatpush.msra.mxu0 %v767
          %v769 = vand.u32 %v415, 4294901760
          %770 = vmatpush.msra.mxu0 %v769
          %v771 = vand.u32 %v414, 4294901760
          %772 = vmatpush.msra.mxu0 %v771
          %v773 = vand.u32 %v413, 4294901760
          %774 = vmatpush.msra.mxu0 %v773
          %v775 = vand.u32 %v412, 4294901760
          %776 = vmatpush.msra.mxu0 %v775
          %v777 = vand.u32 %v411, 4294901760
          %778 = vmatpush.msra.mxu0 %v777
          %v779 = vand.u32 %v410, 4294901760
          %780 = vmatpush.msra.mxu0 %v779
          %v781 = vand.u32 %v409, 4294901760
          %782 = vmatpush.msra.mxu0 %v781
          %v783 = vand.u32 %v408, 4294901760
          %784 = vmatpush.msra.mxu0 %v783
          %v785 = vand.u32 %v407, 4294901760
          %786 = vmatpush.msra.mxu0 %v785
          %v787 = vand.u32 %v406, 4294901760
          %788 = vmatpush.msra.mxu0 %v787
          %v789 = vand.u32 %v405, 4294901760
          %790 = vmatpush.msra.mxu0 %v789
          %791 = vmatmul.f32.gmra.mxu0 %v457
          %v792 = vpop.f32.mrf.mxu0
          %v793 = vadd.f32 %v757, %v792
          %794 = vdwg.mxu0
          %v795 = vand.u32 %v436, 4294901760
          %796 = vmatpush.msra.mxu0 %v795
          %v797 = vand.u32 %v435, 4294901760
          %798 = vmatpush.msra.mxu0 %v797
          %v799 = vand.u32 %v434, 4294901760
          %800 = vmatpush.msra.mxu0 %v799
          %v801 = vand.u32 %v433, 4294901760
          %802 = vmatpush.msra.mxu0 %v801
          %v803 = vand.u32 %v432, 4294901760
          %804 = vmatpush.msra.mxu0 %v803
          %v805 = vand.u32 %v431, 4294901760
          %806 = vmatpush.msra.mxu0 %v805
          %v807 = vand.u32 %v430, 4294901760
          %808 = vmatpush.msra.mxu0 %v807
          %v809 = vand.u32 %v429, 4294901760
          %810 = vmatpush.msra.mxu0 %v809
          %v811 = vand.u32 %v428, 4294901760
          %812 = vmatpush.msra.mxu0 %v811
          %v813 = vand.u32 %v427, 4294901760
          %814 = vmatpush.msra.mxu0 %v813
          %v815 = vand.u32 %v426, 4294901760
          %816 = vmatpush.msra.mxu0 %v815
          %v817 = vand.u32 %v425, 4294901760
          %818 = vmatpush.msra.mxu0 %v817
          %v819 = vand.u32 %v424, 4294901760
          %820 = vmatpush.msra.mxu0 %v819
          %v821 = vand.u32 %v423, 4294901760
          %822 = vmatpush.msra.mxu0 %v821
          %v823 = vand.u32 %v422, 4294901760
          %824 = vmatpush.msra.mxu0 %v823
          %v825 = vand.u32 %v421, 4294901760
          %826 = vmatpush.msra.mxu0 %v825
          %v827 = vsub.f32 %v458, %v458
          %v828 = vand.u32 %v827, 4294901760
          %v829 = vsub.f32 %v827, %v828
          %v830 = vand.u32 %v829, 4294901760
          %831 = vmatmul.f32.gmra.mxu0 %v830
          %v832 = vpop.f32.mrf.mxu0
          %v833 = vadd.f32 %v793, %v832
          %834 = vdwg.mxu0
          %v835 = vand.u32 %v436, 4294901760
          %v836 = vsub.f32 %v436, %v835
          %v837 = vand.u32 %v836, 4294901760
          %v838 = vsub.f32 %v836, %v837
          %v839 = vand.u32 %v838, 4294901760
          %840 = vmatpush.msra.mxu0 %v839
          %v841 = vand.u32 %v435, 4294901760
          %v842 = vsub.f32 %v435, %v841
          %v843 = vand.u32 %v842, 4294901760
          %v844 = vsub.f32 %v842, %v843
          %v845 = vand.u32 %v844, 4294901760
          %846 = vmatpush.msra.mxu0 %v845
          %v847 = vand.u32 %v434, 4294901760
          %v848 = vsub.f32 %v434, %v847
          %v849 = vand.u32 %v848, 4294901760
          %v850 = vsub.f32 %v848, %v849
          %v851 = vand.u32 %v850, 4294901760
          %852 = vmatpush.msra.mxu0 %v851
          %v853 = vand.u32 %v433, 4294901760
          %v854 = vsub.f32 %v433, %v853
          %v855 = vand.u32 %v854, 4294901760
          %v856 = vsub.f32 %v854, %v855
          %v857 = vand.u32 %v856, 4294901760
          %858 = vmatpush.msra.mxu0 %v857
          %v859 = vand.u32 %v432, 4294901760
          %v860 = vsub.f32 %v432, %v859
          %v861 = vand.u32 %v860, 4294901760
          %v862 = vsub.f32 %v860, %v861
          %v863 = vand.u32 %v862, 4294901760
          %864 = vmatpush.msra.mxu0 %v863
          %v865 = vand.u32 %v431, 4294901760
          %v866 = vsub.f32 %v431, %v865
          %v867 = vand.u32 %v866, 4294901760
          %v868 = vsub.f32 %v866, %v867
          %v869 = vand.u32 %v868, 4294901760
          %870 = vmatpush.msra.mxu0 %v869
          %v871 = vand.u32 %v430, 4294901760
          %v872 = vsub.f32 %v430, %v871
          %v873 = vand.u32 %v872, 4294901760
          %v874 = vsub.f32 %v872, %v873
          %v875 = vand.u32 %v874, 4294901760
          %876 = vmatpush.msra.mxu0 %v875
          %v877 = vand.u32 %v429, 4294901760
          %v878 = vsub.f32 %v429, %v877
          %v879 = vand.u32 %v878, 4294901760
          %v880 = vsub.f32 %v878, %v879
          %v881 = vand.u32 %v880, 4294901760
          %882 = vmatpush.msra.mxu0 %v881
          %v883 = vand.u32 %v428, 4294901760
          %v884 = vsub.f32 %v428, %v883
          %v885 = vand.u32 %v884, 4294901760
          %v886 = vsub.f32 %v884, %v885
          %v887 = vand.u32 %v886, 4294901760
          %888 = vmatpush.msra.mxu0 %v887
          %v889 = vand.u32 %v427, 4294901760
          %v890 = vsub.f32 %v427, %v889
          %v891 = vand.u32 %v890, 4294901760
          %v892 = vsub.f32 %v890, %v891
          %v893 = vand.u32 %v892, 4294901760
          %894 = vmatpush.msra.mxu0 %v893
          %v895 = vand.u32 %v426, 4294901760
          %v896 = vsub.f32 %v426, %v895
          %v897 = vand.u32 %v896, 4294901760
          %v898 = vsub.f32 %v896, %v897
          %v899 = vand.u32 %v898, 4294901760
          %900 = vmatpush.msra.mxu0 %v899
          %v901 = vand.u32 %v425, 4294901760
          %v902 = vsub.f32 %v425, %v901
          %v903 = vand.u32 %v902, 4294901760
          %v904 = vsub.f32 %v902, %v903
          %v905 = vand.u32 %v904, 4294901760
          %906 = vmatpush.msra.mxu0 %v905
          %v907 = vand.u32 %v424, 4294901760
          %v908 = vsub.f32 %v424, %v907
          %v909 = vand.u32 %v908, 4294901760
          %v910 = vsub.f32 %v908, %v909
          %v911 = vand.u32 %v910, 4294901760
          %912 = vmatpush.msra.mxu0 %v911
          %v913 = vand.u32 %v423, 4294901760
          %v914 = vsub.f32 %v423, %v913
          %v915 = vand.u32 %v914, 4294901760
          %v916 = vsub.f32 %v914, %v915
          %v917 = vand.u32 %v916, 4294901760
          %918 = vmatpush.msra.mxu0 %v917
          %v919 = vand.u32 %v422, 4294901760
          %v920 = vsub.f32 %v422, %v919
          %v921 = vand.u32 %v920, 4294901760
          %v922 = vsub.f32 %v920, %v921
          %v923 = vand.u32 %v922, 4294901760
          %924 = vmatpush.msra.mxu0 %v923
          %v925 = vand.u32 %v421, 4294901760
          %v926 = vsub.f32 %v421, %v925
          %v927 = vand.u32 %v926, 4294901760
          %v928 = vsub.f32 %v926, %v927
          %v929 = vand.u32 %v928, 4294901760
          %930 = vmatpush.msra.mxu0 %v929
          %931 = vmatmul.f32.gmra.mxu0 %v458
          %v932 = vpop.f32.mrf.mxu0
          %v933 = vadd.f32 %v833, %v932
          %934 = vdwg.mxu0
          %v935 = vand.u32 %v436, 4294901760
          %v936 = vsub.f32 %v436, %v935
          %937 = vmatpush.msra.mxu0 %v936
          %v938 = vand.u32 %v435, 4294901760
          %v939 = vsub.f32 %v435, %v938
          %940 = vmatpush.msra.mxu0 %v939
          %v941 = vand.u32 %v434, 4294901760
          %v942 = vsub.f32 %v434, %v941
          %943 = vmatpush.msra.mxu0 %v942
          %v944 = vand.u32 %v433, 4294901760
          %v945 = vsub.f32 %v433, %v944
          %946 = vmatpush.msra.mxu0 %v945
          %v947 = vand.u32 %v432, 4294901760
          %v948 = vsub.f32 %v432, %v947
          %949 = vmatpush.msra.mxu0 %v948
          %v950 = vand.u32 %v431, 4294901760
          %v951 = vsub.f32 %v431, %v950
          %952 = vmatpush.msra.mxu0 %v951
          %v953 = vand.u32 %v430, 4294901760
          %v954 = vsub.f32 %v430, %v953
          %955 = vmatpush.msra.mxu0 %v954
          %v956 = vand.u32 %v429, 4294901760
          %v957 = vsub.f32 %v429, %v956
          %958 = vmatpush.msra.mxu0 %v957
          %v959 = vand.u32 %v428, 4294901760
          %v960 = vsub.f32 %v428, %v959
          %961 = vmatpush.msra.mxu0 %v960
          %v962 = vand.u32 %v427, 4294901760
          %v963 = vsub.f32 %v427, %v962
          %964 = vmatpush.msra.mxu0 %v963
          %v965 = vand.u32 %v426, 4294901760
          %v966 = vsub.f32 %v426, %v965
          %967 = vmatpush.msra.mxu0 %v966
          %v968 = vand.u32 %v425, 4294901760
          %v969 = vsub.f32 %v425, %v968
          %970 = vmatpush.msra.mxu0 %v969
          %v971 = vand.u32 %v424, 4294901760
          %v972 = vsub.f32 %v424, %v971
          %973 = vmatpush.msra.mxu0 %v972
          %v974 = vand.u32 %v423, 4294901760
          %v975 = vsub.f32 %v423, %v974
          %976 = vmatpush.msra.mxu0 %v975
          %v977 = vand.u32 %v422, 4294901760
          %v978 = vsub.f32 %v422, %v977
          %979 = vmatpush.msra.mxu0 %v978
          %v980 = vand.u32 %v421, 4294901760
          %v981 = vsub.f32 %v421, %v980
          %982 = vmatpush.msra.mxu0 %v981
          %v983 = vsub.f32 %v458, %v458
          %984 = vmatmul.f32.gmra.mxu0 %v983
          %v985 = vpop.f32.mrf.mxu0
          %v986 = vadd.f32 %v933, %v985
          %987 = vdwg.mxu0
          %v988 = vand.u32 %v436, 4294901760
          %989 = vmatpush.msra.mxu0 %v988
          %v990 = vand.u32 %v435, 4294901760
          %991 = vmatpush.msra.mxu0 %v990
          %v992 = vand.u32 %v434, 4294901760
          %993 = vmatpush.msra.mxu0 %v992
          %v994 = vand.u32 %v433, 4294901760
          %995 = vmatpush.msra.mxu0 %v994
          %v996 = vand.u32 %v432, 4294901760
          %997 = vmatpush.msra.mxu0 %v996
          %v998 = vand.u32 %v431, 4294901760
          %999 = vmatpush.msra.mxu0 %v998
          %v1000 = vand.u32 %v430, 4294901760
          %1001 = vmatpush.msra.mxu0 %v1000
          %v1002 = vand.u32 %v429, 4294901760
          %1003 = vmatpush.msra.mxu0 %v1002
          %v1004 = vand.u32 %v428, 4294901760
          %1005 = vmatpush.msra.mxu0 %v1004
          %v1006 = vand.u32 %v427, 4294901760
          %1007 = vmatpush.msra.mxu0 %v1006
          %v1008 = vand.u32 %v426, 4294901760
          %1009 = vmatpush.msra.mxu0 %v1008
          %v1010 = vand.u32 %v425, 4294901760
          %1011 = vmatpush.msra.mxu0 %v1010
          %v1012 = vand.u32 %v424, 4294901760
          %1013 = vmatpush.msra.mxu0 %v1012
          %v1014 = vand.u32 %v423, 4294901760
          %1015 = vmatpush.msra.mxu0 %v1014
          %v1016 = vand.u32 %v422, 4294901760
          %1017 = vmatpush.msra.mxu0 %v1016
          %v1018 = vand.u32 %v421, 4294901760
          %1019 = vmatpush.msra.mxu0 %v1018
          %v1020 = vsub.f32 %v458, %v458
          %v1021 = vand.u32 %v1020, 4294901760
          %1022 = vmatmul.f32.gmra.mxu0 %v1021
          %v1023 = vpop.f32.mrf.mxu0
          %v1024 = vadd.f32 %v986, %v1023
          %1025 = vdwg.mxu0
          %v1026 = vand.u32 %v436, 4294901760
          %v1027 = vsub.f32 %v436, %v1026
          %v1028 = vand.u32 %v1027, 4294901760
          %1029 = vmatpush.msra.mxu0 %v1028
          %v1030 = vand.u32 %v435, 4294901760
          %v1031 = vsub.f32 %v435, %v1030
          %v1032 = vand.u32 %v1031, 4294901760
          %1033 = vmatpush.msra.mxu0 %v1032
          %v1034 = vand.u32 %v434, 4294901760
          %v1035 = vsub.f32 %v434, %v1034
          %v1036 = vand.u32 %v1035, 4294901760
          %1037 = vmatpush.msra.mxu0 %v1036
          %v1038 = vand.u32 %v433, 4294901760
          %v1039 = vsub.f32 %v433, %v1038
          %v1040 = vand.u32 %v1039, 4294901760
          %1041 = vmatpush.msra.mxu0 %v1040
          %v1042 = vand.u32 %v432, 4294901760
          %v1043 = vsub.f32 %v432, %v1042
          %v1044 = vand.u32 %v1043, 4294901760
          %1045 = vmatpush.msra.mxu0 %v1044
          %v1046 = vand.u32 %v431, 4294901760
          %v1047 = vsub.f32 %v431, %v1046
          %v1048 = vand.u32 %v1047, 4294901760
          %1049 = vmatpush.msra.mxu0 %v1048
          %v1050 = vand.u32 %v430, 4294901760
          %v1051 = vsub.f32 %v430, %v1050
          %v1052 = vand.u32 %v1051, 4294901760
          %1053 = vmatpush.msra.mxu0 %v1052
          %v1054 = vand.u32 %v429, 4294901760
          %v1055 = vsub.f32 %v429, %v1054
          %v1056 = vand.u32 %v1055, 4294901760
          %1057 = vmatpush.msra.mxu0 %v1056
          %v1058 = vand.u32 %v428, 4294901760
          %v1059 = vsub.f32 %v428, %v1058
          %v1060 = vand.u32 %v1059, 4294901760
          %1061 = vmatpush.msra.mxu0 %v1060
          %v1062 = vand.u32 %v427, 4294901760
          %v1063 = vsub.f32 %v427, %v1062
          %v1064 = vand.u32 %v1063, 4294901760
          %1065 = vmatpush.msra.mxu0 %v1064
          %v1066 = vand.u32 %v426, 4294901760
          %v1067 = vsub.f32 %v426, %v1066
          %v1068 = vand.u32 %v1067, 4294901760
          %1069 = vmatpush.msra.mxu0 %v1068
          %v1070 = vand.u32 %v425, 4294901760
          %v1071 = vsub.f32 %v425, %v1070
          %v1072 = vand.u32 %v1071, 4294901760
          %1073 = vmatpush.msra.mxu0 %v1072
          %v1074 = vand.u32 %v424, 4294901760
          %v1075 = vsub.f32 %v424, %v1074
          %v1076 = vand.u32 %v1075, 4294901760
          %1077 = vmatpush.msra.mxu0 %v1076
          %v1078 = vand.u32 %v423, 4294901760
          %v1079 = vsub.f32 %v423, %v1078
          %v1080 = vand.u32 %v1079, 4294901760
          %1081 = vmatpush.msra.mxu0 %v1080
          %v1082 = vand.u32 %v422, 4294901760
          %v1083 = vsub.f32 %v422, %v1082
          %v1084 = vand.u32 %v1083, 4294901760
          %1085 = vmatpush.msra.mxu0 %v1084
          %v1086 = vand.u32 %v421, 4294901760
          %v1087 = vsub.f32 %v421, %v1086
          %v1088 = vand.u32 %v1087, 4294901760
          %1089 = vmatpush.msra.mxu0 %v1088
          %1090 = vmatmul.f32.gmra.mxu0 %v458
          %v1091 = vpop.f32.mrf.mxu0
          %v1092 = vadd.f32 %v1024, %v1091
          %1093 = vdwg.mxu0
          %v1094 = vand.u32 %v436, 4294901760
          %1095 = vmatpush.msra.mxu0 %v1094
          %v1096 = vand.u32 %v435, 4294901760
          %1097 = vmatpush.msra.mxu0 %v1096
          %v1098 = vand.u32 %v434, 4294901760
          %1099 = vmatpush.msra.mxu0 %v1098
          %v1100 = vand.u32 %v433, 4294901760
          %1101 = vmatpush.msra.mxu0 %v1100
          %v1102 = vand.u32 %v432, 4294901760
          %1103 = vmatpush.msra.mxu0 %v1102
          %v1104 = vand.u32 %v431, 4294901760
          %1105 = vmatpush.msra.mxu0 %v1104
          %v1106 = vand.u32 %v430, 4294901760
          %1107 = vmatpush.msra.mxu0 %v1106
          %v1108 = vand.u32 %v429, 4294901760
          %1109 = vmatpush.msra.mxu0 %v1108
          %v1110 = vand.u32 %v428, 4294901760
          %1111 = vmatpush.msra.mxu0 %v1110
          %v1112 = vand.u32 %v427, 4294901760
          %1113 = vmatpush.msra.mxu0 %v1112
          %v1114 = vand.u32 %v426, 4294901760
          %1115 = vmatpush.msra.mxu0 %v1114
          %v1116 = vand.u32 %v425, 4294901760
          %1117 = vmatpush.msra.mxu0 %v1116
          %v1118 = vand.u32 %v424, 4294901760
          %1119 = vmatpush.msra.mxu0 %v1118
          %v1120 = vand.u32 %v423, 4294901760
          %1121 = vmatpush.msra.mxu0 %v1120
          %v1122 = vand.u32 %v422, 4294901760
          %1123 = vmatpush.msra.mxu0 %v1122
          %v1124 = vand.u32 %v421, 4294901760
          %1125 = vmatpush.msra.mxu0 %v1124
          %1126 = vmatmul.f32.gmra.mxu0 %v458
          %v1127 = vpop.f32.mrf.mxu0
          %v1128 = vadd.f32 %v1092, %v1127
          %1129 = vdwg.mxu0
          %v1130 = vadd.f32 %v459, %v1128
          %1131 = vst [vmem:[#allocation2] sm:$0xff] %v1130
          %v1132 = vld [vmem:[#allocation3] sm:$0xff]
          %v1133 = vmul.f32 %v405, %v405
          %v1134 = vmul.f32 %v406, %v406
          %v1135 = vmul.f32 %v407, %v407
          %v1136 = vmul.f32 %v408, %v408
          %v1137 = vmul.f32 %v409, %v409
          %v1138 = vmul.f32 %v410, %v410
          %v1139 = vmul.f32 %v411, %v411
          %v1140 = vmul.f32 %v412, %v412
          %v1141 = vmul.f32 %v413, %v413
          %v1142 = vmul.f32 %v414, %v414
          %v1143 = vmul.f32 %v415, %v415
          %v1144 = vmul.f32 %v416, %v416
          %v1145 = vmul.f32 %v417, %v417
          %v1146 = vmul.f32 %v418, %v418
          %v1147 = vmul.f32 %v419, %v419
          %v1148 = vmul.f32 %v420, %v420
          %v1149 = vmul.f32 %v421, %v421
          %v1150 = vmul.f32 %v422, %v422
          %v1151 = vmul.f32 %v423, %v423
          %v1152 = vmul.f32 %v424, %v424
          %v1153 = vmul.f32 %v425, %v425
          %v1154 = vmul.f32 %v426, %v426
          %v1155 = vmul.f32 %v427, %v427
          %v1156 = vmul.f32 %v428, %v428
          %v1157 = vmul.f32 %v429, %v429
          %v1158 = vmul.f32 %v430, %v430
          %v1159 = vmul.f32 %v431, %v431
          %v1160 = vmul.f32 %v432, %v432
          %v1161 = vmul.f32 %v433, %v433
          %v1162 = vmul.f32 %v434, %v434
          %v1163 = vmul.f32 %v435, %v435
          %v1164 = vmul.f32 %v436, %v436
          %v1165 = vand.u32 %v1148, 4294901760
          %1166 = vmatpush.msra.mxu0 %v1165
          %v1167 = vand.u32 %v1147, 4294901760
          %1168 = vmatpush.msra.mxu0 %v1167
          %v1169 = vand.u32 %v1146, 4294901760
          %1170 = vmatpush.msra.mxu0 %v1169
          %v1171 = vand.u32 %v1145, 4294901760
          %1172 = vmatpush.msra.mxu0 %v1171
          %v1173 = vand.u32 %v1144, 4294901760
          %1174 = vmatpush.msra.mxu0 %v1173
          %v1175 = vand.u32 %v1143, 4294901760
          %1176 = vmatpush.msra.mxu0 %v1175
          %v1177 = vand.u32 %v1142, 4294901760
          %1178 = vmatpush.msra.mxu0 %v1177
          %v1179 = vand.u32 %v1141, 4294901760
          %1180 = vmatpush.msra.mxu0 %v1179
          %v1181 = vand.u32 %v1140, 4294901760
          %1182 = vmatpush.msra.mxu0 %v1181
          %v1183 = vand.u32 %v1139, 4294901760
          %1184 = vmatpush.msra.mxu0 %v1183
          %v1185 = vand.u32 %v1138, 4294901760
          %1186 = vmatpush.msra.mxu0 %v1185
          %v1187 = vand.u32 %v1137, 4294901760
          %1188 = vmatpush.msra.mxu0 %v1187
          %v1189 = vand.u32 %v1136, 4294901760
          %1190 = vmatpush.msra.mxu0 %v1189
          %v1191 = vand.u32 %v1135, 4294901760
          %1192 = vmatpush.msra.mxu0 %v1191
          %v1193 = vand.u32 %v1134, 4294901760
          %1194 = vmatpush.msra.mxu0 %v1193
          %v1195 = vand.u32 %v1133, 4294901760
          %1196 = vmatpush.msra.mxu0 %v1195
          %v1197 = vsub.f32 %v457, %v457
          %v1198 = vand.u32 %v1197, 4294901760
          %v1199 = vsub.f32 %v1197, %v1198
          %v1200 = vand.u32 %v1199, 4294901760
          %1201 = vmatmul.f32.gmra.mxu0 %v1200
          %v1202 = vpop.f32.mrf.mxu0
          %v1203 = vadd.f32 0.0, %v1202
          %1204 = vdwg.mxu0
          %v1205 = vand.u32 %v1148, 4294901760
          %v1206 = vsub.f32 %v1148, %v1205
          %v1207 = vand.u32 %v1206, 4294901760
          %v1208 = vsub.f32 %v1206, %v1207
          %v1209 = vand.u32 %v1208, 4294901760
          %1210 = vmatpush.msra.mxu0 %v1209
          %v1211 = vand.u32 %v1147, 4294901760
          %v1212 = vsub.f32 %v1147, %v1211
          %v1213 = vand.u32 %v1212, 4294901760
          %v1214 = vsub.f32 %v1212, %v1213
          %v1215 = vand.u32 %v1214, 4294901760
          %1216 = vmatpush.msra.mxu0 %v1215
          %v1217 = vand.u32 %v1146, 4294901760
          %v1218 = vsub.f32 %v1146, %v1217
          %v1219 = vand.u32 %v1218, 4294901760
          %v1220 = vsub.f32 %v1218, %v1219
          %v1221 = vand.u32 %v1220, 4294901760
          %1222 = vmatpush.msra.mxu0 %v1221
          %v1223 = vand.u32 %v1145, 4294901760
          %v1224 = vsub.f32 %v1145, %v1223
          %v1225 = vand.u32 %v1224, 4294901760
          %v1226 = vsub.f32 %v1224, %v1225
          %v1227 = vand.u32 %v1226, 4294901760
          %1228 = vmatpush.msra.mxu0 %v1227
          %v1229 = vand.u32 %v1144, 4294901760
          %v1230 = vsub.f32 %v1144, %v1229
          %v1231 = vand.u32 %v1230, 4294901760
          %v1232 = vsub.f32 %v1230, %v1231
          %v1233 = vand.u32 %v1232, 4294901760
          %1234 = vmatpush.msra.mxu0 %v1233
          %v1235 = vand.u32 %v1143, 4294901760
          %v1236 = vsub.f32 %v1143, %v1235
          %v1237 = vand.u32 %v1236, 4294901760
          %v1238 = vsub.f32 %v1236, %v1237
          %v1239 = vand.u32 %v1238, 4294901760
          %1240 = vmatpush.msra.mxu0 %v1239
          %v1241 = vand.u32 %v1142, 4294901760
          %v1242 = vsub.f32 %v1142, %v1241
          %v1243 = vand.u32 %v1242, 4294901760
          %v1244 = vsub.f32 %v1242, %v1243
          %v1245 = vand.u32 %v1244, 4294901760
          %1246 = vmatpush.msra.mxu0 %v1245
          %v1247 = vand.u32 %v1141, 4294901760
          %v1248 = vsub.f32 %v1141, %v1247
          %v1249 = vand.u32 %v1248, 4294901760
          %v1250 = vsub.f32 %v1248, %v1249
          %v1251 = vand.u32 %v1250, 4294901760
          %1252 = vmatpush.msra.mxu0 %v1251
          %v1253 = vand.u32 %v1140, 4294901760
          %v1254 = vsub.f32 %v1140, %v1253
          %v1255 = vand.u32 %v1254, 4294901760
          %v1256 = vsub.f32 %v1254, %v1255
          %v1257 = vand.u32 %v1256, 4294901760
          %1258 = vmatpush.msra.mxu0 %v1257
          %v1259 = vand.u32 %v1139, 4294901760
          %v1260 = vsub.f32 %v1139, %v1259
          %v1261 = vand.u32 %v1260, 4294901760
          %v1262 = vsub.f32 %v1260, %v1261
          %v1263 = vand.u32 %v1262, 4294901760
          %1264 = vmatpush.msra.mxu0 %v1263
          %v1265 = vand.u32 %v1138, 4294901760
          %v1266 = vsub.f32 %v1138, %v1265
          %v1267 = vand.u32 %v1266, 4294901760
          %v1268 = vsub.f32 %v1266, %v1267
          %v1269 = vand.u32 %v1268, 4294901760
          %1270 = vmatpush.msra.mxu0 %v1269
          %v1271 = vand.u32 %v1137, 4294901760
          %v1272 = vsub.f32 %v1137, %v1271
          %v1273 = vand.u32 %v1272, 4294901760
          %v1274 = vsub.f32 %v1272, %v1273
          %v1275 = vand.u32 %v1274, 4294901760
          %1276 = vmatpush.msra.mxu0 %v1275
          %v1277 = vand.u32 %v1136, 4294901760
          %v1278 = vsub.f32 %v1136, %v1277
          %v1279 = vand.u32 %v1278, 4294901760
          %v1280 = vsub.f32 %v1278, %v1279
          %v1281 = vand.u32 %v1280, 4294901760
          %1282 = vmatpush.msra.mxu0 %v1281
          %v1283 = vand.u32 %v1135, 4294901760
          %v1284 = vsub.f32 %v1135, %v1283
          %v1285 = vand.u32 %v1284, 4294901760
          %v1286 = vsub.f32 %v1284, %v1285
          %v1287 = vand.u32 %v1286, 4294901760
          %1288 = vmatpush.msra.mxu0 %v1287
          %v1289 = vand.u32 %v1134, 4294901760
          %v1290 = vsub.f32 %v1134, %v1289
          %v1291 = vand.u32 %v1290, 4294901760
          %v1292 = vsub.f32 %v1290, %v1291
          %v1293 = vand.u32 %v1292, 4294901760
          %1294 = vmatpush.msra.mxu0 %v1293
          %v1295 = vand.u32 %v1133, 4294901760
          %v1296 = vsub.f32 %v1133, %v1295
          %v1297 = vand.u32 %v1296, 4294901760
          %v1298 = vsub.f32 %v1296, %v1297
          %v1299 = vand.u32 %v1298, 4294901760
          %1300 = vmatpush.msra.mxu0 %v1299
          %1301 = vmatmul.f32.gmra.mxu0 %v457
          %v1302 = vpop.f32.mrf.mxu0
          %v1303 = vadd.f32 %v1203, %v1302
          %1304 = vdwg.mxu0
          %v1305 = vand.u32 %v1148, 4294901760
          %v1306 = vsub.f32 %v1148, %v1305
          %1307 = vmatpush.msra.mxu0 %v1306
          %v1308 = vand.u32 %v1147, 4294901760
          %v1309 = vsub.f32 %v1147, %v1308
          %1310 = vmatpush.msra.mxu0 %v1309
          %v1311 = vand.u32 %v1146, 4294901760
          %v1312 = vsub.f32 %v1146, %v1311
          %1313 = vmatpush.msra.mxu0 %v1312
          %v1314 = vand.u32 %v1145, 4294901760
          %v1315 = vsub.f32 %v1145, %v1314
          %1316 = vmatpush.msra.mxu0 %v1315
          %v1317 = vand.u32 %v1144, 4294901760
          %v1318 = vsub.f32 %v1144, %v1317
          %1319 = vmatpush.msra.mxu0 %v1318
          %v1320 = vand.u32 %v1143, 4294901760
          %v1321 = vsub.f32 %v1143, %v1320
          %1322 = vmatpush.msra.mxu0 %v1321
          %v1323 = vand.u32 %v1142, 4294901760
          %v1324 = vsub.f32 %v1142, %v1323
          %1325 = vmatpush.msra.mxu0 %v1324
          %v1326 = vand.u32 %v1141, 4294901760
          %v1327 = vsub.f32 %v1141, %v1326
          %1328 = vmatpush.msra.mxu0 %v1327
          %v1329 = vand.u32 %v1140, 4294901760
          %v1330 = vsub.f32 %v1140, %v1329
          %1331 = vmatpush.msra.mxu0 %v1330
          %v1332 = vand.u32 %v1139, 4294901760
          %v1333 = vsub.f32 %v1139, %v1332
          %1334 = vmatpush.msra.mxu0 %v1333
          %v1335 = vand.u32 %v1138, 4294901760
          %v1336 = vsub.f32 %v1138, %v1335
          %1337 = vmatpush.msra.mxu0 %v1336
          %v1338 = vand.u32 %v1137, 4294901760
          %v1339 = vsub.f32 %v1137, %v1338
          %1340 = vmatpush.msra.mxu0 %v1339
          %v1341 = vand.u32 %v1136, 4294901760
          %v1342 = vsub.f32 %v1136, %v1341
          %1343 = vmatpush.msra.mxu0 %v1342
          %v1344 = vand.u32 %v1135, 4294901760
          %v1345 = vsub.f32 %v1135, %v1344
          %1346 = vmatpush.msra.mxu0 %v1345
          %v1347 = vand.u32 %v1134, 4294901760
          %v1348 = vsub.f32 %v1134, %v1347
          %1349 = vmatpush.msra.mxu0 %v1348
          %v1350 = vand.u32 %v1133, 4294901760
          %v1351 = vsub.f32 %v1133, %v1350
          %1352 = vmatpush.msra.mxu0 %v1351
          %v1353 = vsub.f32 %v457, %v457
          %1354 = vmatmul.f32.gmra.mxu0 %v1353
          %v1355 = vpop.f32.mrf.mxu0
          %v1356 = vadd.f32 %v1303, %v1355
          %1357 = vdwg.mxu0
          %v1358 = vand.u32 %v1148, 4294901760
          %1359 = vmatpush.msra.mxu0 %v1358
          %v1360 = vand.u32 %v1147, 4294901760
          %1361 = vmatpush.msra.mxu0 %v1360
          %v1362 = vand.u32 %v1146, 4294901760
          %1363 = vmatpush.msra.mxu0 %v1362
          %v1364 = vand.u32 %v1145, 4294901760
          %1365 = vmatpush.msra.mxu0 %v1364
          %v1366 = vand.u32 %v1144, 4294901760
          %1367 = vmatpush.msra.mxu0 %v1366
          %v1368 = vand.u32 %v1143, 4294901760
          %1369 = vmatpush.msra.mxu0 %v1368
          %v1370 = vand.u32 %v1142, 4294901760
          %1371 = vmatpush.msra.mxu0 %v1370
          %v1372 = vand.u32 %v1141, 4294901760
          %1373 = vmatpush.msra.mxu0 %v1372
          %v1374 = vand.u32 %v1140, 4294901760
          %1375 = vmatpush.msra.mxu0 %v1374
          %v1376 = vand.u32 %v1139, 4294901760
          %1377 = vmatpush.msra.mxu0 %v1376
          %v1378 = vand.u32 %v1138, 4294901760
          %1379 = vmatpush.msra.mxu0 %v1378
          %v1380 = vand.u32 %v1137, 4294901760
          %1381 = vmatpush.msra.mxu0 %v1380
          %v1382 = vand.u32 %v1136, 4294901760
          %1383 = vmatpush.msra.mxu0 %v1382
          %v1384 = vand.u32 %v1135, 4294901760
          %1385 = vmatpush.msra.mxu0 %v1384
          %v1386 = vand.u32 %v1134, 4294901760
          %1387 = vmatpush.msra.mxu0 %v1386
          %v1388 = vand.u32 %v1133, 4294901760
          %1389 = vmatpush.msra.mxu0 %v1388
          %v1390 = vsub.f32 %v457, %v457
          %v1391 = vand.u32 %v1390, 4294901760
          %1392 = vmatmul.f32.gmra.mxu0 %v1391
          %v1393 = vpop.f32.mrf.mxu0
          %v1394 = vadd.f32 %v1356, %v1393
          %1395 = vdwg.mxu0
          %v1396 = vand.u32 %v1148, 4294901760
          %v1397 = vsub.f32 %v1148, %v1396
          %v1398 = vand.u32 %v1397, 4294901760
          %1399 = vmatpush.msra.mxu0 %v1398
          %v1400 = vand.u32 %v1147, 4294901760
          %v1401 = vsub.f32 %v1147, %v1400
          %v1402 = vand.u32 %v1401, 4294901760
          %1403 = vmatpush.msra.mxu0 %v1402
          %v1404 = vand.u32 %v1146, 4294901760
          %v1405 = vsub.f32 %v1146, %v1404
          %v1406 = vand.u32 %v1405, 4294901760
          %1407 = vmatpush.msra.mxu0 %v1406
          %v1408 = vand.u32 %v1145, 4294901760
          %v1409 = vsub.f32 %v1145, %v1408
          %v1410 = vand.u32 %v1409, 4294901760
          %1411 = vmatpush.msra.mxu0 %v1410
          %v1412 = vand.u32 %v1144, 4294901760
          %v1413 = vsub.f32 %v1144, %v1412
          %v1414 = vand.u32 %v1413, 4294901760
          %1415 = vmatpush.msra.mxu0 %v1414
          %v1416 = vand.u32 %v1143, 4294901760
          %v1417 = vsub.f32 %v1143, %v1416
          %v1418 = vand.u32 %v1417, 4294901760
          %1419 = vmatpush.msra.mxu0 %v1418
          %v1420 = vand.u32 %v1142, 4294901760
          %v1421 = vsub.f32 %v1142, %v1420
          %v1422 = vand.u32 %v1421, 4294901760
          %1423 = vmatpush.msra.mxu0 %v1422
          %v1424 = vand.u32 %v1141, 4294901760
          %v1425 = vsub.f32 %v1141, %v1424
          %v1426 = vand.u32 %v1425, 4294901760
          %1427 = vmatpush.msra.mxu0 %v1426
          %v1428 = vand.u32 %v1140, 4294901760
          %v1429 = vsub.f32 %v1140, %v1428
          %v1430 = vand.u32 %v1429, 4294901760
          %1431 = vmatpush.msra.mxu0 %v1430
          %v1432 = vand.u32 %v1139, 4294901760
          %v1433 = vsub.f32 %v1139, %v1432
          %v1434 = vand.u32 %v1433, 4294901760
          %1435 = vmatpush.msra.mxu0 %v1434
          %v1436 = vand.u32 %v1138, 4294901760
          %v1437 = vsub.f32 %v1138, %v1436
          %v1438 = vand.u32 %v1437, 4294901760
          %1439 = vmatpush.msra.mxu0 %v1438
          %v1440 = vand.u32 %v1137, 4294901760
          %v1441 = vsub.f32 %v1137, %v1440
          %v1442 = vand.u32 %v1441, 4294901760
          %1443 = vmatpush.msra.mxu0 %v1442
          %v1444 = vand.u32 %v1136, 4294901760
          %v1445 = vsub.f32 %v1136, %v1444
          %v1446 = vand.u32 %v1445, 4294901760
          %1447 = vmatpush.msra.mxu0 %v1446
          %v1448 = vand.u32 %v1135, 4294901760
          %v1449 = vsub.f32 %v1135, %v1448
          %v1450 = vand.u32 %v1449, 4294901760
          %1451 = vmatpush.msra.mxu0 %v1450
          %v1452 = vand.u32 %v1134, 4294901760
          %v1453 = vsub.f32 %v1134, %v1452
          %v1454 = vand.u32 %v1453, 4294901760
          %1455 = vmatpush.msra.mxu0 %v1454
          %v1456 = vand.u32 %v1133, 4294901760
          %v1457 = vsub.f32 %v1133, %v1456
          %v1458 = vand.u32 %v1457, 4294901760
          %1459 = vmatpush.msra.mxu0 %v1458
          %1460 = vmatmul.f32.gmra.mxu0 %v457
          %v1461 = vpop.f32.mrf.mxu0
          %v1462 = vadd.f32 %v1394, %v1461
          %1463 = vdwg.mxu0
          %v1464 = vand.u32 %v1148, 4294901760
          %1465 = vmatpush.msra.mxu0 %v1464
          %v1466 = vand.u32 %v1147, 4294901760
          %1467 = vmatpush.msra.mxu0 %v1466
          %v1468 = vand.u32 %v1146, 4294901760
          %1469 = vmatpush.msra.mxu0 %v1468
          %v1470 = vand.u32 %v1145, 4294901760
          %1471 = vmatpush.msra.mxu0 %v1470
          %v1472 = vand.u32 %v1144, 4294901760
          %1473 = vmatpush.msra.mxu0 %v1472
          %v1474 = vand.u32 %v1143, 4294901760
          %1475 = vmatpush.msra.mxu0 %v1474
          %v1476 = vand.u32 %v1142, 4294901760
          %1477 = vmatpush.msra.mxu0 %v1476
          %v1478 = vand.u32 %v1141, 4294901760
          %1479 = vmatpush.msra.mxu0 %v1478
          %v1480 = vand.u32 %v1140, 4294901760
          %1481 = vmatpush.msra.mxu0 %v1480
          %v1482 = vand.u32 %v1139, 4294901760
          %1483 = vmatpush.msra.mxu0 %v1482
          %v1484 = vand.u32 %v1138, 4294901760
          %1485 = vmatpush.msra.mxu0 %v1484
          %v1486 = vand.u32 %v1137, 4294901760
          %1487 = vmatpush.msra.mxu0 %v1486
          %v1488 = vand.u32 %v1136, 4294901760
          %1489 = vmatpush.msra.mxu0 %v1488
          %v1490 = vand.u32 %v1135, 4294901760
          %1491 = vmatpush.msra.mxu0 %v1490
          %v1492 = vand.u32 %v1134, 4294901760
          %1493 = vmatpush.msra.mxu0 %v1492
          %v1494 = vand.u32 %v1133, 4294901760
          %1495 = vmatpush.msra.mxu0 %v1494
          %1496 = vmatmul.f32.gmra.mxu0 %v457
          %v1497 = vpop.f32.mrf.mxu0
          %v1498 = vadd.f32 %v1462, %v1497
          %1499 = vdwg.mxu0
          %v1500 = vand.u32 %v1164, 4294901760
          %1501 = vmatpush.msra.mxu0 %v1500
          %v1502 = vand.u32 %v1163, 4294901760
          %1503 = vmatpush.msra.mxu0 %v1502
          %v1504 = vand.u32 %v1162, 4294901760
          %1505 = vmatpush.msra.mxu0 %v1504
          %v1506 = vand.u32 %v1161, 4294901760
          %1507 = vmatpush.msra.mxu0 %v1506
          %v1508 = vand.u32 %v1160, 4294901760
          %1509 = vmatpush.msra.mxu0 %v1508
          %v1510 = vand.u32 %v1159, 4294901760
          %1511 = vmatpush.msra.mxu0 %v1510
          %v1512 = vand.u32 %v1158, 4294901760
          %1513 = vmatpush.msra.mxu0 %v1512
          %v1514 = vand.u32 %v1157, 4294901760
          %1515 = vmatpush.msra.mxu0 %v1514
          %v1516 = vand.u32 %v1156, 4294901760
          %1517 = vmatpush.msra.mxu0 %v1516
          %v1518 = vand.u32 %v1155, 4294901760
          %1519 = vmatpush.msra.mxu0 %v1518
          %v1520 = vand.u32 %v1154, 4294901760
          %1521 = vmatpush.msra.mxu0 %v1520
          %v1522 = vand.u32 %v1153, 4294901760
          %1523 = vmatpush.msra.mxu0 %v1522
          %v1524 = vand.u32 %v1152, 4294901760
          %1525 = vmatpush.msra.mxu0 %v1524
          %v1526 = vand.u32 %v1151, 4294901760
          %1527 = vmatpush.msra.mxu0 %v1526
          %v1528 = vand.u32 %v1150, 4294901760
          %1529 = vmatpush.msra.mxu0 %v1528
          %v1530 = vand.u32 %v1149, 4294901760
          %1531 = vmatpush.msra.mxu0 %v1530
          %v1532 = vsub.f32 %v458, %v458
          %v1533 = vand.u32 %v1532, 4294901760
          %v1534 = vsub.f32 %v1532, %v1533
          %v1535 = vand.u32 %v1534, 4294901760
          %1536 = vmatmul.f32.gmra.mxu0 %v1535
          %v1537 = vpop.f32.mrf.mxu0
          %v1538 = vadd.f32 %v1498, %v1537
          %1539 = vdwg.mxu0
          %v1540 = vand.u32 %v1164, 4294901760
          %v1541 = vsub.f32 %v1164, %v1540
          %v1542 = vand.u32 %v1541, 4294901760
          %v1543 = vsub.f32 %v1541, %v1542
          %v1544 = vand.u32 %v1543, 4294901760
          %1545 = vmatpush.msra.mxu0 %v1544
          %v1546 = vand.u32 %v1163, 4294901760
          %v1547 = vsub.f32 %v1163, %v1546
          %v1548 = vand.u32 %v1547, 4294901760
          %v1549 = vsub.f32 %v1547, %v1548
          %v1550 = vand.u32 %v1549, 4294901760
          %1551 = vmatpush.msra.mxu0 %v1550
          %v1552 = vand.u32 %v1162, 4294901760
          %v1553 = vsub.f32 %v1162, %v1552
          %v1554 = vand.u32 %v1553, 4294901760
          %v1555 = vsub.f32 %v1553, %v1554
          %v1556 = vand.u32 %v1555, 4294901760
          %1557 = vmatpush.msra.mxu0 %v1556
          %v1558 = vand.u32 %v1161, 4294901760
          %v1559 = vsub.f32 %v1161, %v1558
          %v1560 = vand.u32 %v1559, 4294901760
          %v1561 = vsub.f32 %v1559, %v1560
          %v1562 = vand.u32 %v1561, 4294901760
          %1563 = vmatpush.msra.mxu0 %v1562
          %v1564 = vand.u32 %v1160, 4294901760
          %v1565 = vsub.f32 %v1160, %v1564
          %v1566 = vand.u32 %v1565, 4294901760
          %v1567 = vsub.f32 %v1565, %v1566
          %v1568 = vand.u32 %v1567, 4294901760
          %1569 = vmatpush.msra.mxu0 %v1568
          %v1570 = vand.u32 %v1159, 4294901760
          %v1571 = vsub.f32 %v1159, %v1570
          %v1572 = vand.u32 %v1571, 4294901760
          %v1573 = vsub.f32 %v1571, %v1572
          %v1574 = vand.u32 %v1573, 4294901760
          %1575 = vmatpush.msra.mxu0 %v1574
          %v1576 = vand.u32 %v1158, 4294901760
          %v1577 = vsub.f32 %v1158, %v1576
          %v1578 = vand.u32 %v1577, 4294901760
          %v1579 = vsub.f32 %v1577, %v1578
          %v1580 = vand.u32 %v1579, 4294901760
          %1581 = vmatpush.msra.mxu0 %v1580
          %v1582 = vand.u32 %v1157, 4294901760
          %v1583 = vsub.f32 %v1157, %v1582
          %v1584 = vand.u32 %v1583, 4294901760
          %v1585 = vsub.f32 %v1583, %v1584
          %v1586 = vand.u32 %v1585, 4294901760
          %1587 = vmatpush.msra.mxu0 %v1586
          %v1588 = vand.u32 %v1156, 4294901760
          %v1589 = vsub.f32 %v1156, %v1588
          %v1590 = vand.u32 %v1589, 4294901760
          %v1591 = vsub.f32 %v1589, %v1590
          %v1592 = vand.u32 %v1591, 4294901760
          %1593 = vmatpush.msra.mxu0 %v1592
          %v1594 = vand.u32 %v1155, 4294901760
          %v1595 = vsub.f32 %v1155, %v1594
          %v1596 = vand.u32 %v1595, 4294901760
          %v1597 = vsub.f32 %v1595, %v1596
          %v1598 = vand.u32 %v1597, 4294901760
          %1599 = vmatpush.msra.mxu0 %v1598
          %v1600 = vand.u32 %v1154, 4294901760
          %v1601 = vsub.f32 %v1154, %v1600
          %v1602 = vand.u32 %v1601, 4294901760
          %v1603 = vsub.f32 %v1601, %v1602
          %v1604 = vand.u32 %v1603, 4294901760
          %1605 = vmatpush.msra.mxu0 %v1604
          %v1606 = vand.u32 %v1153, 4294901760
          %v1607 = vsub.f32 %v1153, %v1606
          %v1608 = vand.u32 %v1607, 4294901760
          %v1609 = vsub.f32 %v1607, %v1608
          %v1610 = vand.u32 %v1609, 4294901760
          %1611 = vmatpush.msra.mxu0 %v1610
          %v1612 = vand.u32 %v1152, 4294901760
          %v1613 = vsub.f32 %v1152, %v1612
          %v1614 = vand.u32 %v1613, 4294901760
          %v1615 = vsub.f32 %v1613, %v1614
          %v1616 = vand.u32 %v1615, 4294901760
          %1617 = vmatpush.msra.mxu0 %v1616
          %v1618 = vand.u32 %v1151, 4294901760
          %v1619 = vsub.f32 %v1151, %v1618
          %v1620 = vand.u32 %v1619, 4294901760
          %v1621 = vsub.f32 %v1619, %v1620
          %v1622 = vand.u32 %v1621, 4294901760
          %1623 = vmatpush.msra.mxu0 %v1622
          %v1624 = vand.u32 %v1150, 4294901760
          %v1625 = vsub.f32 %v1150, %v1624
          %v1626 = vand.u32 %v1625, 4294901760
          %v1627 = vsub.f32 %v1625, %v1626
          %v1628 = vand.u32 %v1627, 4294901760
          %1629 = vmatpush.msra.mxu0 %v1628
          %v1630 = vand.u32 %v1149, 4294901760
          %v1631 = vsub.f32 %v1149, %v1630
          %v1632 = vand.u32 %v1631, 4294901760
          %v1633 = vsub.f32 %v1631, %v1632
          %v1634 = vand.u32 %v1633, 4294901760
          %1635 = vmatpush.msra.mxu0 %v1634
          %1636 = vmatmul.f32.gmra.mxu0 %v458
          %v1637 = vpop.f32.mrf.mxu0
          %v1638 = vadd.f32 %v1538, %v1637
          %1639 = vdwg.mxu0
          %v1640 = vand.u32 %v1164, 4294901760
          %v1641 = vsub.f32 %v1164, %v1640
          %1642 = vmatpush.msra.mxu0 %v1641
          %v1643 = vand.u32 %v1163, 4294901760
          %v1644 = vsub.f32 %v1163, %v1643
          %1645 = vmatpush.msra.mxu0 %v1644
          %v1646 = vand.u32 %v1162, 4294901760
          %v1647 = vsub.f32 %v1162, %v1646
          %1648 = vmatpush.msra.mxu0 %v1647
          %v1649 = vand.u32 %v1161, 4294901760
          %v1650 = vsub.f32 %v1161, %v1649
          %1651 = vmatpush.msra.mxu0 %v1650
          %v1652 = vand.u32 %v1160, 4294901760
          %v1653 = vsub.f32 %v1160, %v1652
          %1654 = vmatpush.msra.mxu0 %v1653
          %v1655 = vand.u32 %v1159, 4294901760
          %v1656 = vsub.f32 %v1159, %v1655
          %1657 = vmatpush.msra.mxu0 %v1656
          %v1658 = vand.u32 %v1158, 4294901760
          %v1659 = vsub.f32 %v1158, %v1658
          %1660 = vmatpush.msra.mxu0 %v1659
          %v1661 = vand.u32 %v1157, 4294901760
          %v1662 = vsub.f32 %v1157, %v1661
          %1663 = vmatpush.msra.mxu0 %v1662
          %v1664 = vand.u32 %v1156, 4294901760
          %v1665 = vsub.f32 %v1156, %v1664
          %1666 = vmatpush.msra.mxu0 %v1665
          %v1667 = vand.u32 %v1155, 4294901760
          %v1668 = vsub.f32 %v1155, %v1667
          %1669 = vmatpush.msra.mxu0 %v1668
          %v1670 = vand.u32 %v1154, 4294901760
          %v1671 = vsub.f32 %v1154, %v1670
          %1672 = vmatpush.msra.mxu0 %v1671
          %v1673 = vand.u32 %v1153, 4294901760
          %v1674 = vsub.f32 %v1153, %v1673
          %1675 = vmatpush.msra.mxu0 %v1674
          %v1676 = vand.u32 %v1152, 4294901760
          %v1677 = vsub.f32 %v1152, %v1676
          %1678 = vmatpush.msra.mxu0 %v1677
          %v1679 = vand.u32 %v1151, 4294901760
          %v1680 = vsub.f32 %v1151, %v1679
          %1681 = vmatpush.msra.mxu0 %v1680
          %v1682 = vand.u32 %v1150, 4294901760
          %v1683 = vsub.f32 %v1150, %v1682
          %1684 = vmatpush.msra.mxu0 %v1683
          %v1685 = vand.u32 %v1149, 4294901760
          %v1686 = vsub.f32 %v1149, %v1685
          %1687 = vmatpush.msra.mxu0 %v1686
          %v1688 = vsub.f32 %v458, %v458
          %1689 = vmatmul.f32.gmra.mxu0 %v1688
          %v1690 = vpop.f32.mrf.mxu0
          %v1691 = vadd.f32 %v1638, %v1690
          %1692 = vdwg.mxu0
          %v1693 = vand.u32 %v1164, 4294901760
          %1694 = vmatpush.msra.mxu0 %v1693
          %v1695 = vand.u32 %v1163, 4294901760
          %1696 = vmatpush.msra.mxu0 %v1695
          %v1697 = vand.u32 %v1162, 4294901760
          %1698 = vmatpush.msra.mxu0 %v1697
          %v1699 = vand.u32 %v1161, 4294901760
          %1700 = vmatpush.msra.mxu0 %v1699
          %v1701 = vand.u32 %v1160, 4294901760
          %1702 = vmatpush.msra.mxu0 %v1701
          %v1703 = vand.u32 %v1159, 4294901760
          %1704 = vmatpush.msra.mxu0 %v1703
          %v1705 = vand.u32 %v1158, 4294901760
          %1706 = vmatpush.msra.mxu0 %v1705
          %v1707 = vand.u32 %v1157, 4294901760
          %1708 = vmatpush.msra.mxu0 %v1707
          %v1709 = vand.u32 %v1156, 4294901760
          %1710 = vmatpush.msra.mxu0 %v1709
          %v1711 = vand.u32 %v1155, 4294901760
          %1712 = vmatpush.msra.mxu0 %v1711
          %v1713 = vand.u32 %v1154, 4294901760
          %1714 = vmatpush.msra.mxu0 %v1713
          %v1715 = vand.u32 %v1153, 4294901760
          %1716 = vmatpush.msra.mxu0 %v1715
          %v1717 = vand.u32 %v1152, 4294901760
          %1718 = vmatpush.msra.mxu0 %v1717
          %v1719 = vand.u32 %v1151, 4294901760
          %1720 = vmatpush.msra.mxu0 %v1719
          %v1721 = vand.u32 %v1150, 4294901760
          %1722 = vmatpush.msra.mxu0 %v1721
          %v1723 = vand.u32 %v1149, 4294901760
          %1724 = vmatpush.msra.mxu0 %v1723
          %v1725 = vsub.f32 %v458, %v458
          %v1726 = vand.u32 %v1725, 4294901760
          %1727 = vmatmul.f32.gmra.mxu0 %v1726
          %v1728 = vpop.f32.mrf.mxu0
          %v1729 = vadd.f32 %v1691, %v1728
          %1730 = vdwg.mxu0
          %v1731 = vand.u32 %v1164, 4294901760
          %v1732 = vsub.f32 %v1164, %v1731
          %v1733 = vand.u32 %v1732, 4294901760
          %1734 = vmatpush.msra.mxu0 %v1733
          %v1735 = vand.u32 %v1163, 4294901760
          %v1736 = vsub.f32 %v1163, %v1735
          %v1737 = vand.u32 %v1736, 4294901760
          %1738 = vmatpush.msra.mxu0 %v1737
          %v1739 = vand.u32 %v1162, 4294901760
          %v1740 = vsub.f32 %v1162, %v1739
          %v1741 = vand.u32 %v1740, 4294901760
          %1742 = vmatpush.msra.mxu0 %v1741
          %v1743 = vand.u32 %v1161, 4294901760
          %v1744 = vsub.f32 %v1161, %v1743
          %v1745 = vand.u32 %v1744, 4294901760
          %1746 = vmatpush.msra.mxu0 %v1745
          %v1747 = vand.u32 %v1160, 4294901760
          %v1748 = vsub.f32 %v1160, %v1747
          %v1749 = vand.u32 %v1748, 4294901760
          %1750 = vmatpush.msra.mxu0 %v1749
          %v1751 = vand.u32 %v1159, 4294901760
          %v1752 = vsub.f32 %v1159, %v1751
          %v1753 = vand.u32 %v1752, 4294901760
          %1754 = vmatpush.msra.mxu0 %v1753
          %v1755 = vand.u32 %v1158, 4294901760
          %v1756 = vsub.f32 %v1158, %v1755
          %v1757 = vand.u32 %v1756, 4294901760
          %1758 = vmatpush.msra.mxu0 %v1757
          %v1759 = vand.u32 %v1157, 4294901760
          %v1760 = vsub.f32 %v1157, %v1759
          %v1761 = vand.u32 %v1760, 4294901760
          %1762 = vmatpush.msra.mxu0 %v1761
          %v1763 = vand.u32 %v1156, 4294901760
          %v1764 = vsub.f32 %v1156, %v1763
          %v1765 = vand.u32 %v1764, 4294901760
          %1766 = vmatpush.msra.mxu0 %v1765
          %v1767 = vand.u32 %v1155, 4294901760
          %v1768 = vsub.f32 %v1155, %v1767
          %v1769 = vand.u32 %v1768, 4294901760
          %1770 = vmatpush.msra.mxu0 %v1769
          %v1771 = vand.u32 %v1154, 4294901760
          %v1772 = vsub.f32 %v1154, %v1771
          %v1773 = vand.u32 %v1772, 4294901760
          %1774 = vmatpush.msra.mxu0 %v1773
          %v1775 = vand.u32 %v1153, 4294901760
          %v1776 = vsub.f32 %v1153, %v1775
          %v1777 = vand.u32 %v1776, 4294901760
          %1778 = vmatpush.msra.mxu0 %v1777
          %v1779 = vand.u32 %v1152, 4294901760
          %v1780 = vsub.f32 %v1152, %v1779
          %v1781 = vand.u32 %v1780, 4294901760
          %1782 = vmatpush.msra.mxu0 %v1781
          %v1783 = vand.u32 %v1151, 4294901760
          %v1784 = vsub.f32 %v1151, %v1783
          %v1785 = vand.u32 %v1784, 4294901760
          %1786 = vmatpush.msra.mxu0 %v1785
          %v1787 = vand.u32 %v1150, 4294901760
          %v1788 = vsub.f32 %v1150, %v1787
          %v1789 = vand.u32 %v1788, 4294901760
          %1790 = vmatpush.msra.mxu0 %v1789
          %v1791 = vand.u32 %v1149, 4294901760
          %v1792 = vsub.f32 %v1149, %v1791
          %v1793 = vand.u32 %v1792, 4294901760
          %1794 = vmatpush.msra.mxu0 %v1793
          %1795 = vmatmul.f32.gmra.mxu0 %v458
          %v1796 = vpop.f32.mrf.mxu0
          %v1797 = vadd.f32 %v1729, %v1796
          %1798 = vdwg.mxu0
          %v1799 = vand.u32 %v1164, 4294901760
          %1800 = vmatpush.msra.mxu0 %v1799
          %v1801 = vand.u32 %v1163, 4294901760
          %1802 = vmatpush.msra.mxu0 %v1801
          %v1803 = vand.u32 %v1162, 4294901760
          %1804 = vmatpush.msra.mxu0 %v1803
          %v1805 = vand.u32 %v1161, 4294901760
          %1806 = vmatpush.msra.mxu0 %v1805
          %v1807 = vand.u32 %v1160, 4294901760
          %1808 = vmatpush.msra.mxu0 %v1807
          %v1809 = vand.u32 %v1159, 4294901760
          %1810 = vmatpush.msra.mxu0 %v1809
          %v1811 = vand.u32 %v1158, 4294901760
          %1812 = vmatpush.msra.mxu0 %v1811
          %v1813 = vand.u32 %v1157, 4294901760
          %1814 = vmatpush.msra.mxu0 %v1813
          %v1815 = vand.u32 %v1156, 4294901760
          %1816 = vmatpush.msra.mxu0 %v1815
          %v1817 = vand.u32 %v1155, 4294901760
          %1818 = vmatpush.msra.mxu0 %v1817
          %v1819 = vand.u32 %v1154, 4294901760
          %1820 = vmatpush.msra.mxu0 %v1819
          %v1821 = vand.u32 %v1153, 4294901760
          %1822 = vmatpush.msra.mxu0 %v1821
          %v1823 = vand.u32 %v1152, 4294901760
          %1824 = vmatpush.msra.mxu0 %v1823
          %v1825 = vand.u32 %v1151, 4294901760
          %1826 = vmatpush.msra.mxu0 %v1825
          %v1827 = vand.u32 %v1150, 4294901760
          %1828 = vmatpush.msra.mxu0 %v1827
          %v1829 = vand.u32 %v1149, 4294901760
          %1830 = vmatpush.msra.mxu0 %v1829
          %1831 = vmatmul.f32.gmra.mxu0 %v458
          %v1832 = vpop.f32.mrf.mxu0
          %v1833 = vadd.f32 %v1797, %v1832
          %1834 = vdwg.mxu0
          %v1835 = vadd.f32 %v1132, %v1833
          %1836 = vst [vmem:[#allocation3] sm:$0xff] %v1835
        $region68: #{tpu_custom_call.1} parent=55 // pred_fallthru
          _
        // Predicated region
        $region69: #{tpu_custom_call.1} parent=55 // pred_check
          _
        $region70: #{tpu_custom_call.1} parent=55 // pred_check_branch
          %1838 = sbr.rel (%p396) target = $region72
        $region71: #{tpu_custom_call.1} parent=55 // pred_region
          %v1839 = vld [vmem:[#allocation2] sm:$0xff]
          %v1840 = vld [vmem:[#allocation3] sm:$0xff]
          %v1841 = vld [vmem:[%s5] sm:$0xff]
          %1843 = vset.pattern.permute.xlu0 0
          %1844 = vperm.xlu0 %1843, %v1841
          %v1845 = vpop.permute.xlu0 %1844
          %v1847 = vmul.f32 %v1839, %v1845
          %v1848 = vmul.f32 %v1839, %v1847
          %v1849 = vsub.f32 %v1840, %v1848
          %v1850 = vld [vmem:[%s6] sm:$0xff]
          %1852 = vset.pattern.permute.xlu0 0
          %1853 = vperm.xlu0 %1852, %v1850
          %v1854 = vpop.permute.xlu0 %1853
          %v1856 = vmul.f32 %v1849, %v1854
          %v1857 = vmax.f32 %v1856, 0.0
          %v1858 = vrsqrt.pop %v1857
          %v1859 = vmul.f32 %v1858, %v1857
          %v1860 = vmul.f32 %v1859, %v1858
          %v1861 = vmul.f32 0.5, %v1860
          %v1862 = vsub.f32 1.5, %v1861
          %v1863 = vmul.f32 %v1858, %v1862
          %v1864 = vmul.f32 %v1857, %v1863
          %vm1865 = vcmp.eq.f32.partialorder %v1857, inf
          %v1866 = vsel %vm1865, %v1857, %v1864
          %vm1867 = vcmp.eq.f32.partialorder %v1857, 0.0
          %v1868 = vand.u32 %v1857, 2147483648
          %v1869 = vsel %vm1867, %v1868, %v1866
          %v1870 = vadd.f32 %v1869, 1e-05
          %v1871 = vrcp.pop %v1870
          %v1872 = vmul.f32 %v1870, %v1871
          %v1873 = vsub.f32 1.0, %v1872
          %v1874 = vmul.f32 %v1871, %v1873
          %v1875 = vadd.f32 %v1871, %v1874
          %vm1876 = vweird.f32 %v1870
          %vm1877 = vweird.f32 %v1871
          %vm1878 = vmor %vm1876, %vm1877
          %v1879 = vsel %vm1878, %v1871, %v1875
          %v1880 = vand.u32 2147483647, %v1870
          %vm1881 = vcmp.eq.f32.partialorder %v1880, 8.507059e+37
          %v1882 = vand.u32 %v1870, 2147483648
          %v1883 = vor.u32 1.1754944e-38, %v1882
          %v1884 = vsel %vm1881, %v1883, %v1879
          %v1885 = vmul.f32 1.0, %v1884
          %v1886 = vld [vmem:[%s387] sm:$0x1]
          %v1888 = vperm.slane %v1886, 0
          %v1890 = vmul.f32 %v1888, %v1885
          %v1891 = vmul.f32 %v1890, %v1847
          %v1892 = vld [vmem:[%s390] sm:$0x1]
          %v1894 = vperm.slane %v1892, 0
          %v1896 = vsub.f32 %v1891, %v1894
          %1897 = vst [vmem:[#allocation2] sm:$0xff] %v1890
          %1898 = vst [vmem:[#allocation3] sm:$0xff] %v1896
        $region72: #{tpu_custom_call.1} parent=55 // pred_fallthru
          _
        %p1899 = scmp.eq.s32.totalorder %s30, 1
        // Predicated region
        $region73: #{tpu_custom_call.1} parent=55 // pred_check
          %p1900 = pneg %p1899
        $region74: #{tpu_custom_call.1} parent=55 // pred_check_branch
          %1902 = sbr.rel (%p1900) target = $region76
        $region75: #{tpu_custom_call.1} parent=55 // pred_region
          %v1903 = vld [vmem:[#allocation4] sm:$0xff]
          %v1904 = vld [vmem:[#allocation4 + $0x8] sm:$0xff]
          %v1905 = vld [vmem:[#allocation4 + $0x10] sm:$0xff]
          %v1906 = vld [vmem:[#allocation4 + $0x18] sm:$0xff]
          %v1907 = vld [vmem:[#allocation4 + $0x20] sm:$0xff]
          %v1908 = vld [vmem:[#allocation4 + $0x28] sm:$0xff]
          %v1909 = vld [vmem:[#allocation4 + $0x30] sm:$0xff]
          %v1910 = vld [vmem:[#allocation4 + $0x38] sm:$0xff]
          %v1911 = vld [vmem:[#allocation4 + $0x40] sm:$0xff]
          %v1912 = vld [vmem:[#allocation4 + $0x48] sm:$0xff]
          %v1913 = vld [vmem:[#allocation4 + $0x50] sm:$0xff]
          %v1914 = vld [vmem:[#allocation4 + $0x58] sm:$0xff]
          %v1915 = vld [vmem:[#allocation4 + $0x60] sm:$0xff]
          %v1916 = vld [vmem:[#allocation4 + $0x68] sm:$0xff]
          %v1917 = vld [vmem:[#allocation4 + $0x70] sm:$0xff]
          %v1918 = vld [vmem:[#allocation4 + $0x78] sm:$0xff]
          %v1919 = vld [vmem:[#allocation4 + $0x80] sm:$0xff]
          %v1920 = vld [vmem:[#allocation4 + $0x88] sm:$0xff]
          %v1921 = vld [vmem:[#allocation4 + $0x90] sm:$0xff]
          %v1922 = vld [vmem:[#allocation4 + $0x98] sm:$0xff]
          %v1923 = vld [vmem:[#allocation4 + $0xa0] sm:$0xff]
          %v1924 = vld [vmem:[#allocation4 + $0xa8] sm:$0xff]
          %v1925 = vld [vmem:[#allocation4 + $0xb0] sm:$0xff]
          %v1926 = vld [vmem:[#allocation4 + $0xb8] sm:$0xff]
          %v1927 = vld [vmem:[#allocation4 + $0xc0] sm:$0xff]
          %v1928 = vld [vmem:[#allocation4 + $0xc8] sm:$0xff]
          %v1929 = vld [vmem:[#allocation4 + $0xd0] sm:$0xff]
          %v1930 = vld [vmem:[#allocation4 + $0xd8] sm:$0xff]
          %v1931 = vld [vmem:[#allocation4 + $0xe0] sm:$0xff]
          %v1932 = vld [vmem:[#allocation4 + $0xe8] sm:$0xff]
          %v1933 = vld [vmem:[#allocation4 + $0xf0] sm:$0xff]
          %v1934 = vld [vmem:[#allocation4 + $0xf8] sm:$0xff]
          %v1935 = vlaneseq
          %v1936 = vshrl.u32 %v1935, 7
          %v1937 = vadd.s32 %v1936, 8
          %v1938 = vadd.s32 %v1936, 16
          %v1939 = vadd.s32 %v1936, 24
          %v1940 = vadd.s32 %v1936, 32
          %v1941 = vadd.s32 %v1936, 40
          %v1942 = vadd.s32 %v1936, 48
          %v1943 = vadd.s32 %v1936, 56
          %v1944 = vadd.s32 %v1936, 64
          %v1945 = vadd.s32 %v1936, 72
          %v1946 = vadd.s32 %v1936, 80
          %v1947 = vadd.s32 %v1936, 88
          %v1948 = vadd.s32 %v1936, 96
          %v1949 = vadd.s32 %v1936, 104
          %v1950 = vadd.s32 %v1936, 112
          %v1951 = vadd.s32 %v1936, 120
          %v1952 = vadd.s32 %v1936, 128
          %v1953 = vadd.s32 %v1936, 136
          %v1954 = vadd.s32 %v1936, 144
          %v1955 = vadd.s32 %v1936, 152
          %v1956 = vadd.s32 %v1936, 160
          %v1957 = vadd.s32 %v1936, 168
          %v1958 = vadd.s32 %v1936, 176
          %v1959 = vadd.s32 %v1936, 184
          %v1960 = vadd.s32 %v1936, 192
          %v1961 = vadd.s32 %v1936, 200
          %v1962 = vadd.s32 %v1936, 208
          %v1963 = vadd.s32 %v1936, 216
          %v1964 = vadd.s32 %v1936, 224
          %v1965 = vadd.s32 %v1936, 232
          %v1966 = vadd.s32 %v1936, 240
          %v1967 = vadd.s32 %v1936, 248
          %v1968 = vstv %s393
          %v1969 = vadd.s32 %v1936, %v1968
          %v1970 = vadd.s32 %v1937, %v1968
          %v1971 = vadd.s32 %v1938, %v1968
          %v1972 = vadd.s32 %v1939, %v1968
          %v1973 = vadd.s32 %v1940, %v1968
          %v1974 = vadd.s32 %v1941, %v1968
          %v1975 = vadd.s32 %v1942, %v1968
          %v1976 = vadd.s32 %v1943, %v1968
          %v1977 = vadd.s32 %v1944, %v1968
          %v1978 = vadd.s32 %v1945, %v1968
          %v1979 = vadd.s32 %v1946, %v1968
          %v1980 = vadd.s32 %v1947, %v1968
          %v1981 = vadd.s32 %v1948, %v1968
          %v1982 = vadd.s32 %v1949, %v1968
          %v1983 = vadd.s32 %v1950, %v1968
          %v1984 = vadd.s32 %v1951, %v1968
          %v1985 = vadd.s32 %v1952, %v1968
          %v1986 = vadd.s32 %v1953, %v1968
          %v1987 = vadd.s32 %v1954, %v1968
          %v1988 = vadd.s32 %v1955, %v1968
          %v1989 = vadd.s32 %v1956, %v1968
          %v1990 = vadd.s32 %v1957, %v1968
          %v1991 = vadd.s32 %v1958, %v1968
          %v1992 = vadd.s32 %v1959, %v1968
          %v1993 = vadd.s32 %v1960, %v1968
          %v1994 = vadd.s32 %v1961, %v1968
          %v1995 = vadd.s32 %v1962, %v1968
          %v1996 = vadd.s32 %v1963, %v1968
          %v1997 = vadd.s32 %v1964, %v1968
          %v1998 = vadd.s32 %v1965, %v1968
          %v1999 = vadd.s32 %v1966, %v1968
          %v2000 = vadd.s32 %v1967, %v1968
          %v2001 = vld [vmem:[%s3] sm:$0x1]
          %v2002 = vperm.slane %v2001, 0
          %vm2003 = vcmp.ge.s32.totalorder %v1969, %v2002
          %vm2004 = vcmp.ge.s32.totalorder %v1970, %v2002
          %vm2005 = vcmp.ge.s32.totalorder %v1971, %v2002
          %vm2006 = vcmp.ge.s32.totalorder %v1972, %v2002
          %vm2007 = vcmp.ge.s32.totalorder %v1973, %v2002
          %vm2008 = vcmp.ge.s32.totalorder %v1974, %v2002
          %vm2009 = vcmp.ge.s32.totalorder %v1975, %v2002
          %vm2010 = vcmp.ge.s32.totalorder %v1976, %v2002
          %vm2011 = vcmp.ge.s32.totalorder %v1977, %v2002
          %vm2012 = vcmp.ge.s32.totalorder %v1978, %v2002
          %vm2013 = vcmp.ge.s32.totalorder %v1979, %v2002
          %vm2014 = vcmp.ge.s32.totalorder %v1980, %v2002
          %vm2015 = vcmp.ge.s32.totalorder %v1981, %v2002
          %vm2016 = vcmp.ge.s32.totalorder %v1982, %v2002
          %vm2017 = vcmp.ge.s32.totalorder %v1983, %v2002
          %vm2018 = vcmp.ge.s32.totalorder %v1984, %v2002
          %vm2019 = vcmp.ge.s32.totalorder %v1985, %v2002
          %vm2020 = vcmp.ge.s32.totalorder %v1986, %v2002
          %vm2021 = vcmp.ge.s32.totalorder %v1987, %v2002
          %vm2022 = vcmp.ge.s32.totalorder %v1988, %v2002
          %vm2023 = vcmp.ge.s32.totalorder %v1989, %v2002
          %vm2024 = vcmp.ge.s32.totalorder %v1990, %v2002
          %vm2025 = vcmp.ge.s32.totalorder %v1991, %v2002
          %vm2026 = vcmp.ge.s32.totalorder %v1992, %v2002
          %vm2027 = vcmp.ge.s32.totalorder %v1993, %v2002
          %vm2028 = vcmp.ge.s32.totalorder %v1994, %v2002
          %vm2029 = vcmp.ge.s32.totalorder %v1995, %v2002
          %vm2030 = vcmp.ge.s32.totalorder %v1996, %v2002
          %vm2031 = vcmp.ge.s32.totalorder %v1997, %v2002
          %vm2032 = vcmp.ge.s32.totalorder %v1998, %v2002
          %vm2033 = vcmp.ge.s32.totalorder %v1999, %v2002
          %vm2034 = vcmp.ge.s32.totalorder %v2000, %v2002
          %v2035 = vld [vmem:[%s4] sm:$0x1]
          %v2036 = vperm.slane %v2035, 0
          %vm2037 = vcmp.lt.s32.totalorder %v1969, %v2036
          %vm2038 = vcmp.lt.s32.totalorder %v1970, %v2036
          %vm2039 = vcmp.lt.s32.totalorder %v1971, %v2036
          %vm2040 = vcmp.lt.s32.totalorder %v1972, %v2036
          %vm2041 = vcmp.lt.s32.totalorder %v1973, %v2036
          %vm2042 = vcmp.lt.s32.totalorder %v1974, %v2036
          %vm2043 = vcmp.lt.s32.totalorder %v1975, %v2036
          %vm2044 = vcmp.lt.s32.totalorder %v1976, %v2036
          %vm2045 = vcmp.lt.s32.totalorder %v1977, %v2036
          %vm2046 = vcmp.lt.s32.totalorder %v1978, %v2036
          %vm2047 = vcmp.lt.s32.totalorder %v1979, %v2036
          %vm2048 = vcmp.lt.s32.totalorder %v1980, %v2036
          %vm2049 = vcmp.lt.s32.totalorder %v1981, %v2036
          %vm2050 = vcmp.lt.s32.totalorder %v1982, %v2036
          %vm2051 = vcmp.lt.s32.totalorder %v1983, %v2036
          %vm2052 = vcmp.lt.s32.totalorder %v1984, %v2036
          %vm2053 = vcmp.lt.s32.totalorder %v1985, %v2036
          %vm2054 = vcmp.lt.s32.totalorder %v1986, %v2036
          %vm2055 = vcmp.lt.s32.totalorder %v1987, %v2036
          %vm2056 = vcmp.lt.s32.totalorder %v1988, %v2036
          %vm2057 = vcmp.lt.s32.totalorder %v1989, %v2036
          %vm2058 = vcmp.lt.s32.totalorder %v1990, %v2036
          %vm2059 = vcmp.lt.s32.totalorder %v1991, %v2036
          %vm2060 = vcmp.lt.s32.totalorder %v1992, %v2036
          %vm2061 = vcmp.lt.s32.totalorder %v1993, %v2036
          %vm2062 = vcmp.lt.s32.totalorder %v1994, %v2036
          %vm2063 = vcmp.lt.s32.totalorder %v1995, %v2036
          %vm2064 = vcmp.lt.s32.totalorder %v1996, %v2036
          %vm2065 = vcmp.lt.s32.totalorder %v1997, %v2036
          %vm2066 = vcmp.lt.s32.totalorder %v1998, %v2036
          %vm2067 = vcmp.lt.s32.totalorder %v1999, %v2036
          %vm2068 = vcmp.lt.s32.totalorder %v2000, %v2036
          %vm2069 = vmand %vm2003, %vm2037
          %vm2070 = vmand %vm2004, %vm2038
          %vm2071 = vmand %vm2005, %vm2039
          %vm2072 = vmand %vm2006, %vm2040
          %vm2073 = vmand %vm2007, %vm2041
          %vm2074 = vmand %vm2008, %vm2042
          %vm2075 = vmand %vm2009, %vm2043
          %vm2076 = vmand %vm2010, %vm2044
          %vm2077 = vmand %vm2011, %vm2045
          %vm2078 = vmand %vm2012, %vm2046
          %vm2079 = vmand %vm2013, %vm2047
          %vm2080 = vmand %vm2014, %vm2048
          %vm2081 = vmand %vm2015, %vm2049
          %vm2082 = vmand %vm2016, %vm2050
          %vm2083 = vmand %vm2017, %vm2051
          %vm2084 = vmand %vm2018, %vm2052
          %vm2085 = vmand %vm2019, %vm2053
          %vm2086 = vmand %vm2020, %vm2054
          %vm2087 = vmand %vm2021, %vm2055
          %vm2088 = vmand %vm2022, %vm2056
          %vm2089 = vmand %vm2023, %vm2057
          %vm2090 = vmand %vm2024, %vm2058
          %vm2091 = vmand %vm2025, %vm2059
          %vm2092 = vmand %vm2026, %vm2060
          %vm2093 = vmand %vm2027, %vm2061
          %vm2094 = vmand %vm2028, %vm2062
          %vm2095 = vmand %vm2029, %vm2063
          %vm2096 = vmand %vm2030, %vm2064
          %vm2097 = vmand %vm2031, %vm2065
          %vm2098 = vmand %vm2032, %vm2066
          %vm2099 = vmand %vm2033, %vm2067
          %vm2100 = vmand %vm2034, %vm2068
          %v2101 = vsel %vm2069, 1.0, 0.0
          %v2102 = vsel %vm2070, 1.0, 0.0
          %v2103 = vsel %vm2071, 1.0, 0.0
          %v2104 = vsel %vm2072, 1.0, 0.0
          %v2105 = vsel %vm2073, 1.0, 0.0
          %v2106 = vsel %vm2074, 1.0, 0.0
          %v2107 = vsel %vm2075, 1.0, 0.0
          %v2108 = vsel %vm2076, 1.0, 0.0
          %v2109 = vsel %vm2077, 1.0, 0.0
          %v2110 = vsel %vm2078, 1.0, 0.0
          %v2111 = vsel %vm2079, 1.0, 0.0
          %v2112 = vsel %vm2080, 1.0, 0.0
          %v2113 = vsel %vm2081, 1.0, 0.0
          %v2114 = vsel %vm2082, 1.0, 0.0
          %v2115 = vsel %vm2083, 1.0, 0.0
          %v2116 = vsel %vm2084, 1.0, 0.0
          %v2117 = vsel %vm2085, 1.0, 0.0
          %v2118 = vsel %vm2086, 1.0, 0.0
          %v2119 = vsel %vm2087, 1.0, 0.0
          %v2120 = vsel %vm2088, 1.0, 0.0
          %v2121 = vsel %vm2089, 1.0, 0.0
          %v2122 = vsel %vm2090, 1.0, 0.0
          %v2123 = vsel %vm2091, 1.0, 0.0
          %v2124 = vsel %vm2092, 1.0, 0.0
          %v2125 = vsel %vm2093, 1.0, 0.0
          %v2126 = vsel %vm2094, 1.0, 0.0
          %v2127 = vsel %vm2095, 1.0, 0.0
          %v2128 = vsel %vm2096, 1.0, 0.0
          %v2129 = vsel %vm2097, 1.0, 0.0
          %v2130 = vsel %vm2098, 1.0, 0.0
          %v2131 = vsel %vm2099, 1.0, 0.0
          %v2132 = vsel %vm2100, 1.0, 0.0
          %v2133 = vld [vmem:[#allocation2] sm:$0xff]
          %vm2134 = vcmask 64512
          %v2136 = vsel %vm2134, %v2101, 0
          %v2139 = vsel %vm2134, %v2102, 0
          %v2142 = vsel %vm2134, %v2103, 0
          %v2145 = vsel %vm2134, %v2104, 0
          %v2148 = vsel %vm2134, %v2105, 0
          %v2151 = vsel %vm2134, %v2106, 0
          %v2154 = vsel %vm2134, %v2107, 0
          %v2157 = vsel %vm2134, %v2108, 0
          %v2160 = vsel %vm2134, %v2109, 0
          %v2163 = vsel %vm2134, %v2110, 0
          %v2166 = vsel %vm2134, %v2111, 0
          %v2169 = vsel %vm2134, %v2112, 0
          %v2172 = vsel %vm2134, %v2113, 0
          %v2175 = vsel %vm2134, %v2114, 0
          %v2178 = vsel %vm2134, %v2115, 0
          %v2181 = vsel %vm2134, %v2116, 0
          %v2184 = vsel %vm2134, %v2117, 0
          %v2187 = vsel %vm2134, %v2118, 0
          %v2190 = vsel %vm2134, %v2119, 0
          %v2193 = vsel %vm2134, %v2120, 0
          %v2196 = vsel %vm2134, %v2121, 0
          %v2199 = vsel %vm2134, %v2122, 0
          %v2202 = vsel %vm2134, %v2123, 0
          %v2205 = vsel %vm2134, %v2124, 0
          %v2208 = vsel %vm2134, %v2125, 0
          %v2211 = vsel %vm2134, %v2126, 0
          %v2214 = vsel %vm2134, %v2127, 0
          %v2217 = vsel %vm2134, %v2128, 0
          %v2220 = vsel %vm2134, %v2129, 0
          %v2223 = vsel %vm2134, %v2130, 0
          %v2226 = vsel %vm2134, %v2131, 0
          %v2229 = vsel %vm2134, %v2132, 0
          %2231 = vmatpush.msra.mxu0 0.0
          %2232 = vmatpush.msra.mxu0 0.0
          %2233 = vmatpush.msra.mxu0 0.0
          %2234 = vmatpush.msra.mxu0 0.0
          %2235 = vmatpush.msra.mxu0 0.0
          %2236 = vmatpush.msra.mxu0 0.0
          %2237 = vmatpush.msra.mxu0 0.0
          %2238 = vmatpush.msra.mxu0 0.0
          %2239 = vmatpush.msra.mxu0 0.0
          %2240 = vmatpush.msra.mxu0 0.0
          %2241 = vmatpush.msra.mxu0 0.0
          %2242 = vmatpush.msra.mxu0 0.0
          %2243 = vmatpush.msra.mxu0 0.0
          %2244 = vmatpush.msra.mxu0 0.0
          %2245 = vmatpush.msra.mxu0 0.0
          %v2246 = vand.u32 %v2133, 4294901760
          %2247 = vmatpush.msra.mxu0 %v2246
          %v2248 = vand.u32 %v2136, 4294901760
          %v2249 = vsub.f32 %v2136, %v2248
          %v2250 = vand.u32 %v2249, 4294901760
          %v2251 = vsub.f32 %v2249, %v2250
          %v2252 = vand.u32 %v2251, 4294901760
          %2253 = vmatmul.f32.gmra.mxu0 %v2252
          %v2254 = vpop.f32.mrf.mxu0
          %v2255 = vadd.f32 0.0, %v2254
          %v2256 = vand.u32 %v2139, 4294901760
          %v2257 = vsub.f32 %v2139, %v2256
          %v2258 = vand.u32 %v2257, 4294901760
          %v2259 = vsub.f32 %v2257, %v2258
          %v2260 = vand.u32 %v2259, 4294901760
          %2261 = vmatmul.f32.gmra.mxu0 %v2260
          %v2262 = vpop.f32.mrf.mxu0
          %v2263 = vadd.f32 0.0, %v2262
          %v2264 = vand.u32 %v2142, 4294901760
          %v2265 = vsub.f32 %v2142, %v2264
          %v2266 = vand.u32 %v2265, 4294901760
          %v2267 = vsub.f32 %v2265, %v2266
          %v2268 = vand.u32 %v2267, 4294901760
          %2269 = vmatmul.f32.gmra.mxu0 %v2268
          %v2270 = vpop.f32.mrf.mxu0
          %v2271 = vadd.f32 0.0, %v2270
          %v2272 = vand.u32 %v2145, 4294901760
          %v2273 = vsub.f32 %v2145, %v2272
          %v2274 = vand.u32 %v2273, 4294901760
          %v2275 = vsub.f32 %v2273, %v2274
          %v2276 = vand.u32 %v2275, 4294901760
          %2277 = vmatmul.f32.gmra.mxu0 %v2276
          %v2278 = vpop.f32.mrf.mxu0
          %v2279 = vadd.f32 0.0, %v2278
          %v2280 = vand.u32 %v2148, 4294901760
          %v2281 = vsub.f32 %v2148, %v2280
          %v2282 = vand.u32 %v2281, 4294901760
          %v2283 = vsub.f32 %v2281, %v2282
          %v2284 = vand.u32 %v2283, 4294901760
          %2285 = vmatmul.f32.gmra.mxu0 %v2284
          %v2286 = vpop.f32.mrf.mxu0
          %v2287 = vadd.f32 0.0, %v2286
          %v2288 = vand.u32 %v2151, 4294901760
          %v2289 = vsub.f32 %v2151, %v2288
          %v2290 = vand.u32 %v2289, 4294901760
          %v2291 = vsub.f32 %v2289, %v2290
          %v2292 = vand.u32 %v2291, 4294901760
          %2293 = vmatmul.f32.gmra.mxu0 %v2292
          %v2294 = vpop.f32.mrf.mxu0
          %v2295 = vadd.f32 0.0, %v2294
          %v2296 = vand.u32 %v2154, 4294901760
          %v2297 = vsub.f32 %v2154, %v2296
          %v2298 = vand.u32 %v2297, 4294901760
          %v2299 = vsub.f32 %v2297, %v2298
          %v2300 = vand.u32 %v2299, 4294901760
          %2301 = vmatmul.f32.gmra.mxu0 %v2300
          %v2302 = vpop.f32.mrf.mxu0
          %v2303 = vadd.f32 0.0, %v2302
          %v2304 = vand.u32 %v2157, 4294901760
          %v2305 = vsub.f32 %v2157, %v2304
          %v2306 = vand.u32 %v2305, 4294901760
          %v2307 = vsub.f32 %v2305, %v2306
          %v2308 = vand.u32 %v2307, 4294901760
          %2309 = vmatmul.f32.gmra.mxu0 %v2308
          %v2310 = vpop.f32.mrf.mxu0
          %v2311 = vadd.f32 0.0, %v2310
          %v2312 = vand.u32 %v2160, 4294901760
          %v2313 = vsub.f32 %v2160, %v2312
          %v2314 = vand.u32 %v2313, 4294901760
          %v2315 = vsub.f32 %v2313, %v2314
          %v2316 = vand.u32 %v2315, 4294901760
          %2317 = vmatmul.f32.gmra.mxu0 %v2316
          %v2318 = vpop.f32.mrf.mxu0
          %v2319 = vadd.f32 0.0, %v2318
          %v2320 = vand.u32 %v2163, 4294901760
          %v2321 = vsub.f32 %v2163, %v2320
          %v2322 = vand.u32 %v2321, 4294901760
          %v2323 = vsub.f32 %v2321, %v2322
          %v2324 = vand.u32 %v2323, 4294901760
          %2325 = vmatmul.f32.gmra.mxu0 %v2324
          %v2326 = vpop.f32.mrf.mxu0
          %v2327 = vadd.f32 0.0, %v2326
          %v2328 = vand.u32 %v2166, 4294901760
          %v2329 = vsub.f32 %v2166, %v2328
          %v2330 = vand.u32 %v2329, 4294901760
          %v2331 = vsub.f32 %v2329, %v2330
          %v2332 = vand.u32 %v2331, 4294901760
          %2333 = vmatmul.f32.gmra.mxu0 %v2332
          %v2334 = vpop.f32.mrf.mxu0
          %v2335 = vadd.f32 0.0, %v2334
          %v2336 = vand.u32 %v2169, 4294901760
          %v2337 = vsub.f32 %v2169, %v2336
          %v2338 = vand.u32 %v2337, 4294901760
          %v2339 = vsub.f32 %v2337, %v2338
          %v2340 = vand.u32 %v2339, 4294901760
          %2341 = vmatmul.f32.gmra.mxu0 %v2340
          %v2342 = vpop.f32.mrf.mxu0
          %v2343 = vadd.f32 0.0, %v2342
          %v2344 = vand.u32 %v2172, 4294901760
          %v2345 = vsub.f32 %v2172, %v2344
          %v2346 = vand.u32 %v2345, 4294901760
          %v2347 = vsub.f32 %v2345, %v2346
          %v2348 = vand.u32 %v2347, 4294901760
          %2349 = vmatmul.f32.gmra.mxu0 %v2348
          %v2350 = vpop.f32.mrf.mxu0
          %v2351 = vadd.f32 0.0, %v2350
          %v2352 = vand.u32 %v2175, 4294901760
          %v2353 = vsub.f32 %v2175, %v2352
          %v2354 = vand.u32 %v2353, 4294901760
          %v2355 = vsub.f32 %v2353, %v2354
          %v2356 = vand.u32 %v2355, 4294901760
          %2357 = vmatmul.f32.gmra.mxu0 %v2356
          %v2358 = vpop.f32.mrf.mxu0
          %v2359 = vadd.f32 0.0, %v2358
          %v2360 = vand.u32 %v2178, 4294901760
          %v2361 = vsub.f32 %v2178, %v2360
          %v2362 = vand.u32 %v2361, 4294901760
          %v2363 = vsub.f32 %v2361, %v2362
          %v2364 = vand.u32 %v2363, 4294901760
          %2365 = vmatmul.f32.gmra.mxu0 %v2364
          %v2366 = vpop.f32.mrf.mxu0
          %v2367 = vadd.f32 0.0, %v2366
          %v2368 = vand.u32 %v2181, 4294901760
          %v2369 = vsub.f32 %v2181, %v2368
          %v2370 = vand.u32 %v2369, 4294901760
          %v2371 = vsub.f32 %v2369, %v2370
          %v2372 = vand.u32 %v2371, 4294901760
          %2373 = vmatmul.f32.gmra.mxu0 %v2372
          %v2374 = vpop.f32.mrf.mxu0
          %v2375 = vadd.f32 0.0, %v2374
          %v2376 = vand.u32 %v2184, 4294901760
          %v2377 = vsub.f32 %v2184, %v2376
          %v2378 = vand.u32 %v2377, 4294901760
          %v2379 = vsub.f32 %v2377, %v2378
          %v2380 = vand.u32 %v2379, 4294901760
          %2381 = vmatmul.f32.gmra.mxu0 %v2380
          %v2382 = vpop.f32.mrf.mxu0
          %v2383 = vadd.f32 0.0, %v2382
          %v2384 = vand.u32 %v2187, 4294901760
          %v2385 = vsub.f32 %v2187, %v2384
          %v2386 = vand.u32 %v2385, 4294901760
          %v2387 = vsub.f32 %v2385, %v2386
          %v2388 = vand.u32 %v2387, 4294901760
          %2389 = vmatmul.f32.gmra.mxu0 %v2388
          %v2390 = vpop.f32.mrf.mxu0
          %v2391 = vadd.f32 0.0, %v2390
          %v2392 = vand.u32 %v2190, 4294901760
          %v2393 = vsub.f32 %v2190, %v2392
          %v2394 = vand.u32 %v2393, 4294901760
          %v2395 = vsub.f32 %v2393, %v2394
          %v2396 = vand.u32 %v2395, 4294901760
          %2397 = vmatmul.f32.gmra.mxu0 %v2396
          %v2398 = vpop.f32.mrf.mxu0
          %v2399 = vadd.f32 0.0, %v2398
          %v2400 = vand.u32 %v2193, 4294901760
          %v2401 = vsub.f32 %v2193, %v2400
          %v2402 = vand.u32 %v2401, 4294901760
          %v2403 = vsub.f32 %v2401, %v2402
          %v2404 = vand.u32 %v2403, 4294901760
          %2405 = vmatmul.f32.gmra.mxu0 %v2404
          %v2406 = vpop.f32.mrf.mxu0
          %v2407 = vadd.f32 0.0, %v2406
          %v2408 = vand.u32 %v2196, 4294901760
          %v2409 = vsub.f32 %v2196, %v2408
          %v2410 = vand.u32 %v2409, 4294901760
          %v2411 = vsub.f32 %v2409, %v2410
          %v2412 = vand.u32 %v2411, 4294901760
          %2413 = vmatmul.f32.gmra.mxu0 %v2412
          %v2414 = vpop.f32.mrf.mxu0
          %v2415 = vadd.f32 0.0, %v2414
          %v2416 = vand.u32 %v2199, 4294901760
          %v2417 = vsub.f32 %v2199, %v2416
          %v2418 = vand.u32 %v2417, 4294901760
          %v2419 = vsub.f32 %v2417, %v2418
          %v2420 = vand.u32 %v2419, 4294901760
          %2421 = vmatmul.f32.gmra.mxu0 %v2420
          %v2422 = vpop.f32.mrf.mxu0
          %v2423 = vadd.f32 0.0, %v2422
          %v2424 = vand.u32 %v2202, 4294901760
          %v2425 = vsub.f32 %v2202, %v2424
          %v2426 = vand.u32 %v2425, 4294901760
          %v2427 = vsub.f32 %v2425, %v2426
          %v2428 = vand.u32 %v2427, 4294901760
          %2429 = vmatmul.f32.gmra.mxu0 %v2428
          %v2430 = vpop.f32.mrf.mxu0
          %v2431 = vadd.f32 0.0, %v2430
          %v2432 = vand.u32 %v2205, 4294901760
          %v2433 = vsub.f32 %v2205, %v2432
          %v2434 = vand.u32 %v2433, 4294901760
          %v2435 = vsub.f32 %v2433, %v2434
          %v2436 = vand.u32 %v2435, 4294901760
          %2437 = vmatmul.f32.gmra.mxu0 %v2436
          %v2438 = vpop.f32.mrf.mxu0
          %v2439 = vadd.f32 0.0, %v2438
          %v2440 = vand.u32 %v2208, 4294901760
          %v2441 = vsub.f32 %v2208, %v2440
          %v2442 = vand.u32 %v2441, 4294901760
          %v2443 = vsub.f32 %v2441, %v2442
          %v2444 = vand.u32 %v2443, 4294901760
          %2445 = vmatmul.f32.gmra.mxu0 %v2444
          %v2446 = vpop.f32.mrf.mxu0
          %v2447 = vadd.f32 0.0, %v2446
          %v2448 = vand.u32 %v2211, 4294901760
          %v2449 = vsub.f32 %v2211, %v2448
          %v2450 = vand.u32 %v2449, 4294901760
          %v2451 = vsub.f32 %v2449, %v2450
          %v2452 = vand.u32 %v2451, 4294901760
          %2453 = vmatmul.f32.gmra.mxu0 %v2452
          %v2454 = vpop.f32.mrf.mxu0
          %v2455 = vadd.f32 0.0, %v2454
          %v2456 = vand.u32 %v2214, 4294901760
          %v2457 = vsub.f32 %v2214, %v2456
          %v2458 = vand.u32 %v2457, 4294901760
          %v2459 = vsub.f32 %v2457, %v2458
          %v2460 = vand.u32 %v2459, 4294901760
          %2461 = vmatmul.f32.gmra.mxu0 %v2460
          %v2462 = vpop.f32.mrf.mxu0
          %v2463 = vadd.f32 0.0, %v2462
          %v2464 = vand.u32 %v2217, 4294901760
          %v2465 = vsub.f32 %v2217, %v2464
          %v2466 = vand.u32 %v2465, 4294901760
          %v2467 = vsub.f32 %v2465, %v2466
          %v2468 = vand.u32 %v2467, 4294901760
          %2469 = vmatmul.f32.gmra.mxu0 %v2468
          %v2470 = vpop.f32.mrf.mxu0
          %v2471 = vadd.f32 0.0, %v2470
          %v2472 = vand.u32 %v2220, 4294901760
          %v2473 = vsub.f32 %v2220, %v2472
          %v2474 = vand.u32 %v2473, 4294901760
          %v2475 = vsub.f32 %v2473, %v2474
          %v2476 = vand.u32 %v2475, 4294901760
          %2477 = vmatmul.f32.gmra.mxu0 %v2476
          %v2478 = vpop.f32.mrf.mxu0
          %v2479 = vadd.f32 0.0, %v2478
          %v2480 = vand.u32 %v2223, 4294901760
          %v2481 = vsub.f32 %v2223, %v2480
          %v2482 = vand.u32 %v2481, 4294901760
          %v2483 = vsub.f32 %v2481, %v2482
          %v2484 = vand.u32 %v2483, 4294901760
          %2485 = vmatmul.f32.gmra.mxu0 %v2484
          %v2486 = vpop.f32.mrf.mxu0
          %v2487 = vadd.f32 0.0, %v2486
          %v2488 = vand.u32 %v2226, 4294901760
          %v2489 = vsub.f32 %v2226, %v2488
          %v2490 = vand.u32 %v2489, 4294901760
          %v2491 = vsub.f32 %v2489, %v2490
          %v2492 = vand.u32 %v2491, 4294901760
          %2493 = vmatmul.f32.gmra.mxu0 %v2492
          %v2494 = vpop.f32.mrf.mxu0
          %v2495 = vadd.f32 0.0, %v2494
          %v2496 = vand.u32 %v2229, 4294901760
          %v2497 = vsub.f32 %v2229, %v2496
          %v2498 = vand.u32 %v2497, 4294901760
          %v2499 = vsub.f32 %v2497, %v2498
          %v2500 = vand.u32 %v2499, 4294901760
          %2501 = vmatmul.f32.gmra.mxu0 %v2500
          %v2502 = vpop.f32.mrf.mxu0
          %v2503 = vadd.f32 0.0, %v2502
          %2504 = vdwg.mxu0
          %2505 = vmatpush.msra.mxu0 0.0
          %2506 = vmatpush.msra.mxu0 0.0
          %2507 = vmatpush.msra.mxu0 0.0
          %2508 = vmatpush.msra.mxu0 0.0
          %2509 = vmatpush.msra.mxu0 0.0
          %2510 = vmatpush.msra.mxu0 0.0
          %2511 = vmatpush.msra.mxu0 0.0
          %2512 = vmatpush.msra.mxu0 0.0
          %2513 = vmatpush.msra.mxu0 0.0
          %2514 = vmatpush.msra.mxu0 0.0
          %2515 = vmatpush.msra.mxu0 0.0
          %2516 = vmatpush.msra.mxu0 0.0
          %2517 = vmatpush.msra.mxu0 0.0
          %2518 = vmatpush.msra.mxu0 0.0
          %2519 = vmatpush.msra.mxu0 0.0
          %v2520 = vand.u32 %v2133, 4294901760
          %v2521 = vsub.f32 %v2133, %v2520
          %v2522 = vand.u32 %v2521, 4294901760
          %v2523 = vsub.f32 %v2521, %v2522
          %v2524 = vand.u32 %v2523, 4294901760
          %2525 = vmatpush.msra.mxu0 %v2524
          %v2526 = vand.u32 %v2136, 4294901760
          %2527 = vmatmul.f32.gmra.mxu0 %v2526
          %v2528 = vpop.f32.mrf.mxu0
          %v2529 = vadd.f32 %v2255, %v2528
          %v2530 = vand.u32 %v2139, 4294901760
          %2531 = vmatmul.f32.gmra.mxu0 %v2530
          %v2532 = vpop.f32.mrf.mxu0
          %v2533 = vadd.f32 %v2263, %v2532
          %v2534 = vand.u32 %v2142, 4294901760
          %2535 = vmatmul.f32.gmra.mxu0 %v2534
          %v2536 = vpop.f32.mrf.mxu0
          %v2537 = vadd.f32 %v2271, %v2536
          %v2538 = vand.u32 %v2145, 4294901760
          %2539 = vmatmul.f32.gmra.mxu0 %v2538
          %v2540 = vpop.f32.mrf.mxu0
          %v2541 = vadd.f32 %v2279, %v2540
          %v2542 = vand.u32 %v2148, 4294901760
          %2543 = vmatmul.f32.gmra.mxu0 %v2542
          %v2544 = vpop.f32.mrf.mxu0
          %v2545 = vadd.f32 %v2287, %v2544
          %v2546 = vand.u32 %v2151, 4294901760
          %2547 = vmatmul.f32.gmra.mxu0 %v2546
          %v2548 = vpop.f32.mrf.mxu0
          %v2549 = vadd.f32 %v2295, %v2548
          %v2550 = vand.u32 %v2154, 4294901760
          %2551 = vmatmul.f32.gmra.mxu0 %v2550
          %v2552 = vpop.f32.mrf.mxu0
          %v2553 = vadd.f32 %v2303, %v2552
          %v2554 = vand.u32 %v2157, 4294901760
          %2555 = vmatmul.f32.gmra.mxu0 %v2554
          %v2556 = vpop.f32.mrf.mxu0
          %v2557 = vadd.f32 %v2311, %v2556
          %v2558 = vand.u32 %v2160, 4294901760
          %2559 = vmatmul.f32.gmra.mxu0 %v2558
          %v2560 = vpop.f32.mrf.mxu0
          %v2561 = vadd.f32 %v2319, %v2560
          %v2562 = vand.u32 %v2163, 4294901760
          %2563 = vmatmul.f32.gmra.mxu0 %v2562
          %v2564 = vpop.f32.mrf.mxu0
          %v2565 = vadd.f32 %v2327, %v2564
          %v2566 = vand.u32 %v2166, 4294901760
          %2567 = vmatmul.f32.gmra.mxu0 %v2566
          %v2568 = vpop.f32.mrf.mxu0
          %v2569 = vadd.f32 %v2335, %v2568
          %v2570 = vand.u32 %v2169, 4294901760
          %2571 = vmatmul.f32.gmra.mxu0 %v2570
          %v2572 = vpop.f32.mrf.mxu0
          %v2573 = vadd.f32 %v2343, %v2572
          %v2574 = vand.u32 %v2172, 4294901760
          %2575 = vmatmul.f32.gmra.mxu0 %v2574
          %v2576 = vpop.f32.mrf.mxu0
          %v2577 = vadd.f32 %v2351, %v2576
          %v2578 = vand.u32 %v2175, 4294901760
          %2579 = vmatmul.f32.gmra.mxu0 %v2578
          %v2580 = vpop.f32.mrf.mxu0
          %v2581 = vadd.f32 %v2359, %v2580
          %v2582 = vand.u32 %v2178, 4294901760
          %2583 = vmatmul.f32.gmra.mxu0 %v2582
          %v2584 = vpop.f32.mrf.mxu0
          %v2585 = vadd.f32 %v2367, %v2584
          %v2586 = vand.u32 %v2181, 4294901760
          %2587 = vmatmul.f32.gmra.mxu0 %v2586
          %v2588 = vpop.f32.mrf.mxu0
          %v2589 = vadd.f32 %v2375, %v2588
          %v2590 = vand.u32 %v2184, 4294901760
          %2591 = vmatmul.f32.gmra.mxu0 %v2590
          %v2592 = vpop.f32.mrf.mxu0
          %v2593 = vadd.f32 %v2383, %v2592
          %v2594 = vand.u32 %v2187, 4294901760
          %2595 = vmatmul.f32.gmra.mxu0 %v2594
          %v2596 = vpop.f32.mrf.mxu0
          %v2597 = vadd.f32 %v2391, %v2596
          %v2598 = vand.u32 %v2190, 4294901760
          %2599 = vmatmul.f32.gmra.mxu0 %v2598
          %v2600 = vpop.f32.mrf.mxu0
          %v2601 = vadd.f32 %v2399, %v2600
          %v2602 = vand.u32 %v2193, 4294901760
          %2603 = vmatmul.f32.gmra.mxu0 %v2602
          %v2604 = vpop.f32.mrf.mxu0
          %v2605 = vadd.f32 %v2407, %v2604
          %v2606 = vand.u32 %v2196, 4294901760
          %2607 = vmatmul.f32.gmra.mxu0 %v2606
          %v2608 = vpop.f32.mrf.mxu0
          %v2609 = vadd.f32 %v2415, %v2608
          %v2610 = vand.u32 %v2199, 4294901760
          %2611 = vmatmul.f32.gmra.mxu0 %v2610
          %v2612 = vpop.f32.mrf.mxu0
          %v2613 = vadd.f32 %v2423, %v2612
          %v2614 = vand.u32 %v2202, 4294901760
          %2615 = vmatmul.f32.gmra.mxu0 %v2614
          %v2616 = vpop.f32.mrf.mxu0
          %v2617 = vadd.f32 %v2431, %v2616
          %v2618 = vand.u32 %v2205, 4294901760
          %2619 = vmatmul.f32.gmra.mxu0 %v2618
          %v2620 = vpop.f32.mrf.mxu0
          %v2621 = vadd.f32 %v2439, %v2620
          %v2622 = vand.u32 %v2208, 4294901760
          %2623 = vmatmul.f32.gmra.mxu0 %v2622
          %v2624 = vpop.f32.mrf.mxu0
          %v2625 = vadd.f32 %v2447, %v2624
          %v2626 = vand.u32 %v2211, 4294901760
          %2627 = vmatmul.f32.gmra.mxu0 %v2626
          %v2628 = vpop.f32.mrf.mxu0
          %v2629 = vadd.f32 %v2455, %v2628
          %v2630 = vand.u32 %v2214, 4294901760
          %2631 = vmatmul.f32.gmra.mxu0 %v2630
          %v2632 = vpop.f32.mrf.mxu0
          %v2633 = vadd.f32 %v2463, %v2632
          %v2634 = vand.u32 %v2217, 4294901760
          %2635 = vmatmul.f32.gmra.mxu0 %v2634
          %v2636 = vpop.f32.mrf.mxu0
          %v2637 = vadd.f32 %v2471, %v2636
          %v2638 = vand.u32 %v2220, 4294901760
          %2639 = vmatmul.f32.gmra.mxu0 %v2638
          %v2640 = vpop.f32.mrf.mxu0
          %v2641 = vadd.f32 %v2479, %v2640
          %v2642 = vand.u32 %v2223, 4294901760
          %2643 = vmatmul.f32.gmra.mxu0 %v2642
          %v2644 = vpop.f32.mrf.mxu0
          %v2645 = vadd.f32 %v2487, %v2644
          %v2646 = vand.u32 %v2226, 4294901760
          %2647 = vmatmul.f32.gmra.mxu0 %v2646
          %v2648 = vpop.f32.mrf.mxu0
          %v2649 = vadd.f32 %v2495, %v2648
          %v2650 = vand.u32 %v2229, 4294901760
          %2651 = vmatmul.f32.gmra.mxu0 %v2650
          %v2652 = vpop.f32.mrf.mxu0
          %v2653 = vadd.f32 %v2503, %v2652
          %2654 = vdwg.mxu0
          %2655 = vmatpush.msra.mxu0 0.0
          %2656 = vmatpush.msra.mxu0 0.0
          %2657 = vmatpush.msra.mxu0 0.0
          %2658 = vmatpush.msra.mxu0 0.0
          %2659 = vmatpush.msra.mxu0 0.0
          %2660 = vmatpush.msra.mxu0 0.0
          %2661 = vmatpush.msra.mxu0 0.0
          %2662 = vmatpush.msra.mxu0 0.0
          %2663 = vmatpush.msra.mxu0 0.0
          %2664 = vmatpush.msra.mxu0 0.0
          %2665 = vmatpush.msra.mxu0 0.0
          %2666 = vmatpush.msra.mxu0 0.0
          %2667 = vmatpush.msra.mxu0 0.0
          %2668 = vmatpush.msra.mxu0 0.0
          %2669 = vmatpush.msra.mxu0 0.0
          %v2670 = vand.u32 %v2133, 4294901760
          %v2671 = vsub.f32 %v2133, %v2670
          %2672 = vmatpush.msra.mxu0 %v2671
          %v2673 = vand.u32 %v2136, 4294901760
          %v2674 = vsub.f32 %v2136, %v2673
          %2675 = vmatmul.f32.gmra.mxu0 %v2674
          %v2676 = vpop.f32.mrf.mxu0
          %v2677 = vadd.f32 %v2529, %v2676
          %v2678 = vand.u32 %v2139, 4294901760
          %v2679 = vsub.f32 %v2139, %v2678
          %2680 = vmatmul.f32.gmra.mxu0 %v2679
          %v2681 = vpop.f32.mrf.mxu0
          %v2682 = vadd.f32 %v2533, %v2681
          %v2683 = vand.u32 %v2142, 4294901760
          %v2684 = vsub.f32 %v2142, %v2683
          %2685 = vmatmul.f32.gmra.mxu0 %v2684
          %v2686 = vpop.f32.mrf.mxu0
          %v2687 = vadd.f32 %v2537, %v2686
          %v2688 = vand.u32 %v2145, 4294901760
          %v2689 = vsub.f32 %v2145, %v2688
          %2690 = vmatmul.f32.gmra.mxu0 %v2689
          %v2691 = vpop.f32.mrf.mxu0
          %v2692 = vadd.f32 %v2541, %v2691
          %v2693 = vand.u32 %v2148, 4294901760
          %v2694 = vsub.f32 %v2148, %v2693
          %2695 = vmatmul.f32.gmra.mxu0 %v2694
          %v2696 = vpop.f32.mrf.mxu0
          %v2697 = vadd.f32 %v2545, %v2696
          %v2698 = vand.u32 %v2151, 4294901760
          %v2699 = vsub.f32 %v2151, %v2698
          %2700 = vmatmul.f32.gmra.mxu0 %v2699
          %v2701 = vpop.f32.mrf.mxu0
          %v2702 = vadd.f32 %v2549, %v2701
          %v2703 = vand.u32 %v2154, 4294901760
          %v2704 = vsub.f32 %v2154, %v2703
          %2705 = vmatmul.f32.gmra.mxu0 %v2704
          %v2706 = vpop.f32.mrf.mxu0
          %v2707 = vadd.f32 %v2553, %v2706
          %v2708 = vand.u32 %v2157, 4294901760
          %v2709 = vsub.f32 %v2157, %v2708
          %2710 = vmatmul.f32.gmra.mxu0 %v2709
          %v2711 = vpop.f32.mrf.mxu0
          %v2712 = vadd.f32 %v2557, %v2711
          %v2713 = vand.u32 %v2160, 4294901760
          %v2714 = vsub.f32 %v2160, %v2713
          %2715 = vmatmul.f32.gmra.mxu0 %v2714
          %v2716 = vpop.f32.mrf.mxu0
          %v2717 = vadd.f32 %v2561, %v2716
          %v2718 = vand.u32 %v2163, 4294901760
          %v2719 = vsub.f32 %v2163, %v2718
          %2720 = vmatmul.f32.gmra.mxu0 %v2719
          %v2721 = vpop.f32.mrf.mxu0
          %v2722 = vadd.f32 %v2565, %v2721
          %v2723 = vand.u32 %v2166, 4294901760
          %v2724 = vsub.f32 %v2166, %v2723
          %2725 = vmatmul.f32.gmra.mxu0 %v2724
          %v2726 = vpop.f32.mrf.mxu0
          %v2727 = vadd.f32 %v2569, %v2726
          %v2728 = vand.u32 %v2169, 4294901760
          %v2729 = vsub.f32 %v2169, %v2728
          %2730 = vmatmul.f32.gmra.mxu0 %v2729
          %v2731 = vpop.f32.mrf.mxu0
          %v2732 = vadd.f32 %v2573, %v2731
          %v2733 = vand.u32 %v2172, 4294901760
          %v2734 = vsub.f32 %v2172, %v2733
          %2735 = vmatmul.f32.gmra.mxu0 %v2734
          %v2736 = vpop.f32.mrf.mxu0
          %v2737 = vadd.f32 %v2577, %v2736
          %v2738 = vand.u32 %v2175, 4294901760
          %v2739 = vsub.f32 %v2175, %v2738
          %2740 = vmatmul.f32.gmra.mxu0 %v2739
          %v2741 = vpop.f32.mrf.mxu0
          %v2742 = vadd.f32 %v2581, %v2741
          %v2743 = vand.u32 %v2178, 4294901760
          %v2744 = vsub.f32 %v2178, %v2743
          %2745 = vmatmul.f32.gmra.mxu0 %v2744
          %v2746 = vpop.f32.mrf.mxu0
          %v2747 = vadd.f32 %v2585, %v2746
          %v2748 = vand.u32 %v2181, 4294901760
          %v2749 = vsub.f32 %v2181, %v2748
          %2750 = vmatmul.f32.gmra.mxu0 %v2749
          %v2751 = vpop.f32.mrf.mxu0
          %v2752 = vadd.f32 %v2589, %v2751
          %v2753 = vand.u32 %v2184, 4294901760
          %v2754 = vsub.f32 %v2184, %v2753
          %2755 = vmatmul.f32.gmra.mxu0 %v2754
          %v2756 = vpop.f32.mrf.mxu0
          %v2757 = vadd.f32 %v2593, %v2756
          %v2758 = vand.u32 %v2187, 4294901760
          %v2759 = vsub.f32 %v2187, %v2758
          %2760 = vmatmul.f32.gmra.mxu0 %v2759
          %v2761 = vpop.f32.mrf.mxu0
          %v2762 = vadd.f32 %v2597, %v2761
          %v2763 = vand.u32 %v2190, 4294901760
          %v2764 = vsub.f32 %v2190, %v2763
          %2765 = vmatmul.f32.gmra.mxu0 %v2764
          %v2766 = vpop.f32.mrf.mxu0
          %v2767 = vadd.f32 %v2601, %v2766
          %v2768 = vand.u32 %v2193, 4294901760
          %v2769 = vsub.f32 %v2193, %v2768
          %2770 = vmatmul.f32.gmra.mxu0 %v2769
          %v2771 = vpop.f32.mrf.mxu0
          %v2772 = vadd.f32 %v2605, %v2771
          %v2773 = vand.u32 %v2196, 4294901760
          %v2774 = vsub.f32 %v2196, %v2773
          %2775 = vmatmul.f32.gmra.mxu0 %v2774
          %v2776 = vpop.f32.mrf.mxu0
          %v2777 = vadd.f32 %v2609, %v2776
          %v2778 = vand.u32 %v2199, 4294901760
          %v2779 = vsub.f32 %v2199, %v2778
          %2780 = vmatmul.f32.gmra.mxu0 %v2779
          %v2781 = vpop.f32.mrf.mxu0
          %v2782 = vadd.f32 %v2613, %v2781
          %v2783 = vand.u32 %v2202, 4294901760
          %v2784 = vsub.f32 %v2202, %v2783
          %2785 = vmatmul.f32.gmra.mxu0 %v2784
          %v2786 = vpop.f32.mrf.mxu0
          %v2787 = vadd.f32 %v2617, %v2786
          %v2788 = vand.u32 %v2205, 4294901760
          %v2789 = vsub.f32 %v2205, %v2788
          %2790 = vmatmul.f32.gmra.mxu0 %v2789
          %v2791 = vpop.f32.mrf.mxu0
          %v2792 = vadd.f32 %v2621, %v2791
          %v2793 = vand.u32 %v2208, 4294901760
          %v2794 = vsub.f32 %v2208, %v2793
          %2795 = vmatmul.f32.gmra.mxu0 %v2794
          %v2796 = vpop.f32.mrf.mxu0
          %v2797 = vadd.f32 %v2625, %v2796
          %v2798 = vand.u32 %v2211, 4294901760
          %v2799 = vsub.f32 %v2211, %v2798
          %2800 = vmatmul.f32.gmra.mxu0 %v2799
          %v2801 = vpop.f32.mrf.mxu0
          %v2802 = vadd.f32 %v2629, %v2801
          %v2803 = vand.u32 %v2214, 4294901760
          %v2804 = vsub.f32 %v2214, %v2803
          %2805 = vmatmul.f32.gmra.mxu0 %v2804
          %v2806 = vpop.f32.mrf.mxu0
          %v2807 = vadd.f32 %v2633, %v2806
          %v2808 = vand.u32 %v2217, 4294901760
          %v2809 = vsub.f32 %v2217, %v2808
          %2810 = vmatmul.f32.gmra.mxu0 %v2809
          %v2811 = vpop.f32.mrf.mxu0
          %v2812 = vadd.f32 %v2637, %v2811
          %v2813 = vand.u32 %v2220, 4294901760
          %v2814 = vsub.f32 %v2220, %v2813
          %2815 = vmatmul.f32.gmra.mxu0 %v2814
          %v2816 = vpop.f32.mrf.mxu0
          %v2817 = vadd.f32 %v2641, %v2816
          %v2818 = vand.u32 %v2223, 4294901760
          %v2819 = vsub.f32 %v2223, %v2818
          %2820 = vmatmul.f32.gmra.mxu0 %v2819
          %v2821 = vpop.f32.mrf.mxu0
          %v2822 = vadd.f32 %v2645, %v2821
          %v2823 = vand.u32 %v2226, 4294901760
          %v2824 = vsub.f32 %v2226, %v2823
          %2825 = vmatmul.f32.gmra.mxu0 %v2824
          %v2826 = vpop.f32.mrf.mxu0
          %v2827 = vadd.f32 %v2649, %v2826
          %v2828 = vand.u32 %v2229, 4294901760
          %v2829 = vsub.f32 %v2229, %v2828
          %2830 = vmatmul.f32.gmra.mxu0 %v2829
          %v2831 = vpop.f32.mrf.mxu0
          %v2832 = vadd.f32 %v2653, %v2831
          %2833 = vdwg.mxu0
          %2834 = vmatpush.msra.mxu0 0.0
          %2835 = vmatpush.msra.mxu0 0.0
          %2836 = vmatpush.msra.mxu0 0.0
          %2837 = vmatpush.msra.mxu0 0.0
          %2838 = vmatpush.msra.mxu0 0.0
          %2839 = vmatpush.msra.mxu0 0.0
          %2840 = vmatpush.msra.mxu0 0.0
          %2841 = vmatpush.msra.mxu0 0.0
          %2842 = vmatpush.msra.mxu0 0.0
          %2843 = vmatpush.msra.mxu0 0.0
          %2844 = vmatpush.msra.mxu0 0.0
          %2845 = vmatpush.msra.mxu0 0.0
          %2846 = vmatpush.msra.mxu0 0.0
          %2847 = vmatpush.msra.mxu0 0.0
          %2848 = vmatpush.msra.mxu0 0.0
          %v2849 = vand.u32 %v2133, 4294901760
          %2850 = vmatpush.msra.mxu0 %v2849
          %v2851 = vand.u32 %v2136, 4294901760
          %v2852 = vsub.f32 %v2136, %v2851
          %v2853 = vand.u32 %v2852, 4294901760
          %2854 = vmatmul.f32.gmra.mxu0 %v2853
          %v2855 = vpop.f32.mrf.mxu0
          %v2856 = vadd.f32 %v2677, %v2855
          %v2857 = vand.u32 %v2139, 4294901760
          %v2858 = vsub.f32 %v2139, %v2857
          %v2859 = vand.u32 %v2858, 4294901760
          %2860 = vmatmul.f32.gmra.mxu0 %v2859
          %v2861 = vpop.f32.mrf.mxu0
          %v2862 = vadd.f32 %v2682, %v2861
          %v2863 = vand.u32 %v2142, 4294901760
          %v2864 = vsub.f32 %v2142, %v2863
          %v2865 = vand.u32 %v2864, 4294901760
          %2866 = vmatmul.f32.gmra.mxu0 %v2865
          %v2867 = vpop.f32.mrf.mxu0
          %v2868 = vadd.f32 %v2687, %v2867
          %v2869 = vand.u32 %v2145, 4294901760
          %v2870 = vsub.f32 %v2145, %v2869
          %v2871 = vand.u32 %v2870, 4294901760
          %2872 = vmatmul.f32.gmra.mxu0 %v2871
          %v2873 = vpop.f32.mrf.mxu0
          %v2874 = vadd.f32 %v2692, %v2873
          %v2875 = vand.u32 %v2148, 4294901760
          %v2876 = vsub.f32 %v2148, %v2875
          %v2877 = vand.u32 %v2876, 4294901760
          %2878 = vmatmul.f32.gmra.mxu0 %v2877
          %v2879 = vpop.f32.mrf.mxu0
          %v2880 = vadd.f32 %v2697, %v2879
          %v2881 = vand.u32 %v2151, 4294901760
          %v2882 = vsub.f32 %v2151, %v2881
          %v2883 = vand.u32 %v2882, 4294901760
          %2884 = vmatmul.f32.gmra.mxu0 %v2883
          %v2885 = vpop.f32.mrf.mxu0
          %v2886 = vadd.f32 %v2702, %v2885
          %v2887 = vand.u32 %v2154, 4294901760
          %v2888 = vsub.f32 %v2154, %v2887
          %v2889 = vand.u32 %v2888, 4294901760
          %2890 = vmatmul.f32.gmra.mxu0 %v2889
          %v2891 = vpop.f32.mrf.mxu0
          %v2892 = vadd.f32 %v2707, %v2891
          %v2893 = vand.u32 %v2157, 4294901760
          %v2894 = vsub.f32 %v2157, %v2893
          %v2895 = vand.u32 %v2894, 4294901760
          %2896 = vmatmul.f32.gmra.mxu0 %v2895
          %v2897 = vpop.f32.mrf.mxu0
          %v2898 = vadd.f32 %v2712, %v2897
          %v2899 = vand.u32 %v2160, 4294901760
          %v2900 = vsub.f32 %v2160, %v2899
          %v2901 = vand.u32 %v2900, 4294901760
          %2902 = vmatmul.f32.gmra.mxu0 %v2901
          %v2903 = vpop.f32.mrf.mxu0
          %v2904 = vadd.f32 %v2717, %v2903
          %v2905 = vand.u32 %v2163, 4294901760
          %v2906 = vsub.f32 %v2163, %v2905
          %v2907 = vand.u32 %v2906, 4294901760
          %2908 = vmatmul.f32.gmra.mxu0 %v2907
          %v2909 = vpop.f32.mrf.mxu0
          %v2910 = vadd.f32 %v2722, %v2909
          %v2911 = vand.u32 %v2166, 4294901760
          %v2912 = vsub.f32 %v2166, %v2911
          %v2913 = vand.u32 %v2912, 4294901760
          %2914 = vmatmul.f32.gmra.mxu0 %v2913
          %v2915 = vpop.f32.mrf.mxu0
          %v2916 = vadd.f32 %v2727, %v2915
          %v2917 = vand.u32 %v2169, 4294901760
          %v2918 = vsub.f32 %v2169, %v2917
          %v2919 = vand.u32 %v2918, 4294901760
          %2920 = vmatmul.f32.gmra.mxu0 %v2919
          %v2921 = vpop.f32.mrf.mxu0
          %v2922 = vadd.f32 %v2732, %v2921
          %v2923 = vand.u32 %v2172, 4294901760
          %v2924 = vsub.f32 %v2172, %v2923
          %v2925 = vand.u32 %v2924, 4294901760
          %2926 = vmatmul.f32.gmra.mxu0 %v2925
          %v2927 = vpop.f32.mrf.mxu0
          %v2928 = vadd.f32 %v2737, %v2927
          %v2929 = vand.u32 %v2175, 4294901760
          %v2930 = vsub.f32 %v2175, %v2929
          %v2931 = vand.u32 %v2930, 4294901760
          %2932 = vmatmul.f32.gmra.mxu0 %v2931
          %v2933 = vpop.f32.mrf.mxu0
          %v2934 = vadd.f32 %v2742, %v2933
          %v2935 = vand.u32 %v2178, 4294901760
          %v2936 = vsub.f32 %v2178, %v2935
          %v2937 = vand.u32 %v2936, 4294901760
          %2938 = vmatmul.f32.gmra.mxu0 %v2937
          %v2939 = vpop.f32.mrf.mxu0
          %v2940 = vadd.f32 %v2747, %v2939
          %v2941 = vand.u32 %v2181, 4294901760
          %v2942 = vsub.f32 %v2181, %v2941
          %v2943 = vand.u32 %v2942, 4294901760
          %2944 = vmatmul.f32.gmra.mxu0 %v2943
          %v2945 = vpop.f32.mrf.mxu0
          %v2946 = vadd.f32 %v2752, %v2945
          %v2947 = vand.u32 %v2184, 4294901760
          %v2948 = vsub.f32 %v2184, %v2947
          %v2949 = vand.u32 %v2948, 4294901760
          %2950 = vmatmul.f32.gmra.mxu0 %v2949
          %v2951 = vpop.f32.mrf.mxu0
          %v2952 = vadd.f32 %v2757, %v2951
          %v2953 = vand.u32 %v2187, 4294901760
          %v2954 = vsub.f32 %v2187, %v2953
          %v2955 = vand.u32 %v2954, 4294901760
          %2956 = vmatmul.f32.gmra.mxu0 %v2955
          %v2957 = vpop.f32.mrf.mxu0
          %v2958 = vadd.f32 %v2762, %v2957
          %v2959 = vand.u32 %v2190, 4294901760
          %v2960 = vsub.f32 %v2190, %v2959
          %v2961 = vand.u32 %v2960, 4294901760
          %2962 = vmatmul.f32.gmra.mxu0 %v2961
          %v2963 = vpop.f32.mrf.mxu0
          %v2964 = vadd.f32 %v2767, %v2963
          %v2965 = vand.u32 %v2193, 4294901760
          %v2966 = vsub.f32 %v2193, %v2965
          %v2967 = vand.u32 %v2966, 4294901760
          %2968 = vmatmul.f32.gmra.mxu0 %v2967
          %v2969 = vpop.f32.mrf.mxu0
          %v2970 = vadd.f32 %v2772, %v2969
          %v2971 = vand.u32 %v2196, 4294901760
          %v2972 = vsub.f32 %v2196, %v2971
          %v2973 = vand.u32 %v2972, 4294901760
          %2974 = vmatmul.f32.gmra.mxu0 %v2973
          %v2975 = vpop.f32.mrf.mxu0
          %v2976 = vadd.f32 %v2777, %v2975
          %v2977 = vand.u32 %v2199, 4294901760
          %v2978 = vsub.f32 %v2199, %v2977
          %v2979 = vand.u32 %v2978, 4294901760
          %2980 = vmatmul.f32.gmra.mxu0 %v2979
          %v2981 = vpop.f32.mrf.mxu0
          %v2982 = vadd.f32 %v2782, %v2981
          %v2983 = vand.u32 %v2202, 4294901760
          %v2984 = vsub.f32 %v2202, %v2983
          %v2985 = vand.u32 %v2984, 4294901760
          %2986 = vmatmul.f32.gmra.mxu0 %v2985
          %v2987 = vpop.f32.mrf.mxu0
          %v2988 = vadd.f32 %v2787, %v2987
          %v2989 = vand.u32 %v2205, 4294901760
          %v2990 = vsub.f32 %v2205, %v2989
          %v2991 = vand.u32 %v2990, 4294901760
          %2992 = vmatmul.f32.gmra.mxu0 %v2991
          %v2993 = vpop.f32.mrf.mxu0
          %v2994 = vadd.f32 %v2792, %v2993
          %v2995 = vand.u32 %v2208, 4294901760
          %v2996 = vsub.f32 %v2208, %v2995
          %v2997 = vand.u32 %v2996, 4294901760
          %2998 = vmatmul.f32.gmra.mxu0 %v2997
          %v2999 = vpop.f32.mrf.mxu0
          %v3000 = vadd.f32 %v2797, %v2999
          %v3001 = vand.u32 %v2211, 4294901760
          %v3002 = vsub.f32 %v2211, %v3001
          %v3003 = vand.u32 %v3002, 4294901760
          %3004 = vmatmul.f32.gmra.mxu0 %v3003
          %v3005 = vpop.f32.mrf.mxu0
          %v3006 = vadd.f32 %v2802, %v3005
          %v3007 = vand.u32 %v2214, 4294901760
          %v3008 = vsub.f32 %v2214, %v3007
          %v3009 = vand.u32 %v3008, 4294901760
          %3010 = vmatmul.f32.gmra.mxu0 %v3009
          %v3011 = vpop.f32.mrf.mxu0
          %v3012 = vadd.f32 %v2807, %v3011
          %v3013 = vand.u32 %v2217, 4294901760
          %v3014 = vsub.f32 %v2217, %v3013
          %v3015 = vand.u32 %v3014, 4294901760
          %3016 = vmatmul.f32.gmra.mxu0 %v3015
          %v3017 = vpop.f32.mrf.mxu0
          %v3018 = vadd.f32 %v2812, %v3017
          %v3019 = vand.u32 %v2220, 4294901760
          %v3020 = vsub.f32 %v2220, %v3019
          %v3021 = vand.u32 %v3020, 4294901760
          %3022 = vmatmul.f32.gmra.mxu0 %v3021
          %v3023 = vpop.f32.mrf.mxu0
          %v3024 = vadd.f32 %v2817, %v3023
          %v3025 = vand.u32 %v2223, 4294901760
          %v3026 = vsub.f32 %v2223, %v3025
          %v3027 = vand.u32 %v3026, 4294901760
          %3028 = vmatmul.f32.gmra.mxu0 %v3027
          %v3029 = vpop.f32.mrf.mxu0
          %v3030 = vadd.f32 %v2822, %v3029
          %v3031 = vand.u32 %v2226, 4294901760
          %v3032 = vsub.f32 %v2226, %v3031
          %v3033 = vand.u32 %v3032, 4294901760
          %3034 = vmatmul.f32.gmra.mxu0 %v3033
          %v3035 = vpop.f32.mrf.mxu0
          %v3036 = vadd.f32 %v2827, %v3035
          %v3037 = vand.u32 %v2229, 4294901760
          %v3038 = vsub.f32 %v2229, %v3037
          %v3039 = vand.u32 %v3038, 4294901760
          %3040 = vmatmul.f32.gmra.mxu0 %v3039
          %v3041 = vpop.f32.mrf.mxu0
          %v3042 = vadd.f32 %v2832, %v3041
          %3043 = vdwg.mxu0
          %3044 = vmatpush.msra.mxu0 0.0
          %3045 = vmatpush.msra.mxu0 0.0
          %3046 = vmatpush.msra.mxu0 0.0
          %3047 = vmatpush.msra.mxu0 0.0
          %3048 = vmatpush.msra.mxu0 0.0
          %3049 = vmatpush.msra.mxu0 0.0
          %3050 = vmatpush.msra.mxu0 0.0
          %3051 = vmatpush.msra.mxu0 0.0
          %3052 = vmatpush.msra.mxu0 0.0
          %3053 = vmatpush.msra.mxu0 0.0
          %3054 = vmatpush.msra.mxu0 0.0
          %3055 = vmatpush.msra.mxu0 0.0
          %3056 = vmatpush.msra.mxu0 0.0
          %3057 = vmatpush.msra.mxu0 0.0
          %3058 = vmatpush.msra.mxu0 0.0
          %v3059 = vand.u32 %v2133, 4294901760
          %v3060 = vsub.f32 %v2133, %v3059
          %v3061 = vand.u32 %v3060, 4294901760
          %3062 = vmatpush.msra.mxu0 %v3061
          %v3063 = vand.u32 %v2136, 4294901760
          %3064 = vmatmul.f32.gmra.mxu0 %v3063
          %v3065 = vpop.f32.mrf.mxu0
          %v3066 = vadd.f32 %v2856, %v3065
          %v3067 = vand.u32 %v2139, 4294901760
          %3068 = vmatmul.f32.gmra.mxu0 %v3067
          %v3069 = vpop.f32.mrf.mxu0
          %v3070 = vadd.f32 %v2862, %v3069
          %v3071 = vand.u32 %v2142, 4294901760
          %3072 = vmatmul.f32.gmra.mxu0 %v3071
          %v3073 = vpop.f32.mrf.mxu0
          %v3074 = vadd.f32 %v2868, %v3073
          %v3075 = vand.u32 %v2145, 4294901760
          %3076 = vmatmul.f32.gmra.mxu0 %v3075
          %v3077 = vpop.f32.mrf.mxu0
          %v3078 = vadd.f32 %v2874, %v3077
          %v3079 = vand.u32 %v2148, 4294901760
          %3080 = vmatmul.f32.gmra.mxu0 %v3079
          %v3081 = vpop.f32.mrf.mxu0
          %v3082 = vadd.f32 %v2880, %v3081
          %v3083 = vand.u32 %v2151, 4294901760
          %3084 = vmatmul.f32.gmra.mxu0 %v3083
          %v3085 = vpop.f32.mrf.mxu0
          %v3086 = vadd.f32 %v2886, %v3085
          %v3087 = vand.u32 %v2154, 4294901760
          %3088 = vmatmul.f32.gmra.mxu0 %v3087
          %v3089 = vpop.f32.mrf.mxu0
          %v3090 = vadd.f32 %v2892, %v3089
          %v3091 = vand.u32 %v2157, 4294901760
          %3092 = vmatmul.f32.gmra.mxu0 %v3091
          %v3093 = vpop.f32.mrf.mxu0
          %v3094 = vadd.f32 %v2898, %v3093
          %v3095 = vand.u32 %v2160, 4294901760
          %3096 = vmatmul.f32.gmra.mxu0 %v3095
          %v3097 = vpop.f32.mrf.mxu0
          %v3098 = vadd.f32 %v2904, %v3097
          %v3099 = vand.u32 %v2163, 4294901760
          %3100 = vmatmul.f32.gmra.mxu0 %v3099
          %v3101 = vpop.f32.mrf.mxu0
          %v3102 = vadd.f32 %v2910, %v3101
          %v3103 = vand.u32 %v2166, 4294901760
          %3104 = vmatmul.f32.gmra.mxu0 %v3103
          %v3105 = vpop.f32.mrf.mxu0
          %v3106 = vadd.f32 %v2916, %v3105
          %v3107 = vand.u32 %v2169, 4294901760
          %3108 = vmatmul.f32.gmra.mxu0 %v3107
          %v3109 = vpop.f32.mrf.mxu0
          %v3110 = vadd.f32 %v2922, %v3109
          %v3111 = vand.u32 %v2172, 4294901760
          %3112 = vmatmul.f32.gmra.mxu0 %v3111
          %v3113 = vpop.f32.mrf.mxu0
          %v3114 = vadd.f32 %v2928, %v3113
          %v3115 = vand.u32 %v2175, 4294901760
          %3116 = vmatmul.f32.gmra.mxu0 %v3115
          %v3117 = vpop.f32.mrf.mxu0
          %v3118 = vadd.f32 %v2934, %v3117
          %v3119 = vand.u32 %v2178, 4294901760
          %3120 = vmatmul.f32.gmra.mxu0 %v3119
          %v3121 = vpop.f32.mrf.mxu0
          %v3122 = vadd.f32 %v2940, %v3121
          %v3123 = vand.u32 %v2181, 4294901760
          %3124 = vmatmul.f32.gmra.mxu0 %v3123
          %v3125 = vpop.f32.mrf.mxu0
          %v3126 = vadd.f32 %v2946, %v3125
          %v3127 = vand.u32 %v2184, 4294901760
          %3128 = vmatmul.f32.gmra.mxu0 %v3127
          %v3129 = vpop.f32.mrf.mxu0
          %v3130 = vadd.f32 %v2952, %v3129
          %v3131 = vand.u32 %v2187, 4294901760
          %3132 = vmatmul.f32.gmra.mxu0 %v3131
          %v3133 = vpop.f32.mrf.mxu0
          %v3134 = vadd.f32 %v2958, %v3133
          %v3135 = vand.u32 %v2190, 4294901760
          %3136 = vmatmul.f32.gmra.mxu0 %v3135
          %v3137 = vpop.f32.mrf.mxu0
          %v3138 = vadd.f32 %v2964, %v3137
          %v3139 = vand.u32 %v2193, 4294901760
          %3140 = vmatmul.f32.gmra.mxu0 %v3139
          %v3141 = vpop.f32.mrf.mxu0
          %v3142 = vadd.f32 %v2970, %v3141
          %v3143 = vand.u32 %v2196, 4294901760
          %3144 = vmatmul.f32.gmra.mxu0 %v3143
          %v3145 = vpop.f32.mrf.mxu0
          %v3146 = vadd.f32 %v2976, %v3145
          %v3147 = vand.u32 %v2199, 4294901760
          %3148 = vmatmul.f32.gmra.mxu0 %v3147
          %v3149 = vpop.f32.mrf.mxu0
          %v3150 = vadd.f32 %v2982, %v3149
          %v3151 = vand.u32 %v2202, 4294901760
          %3152 = vmatmul.f32.gmra.mxu0 %v3151
          %v3153 = vpop.f32.mrf.mxu0
          %v3154 = vadd.f32 %v2988, %v3153
          %v3155 = vand.u32 %v2205, 4294901760
          %3156 = vmatmul.f32.gmra.mxu0 %v3155
          %v3157 = vpop.f32.mrf.mxu0
          %v3158 = vadd.f32 %v2994, %v3157
          %v3159 = vand.u32 %v2208, 4294901760
          %3160 = vmatmul.f32.gmra.mxu0 %v3159
          %v3161 = vpop.f32.mrf.mxu0
          %v3162 = vadd.f32 %v3000, %v3161
          %v3163 = vand.u32 %v2211, 4294901760
          %3164 = vmatmul.f32.gmra.mxu0 %v3163
          %v3165 = vpop.f32.mrf.mxu0
          %v3166 = vadd.f32 %v3006, %v3165
          %v3167 = vand.u32 %v2214, 4294901760
          %3168 = vmatmul.f32.gmra.mxu0 %v3167
          %v3169 = vpop.f32.mrf.mxu0
          %v3170 = vadd.f32 %v3012, %v3169
          %v3171 = vand.u32 %v2217, 4294901760
          %3172 = vmatmul.f32.gmra.mxu0 %v3171
          %v3173 = vpop.f32.mrf.mxu0
          %v3174 = vadd.f32 %v3018, %v3173
          %v3175 = vand.u32 %v2220, 4294901760
          %3176 = vmatmul.f32.gmra.mxu0 %v3175
          %v3177 = vpop.f32.mrf.mxu0
          %v3178 = vadd.f32 %v3024, %v3177
          %v3179 = vand.u32 %v2223, 4294901760
          %3180 = vmatmul.f32.gmra.mxu0 %v3179
          %v3181 = vpop.f32.mrf.mxu0
          %v3182 = vadd.f32 %v3030, %v3181
          %v3183 = vand.u32 %v2226, 4294901760
          %3184 = vmatmul.f32.gmra.mxu0 %v3183
          %v3185 = vpop.f32.mrf.mxu0
          %v3186 = vadd.f32 %v3036, %v3185
          %v3187 = vand.u32 %v2229, 4294901760
          %3188 = vmatmul.f32.gmra.mxu0 %v3187
          %v3189 = vpop.f32.mrf.mxu0
          %v3190 = vadd.f32 %v3042, %v3189
          %3191 = vdwg.mxu0
          %3192 = vmatpush.msra.mxu0 0.0
          %3193 = vmatpush.msra.mxu0 0.0
          %3194 = vmatpush.msra.mxu0 0.0
          %3195 = vmatpush.msra.mxu0 0.0
          %3196 = vmatpush.msra.mxu0 0.0
          %3197 = vmatpush.msra.mxu0 0.0
          %3198 = vmatpush.msra.mxu0 0.0
          %3199 = vmatpush.msra.mxu0 0.0
          %3200 = vmatpush.msra.mxu0 0.0
          %3201 = vmatpush.msra.mxu0 0.0
          %3202 = vmatpush.msra.mxu0 0.0
          %3203 = vmatpush.msra.mxu0 0.0
          %3204 = vmatpush.msra.mxu0 0.0
          %3205 = vmatpush.msra.mxu0 0.0
          %3206 = vmatpush.msra.mxu0 0.0
          %v3207 = vand.u32 %v2133, 4294901760
          %3208 = vmatpush.msra.mxu0 %v3207
          %v3209 = vand.u32 %v2136, 4294901760
          %3210 = vmatmul.f32.gmra.mxu0 %v3209
          %v3211 = vpop.f32.mrf.mxu0
          %v3212 = vadd.f32 %v3066, %v3211
          %v3213 = vand.u32 %v2139, 4294901760
          %3214 = vmatmul.f32.gmra.mxu0 %v3213
          %v3215 = vpop.f32.mrf.mxu0
          %v3216 = vadd.f32 %v3070, %v3215
          %v3217 = vand.u32 %v2142, 4294901760
          %3218 = vmatmul.f32.gmra.mxu0 %v3217
          %v3219 = vpop.f32.mrf.mxu0
          %v3220 = vadd.f32 %v3074, %v3219
          %v3221 = vand.u32 %v2145, 4294901760
          %3222 = vmatmul.f32.gmra.mxu0 %v3221
          %v3223 = vpop.f32.mrf.mxu0
          %v3224 = vadd.f32 %v3078, %v3223
          %v3225 = vand.u32 %v2148, 4294901760
          %3226 = vmatmul.f32.gmra.mxu0 %v3225
          %v3227 = vpop.f32.mrf.mxu0
          %v3228 = vadd.f32 %v3082, %v3227
          %v3229 = vand.u32 %v2151, 4294901760
          %3230 = vmatmul.f32.gmra.mxu0 %v3229
          %v3231 = vpop.f32.mrf.mxu0
          %v3232 = vadd.f32 %v3086, %v3231
          %v3233 = vand.u32 %v2154, 4294901760
          %3234 = vmatmul.f32.gmra.mxu0 %v3233
          %v3235 = vpop.f32.mrf.mxu0
          %v3236 = vadd.f32 %v3090, %v3235
          %v3237 = vand.u32 %v2157, 4294901760
          %3238 = vmatmul.f32.gmra.mxu0 %v3237
          %v3239 = vpop.f32.mrf.mxu0
          %v3240 = vadd.f32 %v3094, %v3239
          %v3241 = vand.u32 %v2160, 4294901760
          %3242 = vmatmul.f32.gmra.mxu0 %v3241
          %v3243 = vpop.f32.mrf.mxu0
          %v3244 = vadd.f32 %v3098, %v3243
          %v3245 = vand.u32 %v2163, 4294901760
          %3246 = vmatmul.f32.gmra.mxu0 %v3245
          %v3247 = vpop.f32.mrf.mxu0
          %v3248 = vadd.f32 %v3102, %v3247
          %v3249 = vand.u32 %v2166, 4294901760
          %3250 = vmatmul.f32.gmra.mxu0 %v3249
          %v3251 = vpop.f32.mrf.mxu0
          %v3252 = vadd.f32 %v3106, %v3251
          %v3253 = vand.u32 %v2169, 4294901760
          %3254 = vmatmul.f32.gmra.mxu0 %v3253
          %v3255 = vpop.f32.mrf.mxu0
          %v3256 = vadd.f32 %v3110, %v3255
          %v3257 = vand.u32 %v2172, 4294901760
          %3258 = vmatmul.f32.gmra.mxu0 %v3257
          %v3259 = vpop.f32.mrf.mxu0
          %v3260 = vadd.f32 %v3114, %v3259
          %v3261 = vand.u32 %v2175, 4294901760
          %3262 = vmatmul.f32.gmra.mxu0 %v3261
          %v3263 = vpop.f32.mrf.mxu0
          %v3264 = vadd.f32 %v3118, %v3263
          %v3265 = vand.u32 %v2178, 4294901760
          %3266 = vmatmul.f32.gmra.mxu0 %v3265
          %v3267 = vpop.f32.mrf.mxu0
          %v3268 = vadd.f32 %v3122, %v3267
          %v3269 = vand.u32 %v2181, 4294901760
          %3270 = vmatmul.f32.gmra.mxu0 %v3269
          %v3271 = vpop.f32.mrf.mxu0
          %v3272 = vadd.f32 %v3126, %v3271
          %v3273 = vand.u32 %v2184, 4294901760
          %3274 = vmatmul.f32.gmra.mxu0 %v3273
          %v3275 = vpop.f32.mrf.mxu0
          %v3276 = vadd.f32 %v3130, %v3275
          %v3277 = vand.u32 %v2187, 4294901760
          %3278 = vmatmul.f32.gmra.mxu0 %v3277
          %v3279 = vpop.f32.mrf.mxu0
          %v3280 = vadd.f32 %v3134, %v3279
          %v3281 = vand.u32 %v2190, 4294901760
          %3282 = vmatmul.f32.gmra.mxu0 %v3281
          %v3283 = vpop.f32.mrf.mxu0
          %v3284 = vadd.f32 %v3138, %v3283
          %v3285 = vand.u32 %v2193, 4294901760
          %3286 = vmatmul.f32.gmra.mxu0 %v3285
          %v3287 = vpop.f32.mrf.mxu0
          %v3288 = vadd.f32 %v3142, %v3287
          %v3289 = vand.u32 %v2196, 4294901760
          %3290 = vmatmul.f32.gmra.mxu0 %v3289
          %v3291 = vpop.f32.mrf.mxu0
          %v3292 = vadd.f32 %v3146, %v3291
          %v3293 = vand.u32 %v2199, 4294901760
          %3294 = vmatmul.f32.gmra.mxu0 %v3293
          %v3295 = vpop.f32.mrf.mxu0
          %v3296 = vadd.f32 %v3150, %v3295
          %v3297 = vand.u32 %v2202, 4294901760
          %3298 = vmatmul.f32.gmra.mxu0 %v3297
          %v3299 = vpop.f32.mrf.mxu0
          %v3300 = vadd.f32 %v3154, %v3299
          %v3301 = vand.u32 %v2205, 4294901760
          %3302 = vmatmul.f32.gmra.mxu0 %v3301
          %v3303 = vpop.f32.mrf.mxu0
          %v3304 = vadd.f32 %v3158, %v3303
          %v3305 = vand.u32 %v2208, 4294901760
          %3306 = vmatmul.f32.gmra.mxu0 %v3305
          %v3307 = vpop.f32.mrf.mxu0
          %v3308 = vadd.f32 %v3162, %v3307
          %v3309 = vand.u32 %v2211, 4294901760
          %3310 = vmatmul.f32.gmra.mxu0 %v3309
          %v3311 = vpop.f32.mrf.mxu0
          %v3312 = vadd.f32 %v3166, %v3311
          %v3313 = vand.u32 %v2214, 4294901760
          %3314 = vmatmul.f32.gmra.mxu0 %v3313
          %v3315 = vpop.f32.mrf.mxu0
          %v3316 = vadd.f32 %v3170, %v3315
          %v3317 = vand.u32 %v2217, 4294901760
          %3318 = vmatmul.f32.gmra.mxu0 %v3317
          %v3319 = vpop.f32.mrf.mxu0
          %v3320 = vadd.f32 %v3174, %v3319
          %v3321 = vand.u32 %v2220, 4294901760
          %3322 = vmatmul.f32.gmra.mxu0 %v3321
          %v3323 = vpop.f32.mrf.mxu0
          %v3324 = vadd.f32 %v3178, %v3323
          %v3325 = vand.u32 %v2223, 4294901760
          %3326 = vmatmul.f32.gmra.mxu0 %v3325
          %v3327 = vpop.f32.mrf.mxu0
          %v3328 = vadd.f32 %v3182, %v3327
          %v3329 = vand.u32 %v2226, 4294901760
          %3330 = vmatmul.f32.gmra.mxu0 %v3329
          %v3331 = vpop.f32.mrf.mxu0
          %v3332 = vadd.f32 %v3186, %v3331
          %v3333 = vand.u32 %v2229, 4294901760
          %3334 = vmatmul.f32.gmra.mxu0 %v3333
          %v3335 = vpop.f32.mrf.mxu0
          %v3336 = vadd.f32 %v3190, %v3335
          %3337 = vdwg.mxu0
          %v3338 = vld [vmem:[#allocation3] sm:$0xff]
          %3339 = vmatpush.msra.mxu0 0.0
          %3340 = vmatpush.msra.mxu0 0.0
          %3341 = vmatpush.msra.mxu0 0.0
          %3342 = vmatpush.msra.mxu0 0.0
          %3343 = vmatpush.msra.mxu0 0.0
          %3344 = vmatpush.msra.mxu0 0.0
          %3345 = vmatpush.msra.mxu0 0.0
          %3346 = vmatpush.msra.mxu0 0.0
          %3347 = vmatpush.msra.mxu0 0.0
          %3348 = vmatpush.msra.mxu0 0.0
          %3349 = vmatpush.msra.mxu0 0.0
          %3350 = vmatpush.msra.mxu0 0.0
          %3351 = vmatpush.msra.mxu0 0.0
          %3352 = vmatpush.msra.mxu0 0.0
          %3353 = vmatpush.msra.mxu0 0.0
          %v3354 = vand.u32 %v3338, 4294901760
          %3355 = vmatpush.msra.mxu0 %v3354
          %v3356 = vand.u32 %v2136, 4294901760
          %v3357 = vsub.f32 %v2136, %v3356
          %v3358 = vand.u32 %v3357, 4294901760
          %v3359 = vsub.f32 %v3357, %v3358
          %v3360 = vand.u32 %v3359, 4294901760
          %3361 = vmatmul.f32.gmra.mxu0 %v3360
          %v3362 = vpop.f32.mrf.mxu0
          %v3363 = vadd.f32 0.0, %v3362
          %v3364 = vand.u32 %v2139, 4294901760
          %v3365 = vsub.f32 %v2139, %v3364
          %v3366 = vand.u32 %v3365, 4294901760
          %v3367 = vsub.f32 %v3365, %v3366
          %v3368 = vand.u32 %v3367, 4294901760
          %3369 = vmatmul.f32.gmra.mxu0 %v3368
          %v3370 = vpop.f32.mrf.mxu0
          %v3371 = vadd.f32 0.0, %v3370
          %v3372 = vand.u32 %v2142, 4294901760
          %v3373 = vsub.f32 %v2142, %v3372
          %v3374 = vand.u32 %v3373, 4294901760
          %v3375 = vsub.f32 %v3373, %v3374
          %v3376 = vand.u32 %v3375, 4294901760
          %3377 = vmatmul.f32.gmra.mxu0 %v3376
          %v3378 = vpop.f32.mrf.mxu0
          %v3379 = vadd.f32 0.0, %v3378
          %v3380 = vand.u32 %v2145, 4294901760
          %v3381 = vsub.f32 %v2145, %v3380
          %v3382 = vand.u32 %v3381, 4294901760
          %v3383 = vsub.f32 %v3381, %v3382
          %v3384 = vand.u32 %v3383, 4294901760
          %3385 = vmatmul.f32.gmra.mxu0 %v3384
          %v3386 = vpop.f32.mrf.mxu0
          %v3387 = vadd.f32 0.0, %v3386
          %v3388 = vand.u32 %v2148, 4294901760
          %v3389 = vsub.f32 %v2148, %v3388
          %v3390 = vand.u32 %v3389, 4294901760
          %v3391 = vsub.f32 %v3389, %v3390
          %v3392 = vand.u32 %v3391, 4294901760
          %3393 = vmatmul.f32.gmra.mxu0 %v3392
          %v3394 = vpop.f32.mrf.mxu0
          %v3395 = vadd.f32 0.0, %v3394
          %v3396 = vand.u32 %v2151, 4294901760
          %v3397 = vsub.f32 %v2151, %v3396
          %v3398 = vand.u32 %v3397, 4294901760
          %v3399 = vsub.f32 %v3397, %v3398
          %v3400 = vand.u32 %v3399, 4294901760
          %3401 = vmatmul.f32.gmra.mxu0 %v3400
          %v3402 = vpop.f32.mrf.mxu0
          %v3403 = vadd.f32 0.0, %v3402
          %v3404 = vand.u32 %v2154, 4294901760
          %v3405 = vsub.f32 %v2154, %v3404
          %v3406 = vand.u32 %v3405, 4294901760
          %v3407 = vsub.f32 %v3405, %v3406
          %v3408 = vand.u32 %v3407, 4294901760
          %3409 = vmatmul.f32.gmra.mxu0 %v3408
          %v3410 = vpop.f32.mrf.mxu0
          %v3411 = vadd.f32 0.0, %v3410
          %v3412 = vand.u32 %v2157, 4294901760
          %v3413 = vsub.f32 %v2157, %v3412
          %v3414 = vand.u32 %v3413, 4294901760
          %v3415 = vsub.f32 %v3413, %v3414
          %v3416 = vand.u32 %v3415, 4294901760
          %3417 = vmatmul.f32.gmra.mxu0 %v3416
          %v3418 = vpop.f32.mrf.mxu0
          %v3419 = vadd.f32 0.0, %v3418
          %v3420 = vand.u32 %v2160, 4294901760
          %v3421 = vsub.f32 %v2160, %v3420
          %v3422 = vand.u32 %v3421, 4294901760
          %v3423 = vsub.f32 %v3421, %v3422
          %v3424 = vand.u32 %v3423, 4294901760
          %3425 = vmatmul.f32.gmra.mxu0 %v3424
          %v3426 = vpop.f32.mrf.mxu0
          %v3427 = vadd.f32 0.0, %v3426
          %v3428 = vand.u32 %v2163, 4294901760
          %v3429 = vsub.f32 %v2163, %v3428
          %v3430 = vand.u32 %v3429, 4294901760
          %v3431 = vsub.f32 %v3429, %v3430
          %v3432 = vand.u32 %v3431, 4294901760
          %3433 = vmatmul.f32.gmra.mxu0 %v3432
          %v3434 = vpop.f32.mrf.mxu0
          %v3435 = vadd.f32 0.0, %v3434
          %v3436 = vand.u32 %v2166, 4294901760
          %v3437 = vsub.f32 %v2166, %v3436
          %v3438 = vand.u32 %v3437, 4294901760
          %v3439 = vsub.f32 %v3437, %v3438
          %v3440 = vand.u32 %v3439, 4294901760
          %3441 = vmatmul.f32.gmra.mxu0 %v3440
          %v3442 = vpop.f32.mrf.mxu0
          %v3443 = vadd.f32 0.0, %v3442
          %v3444 = vand.u32 %v2169, 4294901760
          %v3445 = vsub.f32 %v2169, %v3444
          %v3446 = vand.u32 %v3445, 4294901760
          %v3447 = vsub.f32 %v3445, %v3446
          %v3448 = vand.u32 %v3447, 4294901760
          %3449 = vmatmul.f32.gmra.mxu0 %v3448
          %v3450 = vpop.f32.mrf.mxu0
          %v3451 = vadd.f32 0.0, %v3450
          %v3452 = vand.u32 %v2172, 4294901760
          %v3453 = vsub.f32 %v2172, %v3452
          %v3454 = vand.u32 %v3453, 4294901760
          %v3455 = vsub.f32 %v3453, %v3454
          %v3456 = vand.u32 %v3455, 4294901760
          %3457 = vmatmul.f32.gmra.mxu0 %v3456
          %v3458 = vpop.f32.mrf.mxu0
          %v3459 = vadd.f32 0.0, %v3458
          %v3460 = vand.u32 %v2175, 4294901760
          %v3461 = vsub.f32 %v2175, %v3460
          %v3462 = vand.u32 %v3461, 4294901760
          %v3463 = vsub.f32 %v3461, %v3462
          %v3464 = vand.u32 %v3463, 4294901760
          %3465 = vmatmul.f32.gmra.mxu0 %v3464
          %v3466 = vpop.f32.mrf.mxu0
          %v3467 = vadd.f32 0.0, %v3466
          %v3468 = vand.u32 %v2178, 4294901760
          %v3469 = vsub.f32 %v2178, %v3468
          %v3470 = vand.u32 %v3469, 4294901760
          %v3471 = vsub.f32 %v3469, %v3470
          %v3472 = vand.u32 %v3471, 4294901760
          %3473 = vmatmul.f32.gmra.mxu0 %v3472
          %v3474 = vpop.f32.mrf.mxu0
          %v3475 = vadd.f32 0.0, %v3474
          %v3476 = vand.u32 %v2181, 4294901760
          %v3477 = vsub.f32 %v2181, %v3476
          %v3478 = vand.u32 %v3477, 4294901760
          %v3479 = vsub.f32 %v3477, %v3478
          %v3480 = vand.u32 %v3479, 4294901760
          %3481 = vmatmul.f32.gmra.mxu0 %v3480
          %v3482 = vpop.f32.mrf.mxu0
          %v3483 = vadd.f32 0.0, %v3482
          %v3484 = vand.u32 %v2184, 4294901760
          %v3485 = vsub.f32 %v2184, %v3484
          %v3486 = vand.u32 %v3485, 4294901760
          %v3487 = vsub.f32 %v3485, %v3486
          %v3488 = vand.u32 %v3487, 4294901760
          %3489 = vmatmul.f32.gmra.mxu0 %v3488
          %v3490 = vpop.f32.mrf.mxu0
          %v3491 = vadd.f32 0.0, %v3490
          %v3492 = vand.u32 %v2187, 4294901760
          %v3493 = vsub.f32 %v2187, %v3492
          %v3494 = vand.u32 %v3493, 4294901760
          %v3495 = vsub.f32 %v3493, %v3494
          %v3496 = vand.u32 %v3495, 4294901760
          %3497 = vmatmul.f32.gmra.mxu0 %v3496
          %v3498 = vpop.f32.mrf.mxu0
          %v3499 = vadd.f32 0.0, %v3498
          %v3500 = vand.u32 %v2190, 4294901760
          %v3501 = vsub.f32 %v2190, %v3500
          %v3502 = vand.u32 %v3501, 4294901760
          %v3503 = vsub.f32 %v3501, %v3502
          %v3504 = vand.u32 %v3503, 4294901760
          %3505 = vmatmul.f32.gmra.mxu0 %v3504
          %v3506 = vpop.f32.mrf.mxu0
          %v3507 = vadd.f32 0.0, %v3506
          %v3508 = vand.u32 %v2193, 4294901760
          %v3509 = vsub.f32 %v2193, %v3508
          %v3510 = vand.u32 %v3509, 4294901760
          %v3511 = vsub.f32 %v3509, %v3510
          %v3512 = vand.u32 %v3511, 4294901760
          %3513 = vmatmul.f32.gmra.mxu0 %v3512
          %v3514 = vpop.f32.mrf.mxu0
          %v3515 = vadd.f32 0.0, %v3514
          %v3516 = vand.u32 %v2196, 4294901760
          %v3517 = vsub.f32 %v2196, %v3516
          %v3518 = vand.u32 %v3517, 4294901760
          %v3519 = vsub.f32 %v3517, %v3518
          %v3520 = vand.u32 %v3519, 4294901760
          %3521 = vmatmul.f32.gmra.mxu0 %v3520
          %v3522 = vpop.f32.mrf.mxu0
          %v3523 = vadd.f32 0.0, %v3522
          %v3524 = vand.u32 %v2199, 4294901760
          %v3525 = vsub.f32 %v2199, %v3524
          %v3526 = vand.u32 %v3525, 4294901760
          %v3527 = vsub.f32 %v3525, %v3526
          %v3528 = vand.u32 %v3527, 4294901760
          %3529 = vmatmul.f32.gmra.mxu0 %v3528
          %v3530 = vpop.f32.mrf.mxu0
          %v3531 = vadd.f32 0.0, %v3530
          %v3532 = vand.u32 %v2202, 4294901760
          %v3533 = vsub.f32 %v2202, %v3532
          %v3534 = vand.u32 %v3533, 4294901760
          %v3535 = vsub.f32 %v3533, %v3534
          %v3536 = vand.u32 %v3535, 4294901760
          %3537 = vmatmul.f32.gmra.mxu0 %v3536
          %v3538 = vpop.f32.mrf.mxu0
          %v3539 = vadd.f32 0.0, %v3538
          %v3540 = vand.u32 %v2205, 4294901760
          %v3541 = vsub.f32 %v2205, %v3540
          %v3542 = vand.u32 %v3541, 4294901760
          %v3543 = vsub.f32 %v3541, %v3542
          %v3544 = vand.u32 %v3543, 4294901760
          %3545 = vmatmul.f32.gmra.mxu0 %v3544
          %v3546 = vpop.f32.mrf.mxu0
          %v3547 = vadd.f32 0.0, %v3546
          %v3548 = vand.u32 %v2208, 4294901760
          %v3549 = vsub.f32 %v2208, %v3548
          %v3550 = vand.u32 %v3549, 4294901760
          %v3551 = vsub.f32 %v3549, %v3550
          %v3552 = vand.u32 %v3551, 4294901760
          %3553 = vmatmul.f32.gmra.mxu0 %v3552
          %v3554 = vpop.f32.mrf.mxu0
          %v3555 = vadd.f32 0.0, %v3554
          %v3556 = vand.u32 %v2211, 4294901760
          %v3557 = vsub.f32 %v2211, %v3556
          %v3558 = vand.u32 %v3557, 4294901760
          %v3559 = vsub.f32 %v3557, %v3558
          %v3560 = vand.u32 %v3559, 4294901760
          %3561 = vmatmul.f32.gmra.mxu0 %v3560
          %v3562 = vpop.f32.mrf.mxu0
          %v3563 = vadd.f32 0.0, %v3562
          %v3564 = vand.u32 %v2214, 4294901760
          %v3565 = vsub.f32 %v2214, %v3564
          %v3566 = vand.u32 %v3565, 4294901760
          %v3567 = vsub.f32 %v3565, %v3566
          %v3568 = vand.u32 %v3567, 4294901760
          %3569 = vmatmul.f32.gmra.mxu0 %v3568
          %v3570 = vpop.f32.mrf.mxu0
          %v3571 = vadd.f32 0.0, %v3570
          %v3572 = vand.u32 %v2217, 4294901760
          %v3573 = vsub.f32 %v2217, %v3572
          %v3574 = vand.u32 %v3573, 4294901760
          %v3575 = vsub.f32 %v3573, %v3574
          %v3576 = vand.u32 %v3575, 4294901760
          %3577 = vmatmul.f32.gmra.mxu0 %v3576
          %v3578 = vpop.f32.mrf.mxu0
          %v3579 = vadd.f32 0.0, %v3578
          %v3580 = vand.u32 %v2220, 4294901760
          %v3581 = vsub.f32 %v2220, %v3580
          %v3582 = vand.u32 %v3581, 4294901760
          %v3583 = vsub.f32 %v3581, %v3582
          %v3584 = vand.u32 %v3583, 4294901760
          %3585 = vmatmul.f32.gmra.mxu0 %v3584
          %v3586 = vpop.f32.mrf.mxu0
          %v3587 = vadd.f32 0.0, %v3586
          %v3588 = vand.u32 %v2223, 4294901760
          %v3589 = vsub.f32 %v2223, %v3588
          %v3590 = vand.u32 %v3589, 4294901760
          %v3591 = vsub.f32 %v3589, %v3590
          %v3592 = vand.u32 %v3591, 4294901760
          %3593 = vmatmul.f32.gmra.mxu0 %v3592
          %v3594 = vpop.f32.mrf.mxu0
          %v3595 = vadd.f32 0.0, %v3594
          %v3596 = vand.u32 %v2226, 4294901760
          %v3597 = vsub.f32 %v2226, %v3596
          %v3598 = vand.u32 %v3597, 4294901760
          %v3599 = vsub.f32 %v3597, %v3598
          %v3600 = vand.u32 %v3599, 4294901760
          %3601 = vmatmul.f32.gmra.mxu0 %v3600
          %v3602 = vpop.f32.mrf.mxu0
          %v3603 = vadd.f32 0.0, %v3602
          %v3604 = vand.u32 %v2229, 4294901760
          %v3605 = vsub.f32 %v2229, %v3604
          %v3606 = vand.u32 %v3605, 4294901760
          %v3607 = vsub.f32 %v3605, %v3606
          %v3608 = vand.u32 %v3607, 4294901760
          %3609 = vmatmul.f32.gmra.mxu0 %v3608
          %v3610 = vpop.f32.mrf.mxu0
          %v3611 = vadd.f32 0.0, %v3610
          %3612 = vdwg.mxu0
          %3613 = vmatpush.msra.mxu0 0.0
          %3614 = vmatpush.msra.mxu0 0.0
          %3615 = vmatpush.msra.mxu0 0.0
          %3616 = vmatpush.msra.mxu0 0.0
          %3617 = vmatpush.msra.mxu0 0.0
          %3618 = vmatpush.msra.mxu0 0.0
          %3619 = vmatpush.msra.mxu0 0.0
          %3620 = vmatpush.msra.mxu0 0.0
          %3621 = vmatpush.msra.mxu0 0.0
          %3622 = vmatpush.msra.mxu0 0.0
          %3623 = vmatpush.msra.mxu0 0.0
          %3624 = vmatpush.msra.mxu0 0.0
          %3625 = vmatpush.msra.mxu0 0.0
          %3626 = vmatpush.msra.mxu0 0.0
          %3627 = vmatpush.msra.mxu0 0.0
          %v3628 = vand.u32 %v3338, 4294901760
          %v3629 = vsub.f32 %v3338, %v3628
          %v3630 = vand.u32 %v3629, 4294901760
          %v3631 = vsub.f32 %v3629, %v3630
          %v3632 = vand.u32 %v3631, 4294901760
          %3633 = vmatpush.msra.mxu0 %v3632
          %v3634 = vand.u32 %v2136, 4294901760
          %3635 = vmatmul.f32.gmra.mxu0 %v3634
          %v3636 = vpop.f32.mrf.mxu0
          %v3637 = vadd.f32 %v3363, %v3636
          %v3638 = vand.u32 %v2139, 4294901760
          %3639 = vmatmul.f32.gmra.mxu0 %v3638
          %v3640 = vpop.f32.mrf.mxu0
          %v3641 = vadd.f32 %v3371, %v3640
          %v3642 = vand.u32 %v2142, 4294901760
          %3643 = vmatmul.f32.gmra.mxu0 %v3642
          %v3644 = vpop.f32.mrf.mxu0
          %v3645 = vadd.f32 %v3379, %v3644
          %v3646 = vand.u32 %v2145, 4294901760
          %3647 = vmatmul.f32.gmra.mxu0 %v3646
          %v3648 = vpop.f32.mrf.mxu0
          %v3649 = vadd.f32 %v3387, %v3648
          %v3650 = vand.u32 %v2148, 4294901760
          %3651 = vmatmul.f32.gmra.mxu0 %v3650
          %v3652 = vpop.f32.mrf.mxu0
          %v3653 = vadd.f32 %v3395, %v3652
          %v3654 = vand.u32 %v2151, 4294901760
          %3655 = vmatmul.f32.gmra.mxu0 %v3654
          %v3656 = vpop.f32.mrf.mxu0
          %v3657 = vadd.f32 %v3403, %v3656
          %v3658 = vand.u32 %v2154, 4294901760
          %3659 = vmatmul.f32.gmra.mxu0 %v3658
          %v3660 = vpop.f32.mrf.mxu0
          %v3661 = vadd.f32 %v3411, %v3660
          %v3662 = vand.u32 %v2157, 4294901760
          %3663 = vmatmul.f32.gmra.mxu0 %v3662
          %v3664 = vpop.f32.mrf.mxu0
          %v3665 = vadd.f32 %v3419, %v3664
          %v3666 = vand.u32 %v2160, 4294901760
          %3667 = vmatmul.f32.gmra.mxu0 %v3666
          %v3668 = vpop.f32.mrf.mxu0
          %v3669 = vadd.f32 %v3427, %v3668
          %v3670 = vand.u32 %v2163, 4294901760
          %3671 = vmatmul.f32.gmra.mxu0 %v3670
          %v3672 = vpop.f32.mrf.mxu0
          %v3673 = vadd.f32 %v3435, %v3672
          %v3674 = vand.u32 %v2166, 4294901760
          %3675 = vmatmul.f32.gmra.mxu0 %v3674
          %v3676 = vpop.f32.mrf.mxu0
          %v3677 = vadd.f32 %v3443, %v3676
          %v3678 = vand.u32 %v2169, 4294901760
          %3679 = vmatmul.f32.gmra.mxu0 %v3678
          %v3680 = vpop.f32.mrf.mxu0
          %v3681 = vadd.f32 %v3451, %v3680
          %v3682 = vand.u32 %v2172, 4294901760
          %3683 = vmatmul.f32.gmra.mxu0 %v3682
          %v3684 = vpop.f32.mrf.mxu0
          %v3685 = vadd.f32 %v3459, %v3684
          %v3686 = vand.u32 %v2175, 4294901760
          %3687 = vmatmul.f32.gmra.mxu0 %v3686
          %v3688 = vpop.f32.mrf.mxu0
          %v3689 = vadd.f32 %v3467, %v3688
          %v3690 = vand.u32 %v2178, 4294901760
          %3691 = vmatmul.f32.gmra.mxu0 %v3690
          %v3692 = vpop.f32.mrf.mxu0
          %v3693 = vadd.f32 %v3475, %v3692
          %v3694 = vand.u32 %v2181, 4294901760
          %3695 = vmatmul.f32.gmra.mxu0 %v3694
          %v3696 = vpop.f32.mrf.mxu0
          %v3697 = vadd.f32 %v3483, %v3696
          %v3698 = vand.u32 %v2184, 4294901760
          %3699 = vmatmul.f32.gmra.mxu0 %v3698
          %v3700 = vpop.f32.mrf.mxu0
          %v3701 = vadd.f32 %v3491, %v3700
          %v3702 = vand.u32 %v2187, 4294901760
          %3703 = vmatmul.f32.gmra.mxu0 %v3702
          %v3704 = vpop.f32.mrf.mxu0
          %v3705 = vadd.f32 %v3499, %v3704
          %v3706 = vand.u32 %v2190, 4294901760
          %3707 = vmatmul.f32.gmra.mxu0 %v3706
          %v3708 = vpop.f32.mrf.mxu0
          %v3709 = vadd.f32 %v3507, %v3708
          %v3710 = vand.u32 %v2193, 4294901760
          %3711 = vmatmul.f32.gmra.mxu0 %v3710
          %v3712 = vpop.f32.mrf.mxu0
          %v3713 = vadd.f32 %v3515, %v3712
          %v3714 = vand.u32 %v2196, 4294901760
          %3715 = vmatmul.f32.gmra.mxu0 %v3714
          %v3716 = vpop.f32.mrf.mxu0
          %v3717 = vadd.f32 %v3523, %v3716
          %v3718 = vand.u32 %v2199, 4294901760
          %3719 = vmatmul.f32.gmra.mxu0 %v3718
          %v3720 = vpop.f32.mrf.mxu0
          %v3721 = vadd.f32 %v3531, %v3720
          %v3722 = vand.u32 %v2202, 4294901760
          %3723 = vmatmul.f32.gmra.mxu0 %v3722
          %v3724 = vpop.f32.mrf.mxu0
          %v3725 = vadd.f32 %v3539, %v3724
          %v3726 = vand.u32 %v2205, 4294901760
          %3727 = vmatmul.f32.gmra.mxu0 %v3726
          %v3728 = vpop.f32.mrf.mxu0
          %v3729 = vadd.f32 %v3547, %v3728
          %v3730 = vand.u32 %v2208, 4294901760
          %3731 = vmatmul.f32.gmra.mxu0 %v3730
          %v3732 = vpop.f32.mrf.mxu0
          %v3733 = vadd.f32 %v3555, %v3732
          %v3734 = vand.u32 %v2211, 4294901760
          %3735 = vmatmul.f32.gmra.mxu0 %v3734
          %v3736 = vpop.f32.mrf.mxu0
          %v3737 = vadd.f32 %v3563, %v3736
          %v3738 = vand.u32 %v2214, 4294901760
          %3739 = vmatmul.f32.gmra.mxu0 %v3738
          %v3740 = vpop.f32.mrf.mxu0
          %v3741 = vadd.f32 %v3571, %v3740
          %v3742 = vand.u32 %v2217, 4294901760
          %3743 = vmatmul.f32.gmra.mxu0 %v3742
          %v3744 = vpop.f32.mrf.mxu0
          %v3745 = vadd.f32 %v3579, %v3744
          %v3746 = vand.u32 %v2220, 4294901760
          %3747 = vmatmul.f32.gmra.mxu0 %v3746
          %v3748 = vpop.f32.mrf.mxu0
          %v3749 = vadd.f32 %v3587, %v3748
          %v3750 = vand.u32 %v2223, 4294901760
          %3751 = vmatmul.f32.gmra.mxu0 %v3750
          %v3752 = vpop.f32.mrf.mxu0
          %v3753 = vadd.f32 %v3595, %v3752
          %v3754 = vand.u32 %v2226, 4294901760
          %3755 = vmatmul.f32.gmra.mxu0 %v3754
          %v3756 = vpop.f32.mrf.mxu0
          %v3757 = vadd.f32 %v3603, %v3756
          %v3758 = vand.u32 %v2229, 4294901760
          %3759 = vmatmul.f32.gmra.mxu0 %v3758
          %v3760 = vpop.f32.mrf.mxu0
          %v3761 = vadd.f32 %v3611, %v3760
          %3762 = vdwg.mxu0
          %3763 = vmatpush.msra.mxu0 0.0
          %3764 = vmatpush.msra.mxu0 0.0
          %3765 = vmatpush.msra.mxu0 0.0
          %3766 = vmatpush.msra.mxu0 0.0
          %3767 = vmatpush.msra.mxu0 0.0
          %3768 = vmatpush.msra.mxu0 0.0
          %3769 = vmatpush.msra.mxu0 0.0
          %3770 = vmatpush.msra.mxu0 0.0
          %3771 = vmatpush.msra.mxu0 0.0
          %3772 = vmatpush.msra.mxu0 0.0
          %3773 = vmatpush.msra.mxu0 0.0
          %3774 = vmatpush.msra.mxu0 0.0
          %3775 = vmatpush.msra.mxu0 0.0
          %3776 = vmatpush.msra.mxu0 0.0
          %3777 = vmatpush.msra.mxu0 0.0
          %v3778 = vand.u32 %v3338, 4294901760
          %v3779 = vsub.f32 %v3338, %v3778
          %3780 = vmatpush.msra.mxu0 %v3779
          %v3781 = vand.u32 %v2136, 4294901760
          %v3782 = vsub.f32 %v2136, %v3781
          %3783 = vmatmul.f32.gmra.mxu0 %v3782
          %v3784 = vpop.f32.mrf.mxu0
          %v3785 = vadd.f32 %v3637, %v3784
          %v3786 = vand.u32 %v2139, 4294901760
          %v3787 = vsub.f32 %v2139, %v3786
          %3788 = vmatmul.f32.gmra.mxu0 %v3787
          %v3789 = vpop.f32.mrf.mxu0
          %v3790 = vadd.f32 %v3641, %v3789
          %v3791 = vand.u32 %v2142, 4294901760
          %v3792 = vsub.f32 %v2142, %v3791
          %3793 = vmatmul.f32.gmra.mxu0 %v3792
          %v3794 = vpop.f32.mrf.mxu0
          %v3795 = vadd.f32 %v3645, %v3794
          %v3796 = vand.u32 %v2145, 4294901760
          %v3797 = vsub.f32 %v2145, %v3796
          %3798 = vmatmul.f32.gmra.mxu0 %v3797
          %v3799 = vpop.f32.mrf.mxu0
          %v3800 = vadd.f32 %v3649, %v3799
          %v3801 = vand.u32 %v2148, 4294901760
          %v3802 = vsub.f32 %v2148, %v3801
          %3803 = vmatmul.f32.gmra.mxu0 %v3802
          %v3804 = vpop.f32.mrf.mxu0
          %v3805 = vadd.f32 %v3653, %v3804
          %v3806 = vand.u32 %v2151, 4294901760
          %v3807 = vsub.f32 %v2151, %v3806
          %3808 = vmatmul.f32.gmra.mxu0 %v3807
          %v3809 = vpop.f32.mrf.mxu0
          %v3810 = vadd.f32 %v3657, %v3809
          %v3811 = vand.u32 %v2154, 4294901760
          %v3812 = vsub.f32 %v2154, %v3811
          %3813 = vmatmul.f32.gmra.mxu0 %v3812
          %v3814 = vpop.f32.mrf.mxu0
          %v3815 = vadd.f32 %v3661, %v3814
          %v3816 = vand.u32 %v2157, 4294901760
          %v3817 = vsub.f32 %v2157, %v3816
          %3818 = vmatmul.f32.gmra.mxu0 %v3817
          %v3819 = vpop.f32.mrf.mxu0
          %v3820 = vadd.f32 %v3665, %v3819
          %v3821 = vand.u32 %v2160, 4294901760
          %v3822 = vsub.f32 %v2160, %v3821
          %3823 = vmatmul.f32.gmra.mxu0 %v3822
          %v3824 = vpop.f32.mrf.mxu0
          %v3825 = vadd.f32 %v3669, %v3824
          %v3826 = vand.u32 %v2163, 4294901760
          %v3827 = vsub.f32 %v2163, %v3826
          %3828 = vmatmul.f32.gmra.mxu0 %v3827
          %v3829 = vpop.f32.mrf.mxu0
          %v3830 = vadd.f32 %v3673, %v3829
          %v3831 = vand.u32 %v2166, 4294901760
          %v3832 = vsub.f32 %v2166, %v3831
          %3833 = vmatmul.f32.gmra.mxu0 %v3832
          %v3834 = vpop.f32.mrf.mxu0
          %v3835 = vadd.f32 %v3677, %v3834
          %v3836 = vand.u32 %v2169, 4294901760
          %v3837 = vsub.f32 %v2169, %v3836
          %3838 = vmatmul.f32.gmra.mxu0 %v3837
          %v3839 = vpop.f32.mrf.mxu0
          %v3840 = vadd.f32 %v3681, %v3839
          %v3841 = vand.u32 %v2172, 4294901760
          %v3842 = vsub.f32 %v2172, %v3841
          %3843 = vmatmul.f32.gmra.mxu0 %v3842
          %v3844 = vpop.f32.mrf.mxu0
          %v3845 = vadd.f32 %v3685, %v3844
          %v3846 = vand.u32 %v2175, 4294901760
          %v3847 = vsub.f32 %v2175, %v3846
          %3848 = vmatmul.f32.gmra.mxu0 %v3847
          %v3849 = vpop.f32.mrf.mxu0
          %v3850 = vadd.f32 %v3689, %v3849
          %v3851 = vand.u32 %v2178, 4294901760
          %v3852 = vsub.f32 %v2178, %v3851
          %3853 = vmatmul.f32.gmra.mxu0 %v3852
          %v3854 = vpop.f32.mrf.mxu0
          %v3855 = vadd.f32 %v3693, %v3854
          %v3856 = vand.u32 %v2181, 4294901760
          %v3857 = vsub.f32 %v2181, %v3856
          %3858 = vmatmul.f32.gmra.mxu0 %v3857
          %v3859 = vpop.f32.mrf.mxu0
          %v3860 = vadd.f32 %v3697, %v3859
          %v3861 = vand.u32 %v2184, 4294901760
          %v3862 = vsub.f32 %v2184, %v3861
          %3863 = vmatmul.f32.gmra.mxu0 %v3862
          %v3864 = vpop.f32.mrf.mxu0
          %v3865 = vadd.f32 %v3701, %v3864
          %v3866 = vand.u32 %v2187, 4294901760
          %v3867 = vsub.f32 %v2187, %v3866
          %3868 = vmatmul.f32.gmra.mxu0 %v3867
          %v3869 = vpop.f32.mrf.mxu0
          %v3870 = vadd.f32 %v3705, %v3869
          %v3871 = vand.u32 %v2190, 4294901760
          %v3872 = vsub.f32 %v2190, %v3871
          %3873 = vmatmul.f32.gmra.mxu0 %v3872
          %v3874 = vpop.f32.mrf.mxu0
          %v3875 = vadd.f32 %v3709, %v3874
          %v3876 = vand.u32 %v2193, 4294901760
          %v3877 = vsub.f32 %v2193, %v3876
          %3878 = vmatmul.f32.gmra.mxu0 %v3877
          %v3879 = vpop.f32.mrf.mxu0
          %v3880 = vadd.f32 %v3713, %v3879
          %v3881 = vand.u32 %v2196, 4294901760
          %v3882 = vsub.f32 %v2196, %v3881
          %3883 = vmatmul.f32.gmra.mxu0 %v3882
          %v3884 = vpop.f32.mrf.mxu0
          %v3885 = vadd.f32 %v3717, %v3884
          %v3886 = vand.u32 %v2199, 4294901760
          %v3887 = vsub.f32 %v2199, %v3886
          %3888 = vmatmul.f32.gmra.mxu0 %v3887
          %v3889 = vpop.f32.mrf.mxu0
          %v3890 = vadd.f32 %v3721, %v3889
          %v3891 = vand.u32 %v2202, 4294901760
          %v3892 = vsub.f32 %v2202, %v3891
          %3893 = vmatmul.f32.gmra.mxu0 %v3892
          %v3894 = vpop.f32.mrf.mxu0
          %v3895 = vadd.f32 %v3725, %v3894
          %v3896 = vand.u32 %v2205, 4294901760
          %v3897 = vsub.f32 %v2205, %v3896
          %3898 = vmatmul.f32.gmra.mxu0 %v3897
          %v3899 = vpop.f32.mrf.mxu0
          %v3900 = vadd.f32 %v3729, %v3899
          %v3901 = vand.u32 %v2208, 4294901760
          %v3902 = vsub.f32 %v2208, %v3901
          %3903 = vmatmul.f32.gmra.mxu0 %v3902
          %v3904 = vpop.f32.mrf.mxu0
          %v3905 = vadd.f32 %v3733, %v3904
          %v3906 = vand.u32 %v2211, 4294901760
          %v3907 = vsub.f32 %v2211, %v3906
          %3908 = vmatmul.f32.gmra.mxu0 %v3907
          %v3909 = vpop.f32.mrf.mxu0
          %v3910 = vadd.f32 %v3737, %v3909
          %v3911 = vand.u32 %v2214, 4294901760
          %v3912 = vsub.f32 %v2214, %v3911
          %3913 = vmatmul.f32.gmra.mxu0 %v3912
          %v3914 = vpop.f32.mrf.mxu0
          %v3915 = vadd.f32 %v3741, %v3914
          %v3916 = vand.u32 %v2217, 4294901760
          %v3917 = vsub.f32 %v2217, %v3916
          %3918 = vmatmul.f32.gmra.mxu0 %v3917
          %v3919 = vpop.f32.mrf.mxu0
          %v3920 = vadd.f32 %v3745, %v3919
          %v3921 = vand.u32 %v2220, 4294901760
          %v3922 = vsub.f32 %v2220, %v3921
          %3923 = vmatmul.f32.gmra.mxu0 %v3922
          %v3924 = vpop.f32.mrf.mxu0
          %v3925 = vadd.f32 %v3749, %v3924
          %v3926 = vand.u32 %v2223, 4294901760
          %v3927 = vsub.f32 %v2223, %v3926
          %3928 = vmatmul.f32.gmra.mxu0 %v3927
          %v3929 = vpop.f32.mrf.mxu0
          %v3930 = vadd.f32 %v3753, %v3929
          %v3931 = vand.u32 %v2226, 4294901760
          %v3932 = vsub.f32 %v2226, %v3931
          %3933 = vmatmul.f32.gmra.mxu0 %v3932
          %v3934 = vpop.f32.mrf.mxu0
          %v3935 = vadd.f32 %v3757, %v3934
          %v3936 = vand.u32 %v2229, 4294901760
          %v3937 = vsub.f32 %v2229, %v3936
          %3938 = vmatmul.f32.gmra.mxu0 %v3937
          %v3939 = vpop.f32.mrf.mxu0
          %v3940 = vadd.f32 %v3761, %v3939
          %3941 = vdwg.mxu0
          %3942 = vmatpush.msra.mxu0 0.0
          %3943 = vmatpush.msra.mxu0 0.0
          %3944 = vmatpush.msra.mxu0 0.0
          %3945 = vmatpush.msra.mxu0 0.0
          %3946 = vmatpush.msra.mxu0 0.0
          %3947 = vmatpush.msra.mxu0 0.0
          %3948 = vmatpush.msra.mxu0 0.0
          %3949 = vmatpush.msra.mxu0 0.0
          %3950 = vmatpush.msra.mxu0 0.0
          %3951 = vmatpush.msra.mxu0 0.0
          %3952 = vmatpush.msra.mxu0 0.0
          %3953 = vmatpush.msra.mxu0 0.0
          %3954 = vmatpush.msra.mxu0 0.0
          %3955 = vmatpush.msra.mxu0 0.0
          %3956 = vmatpush.msra.mxu0 0.0
          %v3957 = vand.u32 %v3338, 4294901760
          %3958 = vmatpush.msra.mxu0 %v3957
          %v3959 = vand.u32 %v2136, 4294901760
          %v3960 = vsub.f32 %v2136, %v3959
          %v3961 = vand.u32 %v3960, 4294901760
          %3962 = vmatmul.f32.gmra.mxu0 %v3961
          %v3963 = vpop.f32.mrf.mxu0
          %v3964 = vadd.f32 %v3785, %v3963
          %v3965 = vand.u32 %v2139, 4294901760
          %v3966 = vsub.f32 %v2139, %v3965
          %v3967 = vand.u32 %v3966, 4294901760
          %3968 = vmatmul.f32.gmra.mxu0 %v3967
          %v3969 = vpop.f32.mrf.mxu0
          %v3970 = vadd.f32 %v3790, %v3969
          %v3971 = vand.u32 %v2142, 4294901760
          %v3972 = vsub.f32 %v2142, %v3971
          %v3973 = vand.u32 %v3972, 4294901760
          %3974 = vmatmul.f32.gmra.mxu0 %v3973
          %v3975 = vpop.f32.mrf.mxu0
          %v3976 = vadd.f32 %v3795, %v3975
          %v3977 = vand.u32 %v2145, 4294901760
          %v3978 = vsub.f32 %v2145, %v3977
          %v3979 = vand.u32 %v3978, 4294901760
          %3980 = vmatmul.f32.gmra.mxu0 %v3979
          %v3981 = vpop.f32.mrf.mxu0
          %v3982 = vadd.f32 %v3800, %v3981
          %v3983 = vand.u32 %v2148, 4294901760
          %v3984 = vsub.f32 %v2148, %v3983
          %v3985 = vand.u32 %v3984, 4294901760
          %3986 = vmatmul.f32.gmra.mxu0 %v3985
          %v3987 = vpop.f32.mrf.mxu0
          %v3988 = vadd.f32 %v3805, %v3987
          %v3989 = vand.u32 %v2151, 4294901760
          %v3990 = vsub.f32 %v2151, %v3989
          %v3991 = vand.u32 %v3990, 4294901760
          %3992 = vmatmul.f32.gmra.mxu0 %v3991
          %v3993 = vpop.f32.mrf.mxu0
          %v3994 = vadd.f32 %v3810, %v3993
          %v3995 = vand.u32 %v2154, 4294901760
          %v3996 = vsub.f32 %v2154, %v3995
          %v3997 = vand.u32 %v3996, 4294901760
          %3998 = vmatmul.f32.gmra.mxu0 %v3997
          %v3999 = vpop.f32.mrf.mxu0
          %v4000 = vadd.f32 %v3815, %v3999
          %v4001 = vand.u32 %v2157, 4294901760
          %v4002 = vsub.f32 %v2157, %v4001
          %v4003 = vand.u32 %v4002, 4294901760
          %4004 = vmatmul.f32.gmra.mxu0 %v4003
          %v4005 = vpop.f32.mrf.mxu0
          %v4006 = vadd.f32 %v3820, %v4005
          %v4007 = vand.u32 %v2160, 4294901760
          %v4008 = vsub.f32 %v2160, %v4007
          %v4009 = vand.u32 %v4008, 4294901760
          %4010 = vmatmul.f32.gmra.mxu0 %v4009
          %v4011 = vpop.f32.mrf.mxu0
          %v4012 = vadd.f32 %v3825, %v4011
          %v4013 = vand.u32 %v2163, 4294901760
          %v4014 = vsub.f32 %v2163, %v4013
          %v4015 = vand.u32 %v4014, 4294901760
          %4016 = vmatmul.f32.gmra.mxu0 %v4015
          %v4017 = vpop.f32.mrf.mxu0
          %v4018 = vadd.f32 %v3830, %v4017
          %v4019 = vand.u32 %v2166, 4294901760
          %v4020 = vsub.f32 %v2166, %v4019
          %v4021 = vand.u32 %v4020, 4294901760
          %4022 = vmatmul.f32.gmra.mxu0 %v4021
          %v4023 = vpop.f32.mrf.mxu0
          %v4024 = vadd.f32 %v3835, %v4023
          %v4025 = vand.u32 %v2169, 4294901760
          %v4026 = vsub.f32 %v2169, %v4025
          %v4027 = vand.u32 %v4026, 4294901760
          %4028 = vmatmul.f32.gmra.mxu0 %v4027
          %v4029 = vpop.f32.mrf.mxu0
          %v4030 = vadd.f32 %v3840, %v4029
          %v4031 = vand.u32 %v2172, 4294901760
          %v4032 = vsub.f32 %v2172, %v4031
          %v4033 = vand.u32 %v4032, 4294901760
          %4034 = vmatmul.f32.gmra.mxu0 %v4033
          %v4035 = vpop.f32.mrf.mxu0
          %v4036 = vadd.f32 %v3845, %v4035
          %v4037 = vand.u32 %v2175, 4294901760
          %v4038 = vsub.f32 %v2175, %v4037
          %v4039 = vand.u32 %v4038, 4294901760
          %4040 = vmatmul.f32.gmra.mxu0 %v4039
          %v4041 = vpop.f32.mrf.mxu0
          %v4042 = vadd.f32 %v3850, %v4041
          %v4043 = vand.u32 %v2178, 4294901760
          %v4044 = vsub.f32 %v2178, %v4043
          %v4045 = vand.u32 %v4044, 4294901760
          %4046 = vmatmul.f32.gmra.mxu0 %v4045
          %v4047 = vpop.f32.mrf.mxu0
          %v4048 = vadd.f32 %v3855, %v4047
          %v4049 = vand.u32 %v2181, 4294901760
          %v4050 = vsub.f32 %v2181, %v4049
          %v4051 = vand.u32 %v4050, 4294901760
          %4052 = vmatmul.f32.gmra.mxu0 %v4051
          %v4053 = vpop.f32.mrf.mxu0
          %v4054 = vadd.f32 %v3860, %v4053
          %v4055 = vand.u32 %v2184, 4294901760
          %v4056 = vsub.f32 %v2184, %v4055
          %v4057 = vand.u32 %v4056, 4294901760
          %4058 = vmatmul.f32.gmra.mxu0 %v4057
          %v4059 = vpop.f32.mrf.mxu0
          %v4060 = vadd.f32 %v3865, %v4059
          %v4061 = vand.u32 %v2187, 4294901760
          %v4062 = vsub.f32 %v2187, %v4061
          %v4063 = vand.u32 %v4062, 4294901760
          %4064 = vmatmul.f32.gmra.mxu0 %v4063
          %v4065 = vpop.f32.mrf.mxu0
          %v4066 = vadd.f32 %v3870, %v4065
          %v4067 = vand.u32 %v2190, 4294901760
          %v4068 = vsub.f32 %v2190, %v4067
          %v4069 = vand.u32 %v4068, 4294901760
          %4070 = vmatmul.f32.gmra.mxu0 %v4069
          %v4071 = vpop.f32.mrf.mxu0
          %v4072 = vadd.f32 %v3875, %v4071
          %v4073 = vand.u32 %v2193, 4294901760
          %v4074 = vsub.f32 %v2193, %v4073
          %v4075 = vand.u32 %v4074, 4294901760
          %4076 = vmatmul.f32.gmra.mxu0 %v4075
          %v4077 = vpop.f32.mrf.mxu0
          %v4078 = vadd.f32 %v3880, %v4077
          %v4079 = vand.u32 %v2196, 4294901760
          %v4080 = vsub.f32 %v2196, %v4079
          %v4081 = vand.u32 %v4080, 4294901760
          %4082 = vmatmul.f32.gmra.mxu0 %v4081
          %v4083 = vpop.f32.mrf.mxu0
          %v4084 = vadd.f32 %v3885, %v4083
          %v4085 = vand.u32 %v2199, 4294901760
          %v4086 = vsub.f32 %v2199, %v4085
          %v4087 = vand.u32 %v4086, 4294901760
          %4088 = vmatmul.f32.gmra.mxu0 %v4087
          %v4089 = vpop.f32.mrf.mxu0
          %v4090 = vadd.f32 %v3890, %v4089
          %v4091 = vand.u32 %v2202, 4294901760
          %v4092 = vsub.f32 %v2202, %v4091
          %v4093 = vand.u32 %v4092, 4294901760
          %4094 = vmatmul.f32.gmra.mxu0 %v4093
          %v4095 = vpop.f32.mrf.mxu0
          %v4096 = vadd.f32 %v3895, %v4095
          %v4097 = vand.u32 %v2205, 4294901760
          %v4098 = vsub.f32 %v2205, %v4097
          %v4099 = vand.u32 %v4098, 4294901760
          %4100 = vmatmul.f32.gmra.mxu0 %v4099
          %v4101 = vpop.f32.mrf.mxu0
          %v4102 = vadd.f32 %v3900, %v4101
          %v4103 = vand.u32 %v2208, 4294901760
          %v4104 = vsub.f32 %v2208, %v4103
          %v4105 = vand.u32 %v4104, 4294901760
          %4106 = vmatmul.f32.gmra.mxu0 %v4105
          %v4107 = vpop.f32.mrf.mxu0
          %v4108 = vadd.f32 %v3905, %v4107
          %v4109 = vand.u32 %v2211, 4294901760
          %v4110 = vsub.f32 %v2211, %v4109
          %v4111 = vand.u32 %v4110, 4294901760
          %4112 = vmatmul.f32.gmra.mxu0 %v4111
          %v4113 = vpop.f32.mrf.mxu0
          %v4114 = vadd.f32 %v3910, %v4113
          %v4115 = vand.u32 %v2214, 4294901760
          %v4116 = vsub.f32 %v2214, %v4115
          %v4117 = vand.u32 %v4116, 4294901760
          %4118 = vmatmul.f32.gmra.mxu0 %v4117
          %v4119 = vpop.f32.mrf.mxu0
          %v4120 = vadd.f32 %v3915, %v4119
          %v4121 = vand.u32 %v2217, 4294901760
          %v4122 = vsub.f32 %v2217, %v4121
          %v4123 = vand.u32 %v4122, 4294901760
          %4124 = vmatmul.f32.gmra.mxu0 %v4123
          %v4125 = vpop.f32.mrf.mxu0
          %v4126 = vadd.f32 %v3920, %v4125
          %v4127 = vand.u32 %v2220, 4294901760
          %v4128 = vsub.f32 %v2220, %v4127
          %v4129 = vand.u32 %v4128, 4294901760
          %4130 = vmatmul.f32.gmra.mxu0 %v4129
          %v4131 = vpop.f32.mrf.mxu0
          %v4132 = vadd.f32 %v3925, %v4131
          %v4133 = vand.u32 %v2223, 4294901760
          %v4134 = vsub.f32 %v2223, %v4133
          %v4135 = vand.u32 %v4134, 4294901760
          %4136 = vmatmul.f32.gmra.mxu0 %v4135
          %v4137 = vpop.f32.mrf.mxu0
          %v4138 = vadd.f32 %v3930, %v4137
          %v4139 = vand.u32 %v2226, 4294901760
          %v4140 = vsub.f32 %v2226, %v4139
          %v4141 = vand.u32 %v4140, 4294901760
          %4142 = vmatmul.f32.gmra.mxu0 %v4141
          %v4143 = vpop.f32.mrf.mxu0
          %v4144 = vadd.f32 %v3935, %v4143
          %v4145 = vand.u32 %v2229, 4294901760
          %v4146 = vsub.f32 %v2229, %v4145
          %v4147 = vand.u32 %v4146, 4294901760
          %4148 = vmatmul.f32.gmra.mxu0 %v4147
          %v4149 = vpop.f32.mrf.mxu0
          %v4150 = vadd.f32 %v3940, %v4149
          %4151 = vdwg.mxu0
          %4152 = vmatpush.msra.mxu0 0.0
          %4153 = vmatpush.msra.mxu0 0.0
          %4154 = vmatpush.msra.mxu0 0.0
          %4155 = vmatpush.msra.mxu0 0.0
          %4156 = vmatpush.msra.mxu0 0.0
          %4157 = vmatpush.msra.mxu0 0.0
          %4158 = vmatpush.msra.mxu0 0.0
          %4159 = vmatpush.msra.mxu0 0.0
          %4160 = vmatpush.msra.mxu0 0.0
          %4161 = vmatpush.msra.mxu0 0.0
          %4162 = vmatpush.msra.mxu0 0.0
          %4163 = vmatpush.msra.mxu0 0.0
          %4164 = vmatpush.msra.mxu0 0.0
          %4165 = vmatpush.msra.mxu0 0.0
          %4166 = vmatpush.msra.mxu0 0.0
          %v4167 = vand.u32 %v3338, 4294901760
          %v4168 = vsub.f32 %v3338, %v4167
          %v4169 = vand.u32 %v4168, 4294901760
          %4170 = vmatpush.msra.mxu0 %v4169
          %v4171 = vand.u32 %v2136, 4294901760
          %4172 = vmatmul.f32.gmra.mxu0 %v4171
          %v4173 = vpop.f32.mrf.mxu0
          %v4174 = vadd.f32 %v3964, %v4173
          %v4175 = vand.u32 %v2139, 4294901760
          %4176 = vmatmul.f32.gmra.mxu0 %v4175
          %v4177 = vpop.f32.mrf.mxu0
          %v4178 = vadd.f32 %v3970, %v4177
          %v4179 = vand.u32 %v2142, 4294901760
          %4180 = vmatmul.f32.gmra.mxu0 %v4179
          %v4181 = vpop.f32.mrf.mxu0
          %v4182 = vadd.f32 %v3976, %v4181
          %v4183 = vand.u32 %v2145, 4294901760
          %4184 = vmatmul.f32.gmra.mxu0 %v4183
          %v4185 = vpop.f32.mrf.mxu0
          %v4186 = vadd.f32 %v3982, %v4185
          %v4187 = vand.u32 %v2148, 4294901760
          %4188 = vmatmul.f32.gmra.mxu0 %v4187
          %v4189 = vpop.f32.mrf.mxu0
          %v4190 = vadd.f32 %v3988, %v4189
          %v4191 = vand.u32 %v2151, 4294901760
          %4192 = vmatmul.f32.gmra.mxu0 %v4191
          %v4193 = vpop.f32.mrf.mxu0
          %v4194 = vadd.f32 %v3994, %v4193
          %v4195 = vand.u32 %v2154, 4294901760
          %4196 = vmatmul.f32.gmra.mxu0 %v4195
          %v4197 = vpop.f32.mrf.mxu0
          %v4198 = vadd.f32 %v4000, %v4197
          %v4199 = vand.u32 %v2157, 4294901760
          %4200 = vmatmul.f32.gmra.mxu0 %v4199
          %v4201 = vpop.f32.mrf.mxu0
          %v4202 = vadd.f32 %v4006, %v4201
          %v4203 = vand.u32 %v2160, 4294901760
          %4204 = vmatmul.f32.gmra.mxu0 %v4203
          %v4205 = vpop.f32.mrf.mxu0
          %v4206 = vadd.f32 %v4012, %v4205
          %v4207 = vand.u32 %v2163, 4294901760
          %4208 = vmatmul.f32.gmra.mxu0 %v4207
          %v4209 = vpop.f32.mrf.mxu0
          %v4210 = vadd.f32 %v4018, %v4209
          %v4211 = vand.u32 %v2166, 4294901760
          %4212 = vmatmul.f32.gmra.mxu0 %v4211
          %v4213 = vpop.f32.mrf.mxu0
          %v4214 = vadd.f32 %v4024, %v4213
          %v4215 = vand.u32 %v2169, 4294901760
          %4216 = vmatmul.f32.gmra.mxu0 %v4215
          %v4217 = vpop.f32.mrf.mxu0
          %v4218 = vadd.f32 %v4030, %v4217
          %v4219 = vand.u32 %v2172, 4294901760
          %4220 = vmatmul.f32.gmra.mxu0 %v4219
          %v4221 = vpop.f32.mrf.mxu0
          %v4222 = vadd.f32 %v4036, %v4221
          %v4223 = vand.u32 %v2175, 4294901760
          %4224 = vmatmul.f32.gmra.mxu0 %v4223
          %v4225 = vpop.f32.mrf.mxu0
          %v4226 = vadd.f32 %v4042, %v4225
          %v4227 = vand.u32 %v2178, 4294901760
          %4228 = vmatmul.f32.gmra.mxu0 %v4227
          %v4229 = vpop.f32.mrf.mxu0
          %v4230 = vadd.f32 %v4048, %v4229
          %v4231 = vand.u32 %v2181, 4294901760
          %4232 = vmatmul.f32.gmra.mxu0 %v4231
          %v4233 = vpop.f32.mrf.mxu0
          %v4234 = vadd.f32 %v4054, %v4233
          %v4235 = vand.u32 %v2184, 4294901760
          %4236 = vmatmul.f32.gmra.mxu0 %v4235
          %v4237 = vpop.f32.mrf.mxu0
          %v4238 = vadd.f32 %v4060, %v4237
          %v4239 = vand.u32 %v2187, 4294901760
          %4240 = vmatmul.f32.gmra.mxu0 %v4239
          %v4241 = vpop.f32.mrf.mxu0
          %v4242 = vadd.f32 %v4066, %v4241
          %v4243 = vand.u32 %v2190, 4294901760
          %4244 = vmatmul.f32.gmra.mxu0 %v4243
          %v4245 = vpop.f32.mrf.mxu0
          %v4246 = vadd.f32 %v4072, %v4245
          %v4247 = vand.u32 %v2193, 4294901760
          %4248 = vmatmul.f32.gmra.mxu0 %v4247
          %v4249 = vpop.f32.mrf.mxu0
          %v4250 = vadd.f32 %v4078, %v4249
          %v4251 = vand.u32 %v2196, 4294901760
          %4252 = vmatmul.f32.gmra.mxu0 %v4251
          %v4253 = vpop.f32.mrf.mxu0
          %v4254 = vadd.f32 %v4084, %v4253
          %v4255 = vand.u32 %v2199, 4294901760
          %4256 = vmatmul.f32.gmra.mxu0 %v4255
          %v4257 = vpop.f32.mrf.mxu0
          %v4258 = vadd.f32 %v4090, %v4257
          %v4259 = vand.u32 %v2202, 4294901760
          %4260 = vmatmul.f32.gmra.mxu0 %v4259
          %v4261 = vpop.f32.mrf.mxu0
          %v4262 = vadd.f32 %v4096, %v4261
          %v4263 = vand.u32 %v2205, 4294901760
          %4264 = vmatmul.f32.gmra.mxu0 %v4263
          %v4265 = vpop.f32.mrf.mxu0
          %v4266 = vadd.f32 %v4102, %v4265
          %v4267 = vand.u32 %v2208, 4294901760
          %4268 = vmatmul.f32.gmra.mxu0 %v4267
          %v4269 = vpop.f32.mrf.mxu0
          %v4270 = vadd.f32 %v4108, %v4269
          %v4271 = vand.u32 %v2211, 4294901760
          %4272 = vmatmul.f32.gmra.mxu0 %v4271
          %v4273 = vpop.f32.mrf.mxu0
          %v4274 = vadd.f32 %v4114, %v4273
          %v4275 = vand.u32 %v2214, 4294901760
          %4276 = vmatmul.f32.gmra.mxu0 %v4275
          %v4277 = vpop.f32.mrf.mxu0
          %v4278 = vadd.f32 %v4120, %v4277
          %v4279 = vand.u32 %v2217, 4294901760
          %4280 = vmatmul.f32.gmra.mxu0 %v4279
          %v4281 = vpop.f32.mrf.mxu0
          %v4282 = vadd.f32 %v4126, %v4281
          %v4283 = vand.u32 %v2220, 4294901760
          %4284 = vmatmul.f32.gmra.mxu0 %v4283
          %v4285 = vpop.f32.mrf.mxu0
          %v4286 = vadd.f32 %v4132, %v4285
          %v4287 = vand.u32 %v2223, 4294901760
          %4288 = vmatmul.f32.gmra.mxu0 %v4287
          %v4289 = vpop.f32.mrf.mxu0
          %v4290 = vadd.f32 %v4138, %v4289
          %v4291 = vand.u32 %v2226, 4294901760
          %4292 = vmatmul.f32.gmra.mxu0 %v4291
          %v4293 = vpop.f32.mrf.mxu0
          %v4294 = vadd.f32 %v4144, %v4293
          %v4295 = vand.u32 %v2229, 4294901760
          %4296 = vmatmul.f32.gmra.mxu0 %v4295
          %v4297 = vpop.f32.mrf.mxu0
          %v4298 = vadd.f32 %v4150, %v4297
          %4299 = vdwg.mxu0
          %4300 = vmatpush.msra.mxu0 0.0
          %4301 = vmatpush.msra.mxu0 0.0
          %4302 = vmatpush.msra.mxu0 0.0
          %4303 = vmatpush.msra.mxu0 0.0
          %4304 = vmatpush.msra.mxu0 0.0
          %4305 = vmatpush.msra.mxu0 0.0
          %4306 = vmatpush.msra.mxu0 0.0
          %4307 = vmatpush.msra.mxu0 0.0
          %4308 = vmatpush.msra.mxu0 0.0
          %4309 = vmatpush.msra.mxu0 0.0
          %4310 = vmatpush.msra.mxu0 0.0
          %4311 = vmatpush.msra.mxu0 0.0
          %4312 = vmatpush.msra.mxu0 0.0
          %4313 = vmatpush.msra.mxu0 0.0
          %4314 = vmatpush.msra.mxu0 0.0
          %v4315 = vand.u32 %v3338, 4294901760
          %4316 = vmatpush.msra.mxu0 %v4315
          %v4317 = vand.u32 %v2136, 4294901760
          %4318 = vmatmul.f32.gmra.mxu0 %v4317
          %v4319 = vpop.f32.mrf.mxu0
          %v4320 = vadd.f32 %v4174, %v4319
          %v4321 = vand.u32 %v2139, 4294901760
          %4322 = vmatmul.f32.gmra.mxu0 %v4321
          %v4323 = vpop.f32.mrf.mxu0
          %v4324 = vadd.f32 %v4178, %v4323
          %v4325 = vand.u32 %v2142, 4294901760
          %4326 = vmatmul.f32.gmra.mxu0 %v4325
          %v4327 = vpop.f32.mrf.mxu0
          %v4328 = vadd.f32 %v4182, %v4327
          %v4329 = vand.u32 %v2145, 4294901760
          %4330 = vmatmul.f32.gmra.mxu0 %v4329
          %v4331 = vpop.f32.mrf.mxu0
          %v4332 = vadd.f32 %v4186, %v4331
          %v4333 = vand.u32 %v2148, 4294901760
          %4334 = vmatmul.f32.gmra.mxu0 %v4333
          %v4335 = vpop.f32.mrf.mxu0
          %v4336 = vadd.f32 %v4190, %v4335
          %v4337 = vand.u32 %v2151, 4294901760
          %4338 = vmatmul.f32.gmra.mxu0 %v4337
          %v4339 = vpop.f32.mrf.mxu0
          %v4340 = vadd.f32 %v4194, %v4339
          %v4341 = vand.u32 %v2154, 4294901760
          %4342 = vmatmul.f32.gmra.mxu0 %v4341
          %v4343 = vpop.f32.mrf.mxu0
          %v4344 = vadd.f32 %v4198, %v4343
          %v4345 = vand.u32 %v2157, 4294901760
          %4346 = vmatmul.f32.gmra.mxu0 %v4345
          %v4347 = vpop.f32.mrf.mxu0
          %v4348 = vadd.f32 %v4202, %v4347
          %v4349 = vand.u32 %v2160, 4294901760
          %4350 = vmatmul.f32.gmra.mxu0 %v4349
          %v4351 = vpop.f32.mrf.mxu0
          %v4352 = vadd.f32 %v4206, %v4351
          %v4353 = vand.u32 %v2163, 4294901760
          %4354 = vmatmul.f32.gmra.mxu0 %v4353
          %v4355 = vpop.f32.mrf.mxu0
          %v4356 = vadd.f32 %v4210, %v4355
          %v4357 = vand.u32 %v2166, 4294901760
          %4358 = vmatmul.f32.gmra.mxu0 %v4357
          %v4359 = vpop.f32.mrf.mxu0
          %v4360 = vadd.f32 %v4214, %v4359
          %v4361 = vand.u32 %v2169, 4294901760
          %4362 = vmatmul.f32.gmra.mxu0 %v4361
          %v4363 = vpop.f32.mrf.mxu0
          %v4364 = vadd.f32 %v4218, %v4363
          %v4365 = vand.u32 %v2172, 4294901760
          %4366 = vmatmul.f32.gmra.mxu0 %v4365
          %v4367 = vpop.f32.mrf.mxu0
          %v4368 = vadd.f32 %v4222, %v4367
          %v4369 = vand.u32 %v2175, 4294901760
          %4370 = vmatmul.f32.gmra.mxu0 %v4369
          %v4371 = vpop.f32.mrf.mxu0
          %v4372 = vadd.f32 %v4226, %v4371
          %v4373 = vand.u32 %v2178, 4294901760
          %4374 = vmatmul.f32.gmra.mxu0 %v4373
          %v4375 = vpop.f32.mrf.mxu0
          %v4376 = vadd.f32 %v4230, %v4375
          %v4377 = vand.u32 %v2181, 4294901760
          %4378 = vmatmul.f32.gmra.mxu0 %v4377
          %v4379 = vpop.f32.mrf.mxu0
          %v4380 = vadd.f32 %v4234, %v4379
          %v4381 = vand.u32 %v2184, 4294901760
          %4382 = vmatmul.f32.gmra.mxu0 %v4381
          %v4383 = vpop.f32.mrf.mxu0
          %v4384 = vadd.f32 %v4238, %v4383
          %v4385 = vand.u32 %v2187, 4294901760
          %4386 = vmatmul.f32.gmra.mxu0 %v4385
          %v4387 = vpop.f32.mrf.mxu0
          %v4388 = vadd.f32 %v4242, %v4387
          %v4389 = vand.u32 %v2190, 4294901760
          %4390 = vmatmul.f32.gmra.mxu0 %v4389
          %v4391 = vpop.f32.mrf.mxu0
          %v4392 = vadd.f32 %v4246, %v4391
          %v4393 = vand.u32 %v2193, 4294901760
          %4394 = vmatmul.f32.gmra.mxu0 %v4393
          %v4395 = vpop.f32.mrf.mxu0
          %v4396 = vadd.f32 %v4250, %v4395
          %v4397 = vand.u32 %v2196, 4294901760
          %4398 = vmatmul.f32.gmra.mxu0 %v4397
          %v4399 = vpop.f32.mrf.mxu0
          %v4400 = vadd.f32 %v4254, %v4399
          %v4401 = vand.u32 %v2199, 4294901760
          %4402 = vmatmul.f32.gmra.mxu0 %v4401
          %v4403 = vpop.f32.mrf.mxu0
          %v4404 = vadd.f32 %v4258, %v4403
          %v4405 = vand.u32 %v2202, 4294901760
          %4406 = vmatmul.f32.gmra.mxu0 %v4405
          %v4407 = vpop.f32.mrf.mxu0
          %v4408 = vadd.f32 %v4262, %v4407
          %v4409 = vand.u32 %v2205, 4294901760
          %4410 = vmatmul.f32.gmra.mxu0 %v4409
          %v4411 = vpop.f32.mrf.mxu0
          %v4412 = vadd.f32 %v4266, %v4411
          %v4413 = vand.u32 %v2208, 4294901760
          %4414 = vmatmul.f32.gmra.mxu0 %v4413
          %v4415 = vpop.f32.mrf.mxu0
          %v4416 = vadd.f32 %v4270, %v4415
          %v4417 = vand.u32 %v2211, 4294901760
          %4418 = vmatmul.f32.gmra.mxu0 %v4417
          %v4419 = vpop.f32.mrf.mxu0
          %v4420 = vadd.f32 %v4274, %v4419
          %v4421 = vand.u32 %v2214, 4294901760
          %4422 = vmatmul.f32.gmra.mxu0 %v4421
          %v4423 = vpop.f32.mrf.mxu0
          %v4424 = vadd.f32 %v4278, %v4423
          %v4425 = vand.u32 %v2217, 4294901760
          %4426 = vmatmul.f32.gmra.mxu0 %v4425
          %v4427 = vpop.f32.mrf.mxu0
          %v4428 = vadd.f32 %v4282, %v4427
          %v4429 = vand.u32 %v2220, 4294901760
          %4430 = vmatmul.f32.gmra.mxu0 %v4429
          %v4431 = vpop.f32.mrf.mxu0
          %v4432 = vadd.f32 %v4286, %v4431
          %v4433 = vand.u32 %v2223, 4294901760
          %4434 = vmatmul.f32.gmra.mxu0 %v4433
          %v4435 = vpop.f32.mrf.mxu0
          %v4436 = vadd.f32 %v4290, %v4435
          %v4437 = vand.u32 %v2226, 4294901760
          %4438 = vmatmul.f32.gmra.mxu0 %v4437
          %v4439 = vpop.f32.mrf.mxu0
          %v4440 = vadd.f32 %v4294, %v4439
          %v4441 = vand.u32 %v2229, 4294901760
          %4442 = vmatmul.f32.gmra.mxu0 %v4441
          %v4443 = vpop.f32.mrf.mxu0
          %v4444 = vadd.f32 %v4298, %v4443
          %4445 = vdwg.mxu0
          %v4446 = vmul.f32 %v1903, %v3212
          %v4447 = vmul.f32 %v1904, %v3216
          %v4448 = vmul.f32 %v1905, %v3220
          %v4449 = vmul.f32 %v1906, %v3224
          %v4450 = vmul.f32 %v1907, %v3228
          %v4451 = vmul.f32 %v1908, %v3232
          %v4452 = vmul.f32 %v1909, %v3236
          %v4453 = vmul.f32 %v1910, %v3240
          %v4454 = vmul.f32 %v1911, %v3244
          %v4455 = vmul.f32 %v1912, %v3248
          %v4456 = vmul.f32 %v1913, %v3252
          %v4457 = vmul.f32 %v1914, %v3256
          %v4458 = vmul.f32 %v1915, %v3260
          %v4459 = vmul.f32 %v1916, %v3264
          %v4460 = vmul.f32 %v1917, %v3268
          %v4461 = vmul.f32 %v1918, %v3272
          %v4462 = vmul.f32 %v1919, %v3276
          %v4463 = vmul.f32 %v1920, %v3280
          %v4464 = vmul.f32 %v1921, %v3284
          %v4465 = vmul.f32 %v1922, %v3288
          %v4466 = vmul.f32 %v1923, %v3292
          %v4467 = vmul.f32 %v1924, %v3296
          %v4468 = vmul.f32 %v1925, %v3300
          %v4469 = vmul.f32 %v1926, %v3304
          %v4470 = vmul.f32 %v1927, %v3308
          %v4471 = vmul.f32 %v1928, %v3312
          %v4472 = vmul.f32 %v1929, %v3316
          %v4473 = vmul.f32 %v1930, %v3320
          %v4474 = vmul.f32 %v1931, %v3324
          %v4475 = vmul.f32 %v1932, %v3328
          %v4476 = vmul.f32 %v1933, %v3332
          %v4477 = vmul.f32 %v1934, %v3336
          %v4478 = vsub.f32 %v4446, %v4320
          %v4479 = vsub.f32 %v4447, %v4324
          %v4480 = vsub.f32 %v4448, %v4328
          %v4481 = vsub.f32 %v4449, %v4332
          %v4482 = vsub.f32 %v4450, %v4336
          %v4483 = vsub.f32 %v4451, %v4340
          %v4484 = vsub.f32 %v4452, %v4344
          %v4485 = vsub.f32 %v4453, %v4348
          %v4486 = vsub.f32 %v4454, %v4352
          %v4487 = vsub.f32 %v4455, %v4356
          %v4488 = vsub.f32 %v4456, %v4360
          %v4489 = vsub.f32 %v4457, %v4364
          %v4490 = vsub.f32 %v4458, %v4368
          %v4491 = vsub.f32 %v4459, %v4372
          %v4492 = vsub.f32 %v4460, %v4376
          %v4493 = vsub.f32 %v4461, %v4380
          %v4494 = vsub.f32 %v4462, %v4384
          %v4495 = vsub.f32 %v4463, %v4388
          %v4496 = vsub.f32 %v4464, %v4392
          %v4497 = vsub.f32 %v4465, %v4396
          %v4498 = vsub.f32 %v4466, %v4400
          %v4499 = vsub.f32 %v4467, %v4404
          %v4500 = vsub.f32 %v4468, %v4408
          %v4501 = vsub.f32 %v4469, %v4412
          %v4502 = vsub.f32 %v4470, %v4416
          %v4503 = vsub.f32 %v4471, %v4420
          %v4504 = vsub.f32 %v4472, %v4424
          %v4505 = vsub.f32 %v4473, %v4428
          %v4506 = vsub.f32 %v4474, %v4432
          %v4507 = vsub.f32 %v4475, %v4436
          %v4508 = vsub.f32 %v4476, %v4440
          %v4509 = vsub.f32 %v4477, %v4444
          %4510 = vst [vmem:[%s383] sm:$0xff] %v4478
          %4511 = vst [vmem:[%s383 + $0x8] sm:$0xff] %v4479
          %4512 = vst [vmem:[%s383 + $0x10] sm:$0xff] %v4480
          %4513 = vst [vmem:[%s383 + $0x18] sm:$0xff] %v4481
          %4514 = vst [vmem:[%s383 + $0x20] sm:$0xff] %v4482
          %4515 = vst [vmem:[%s383 + $0x28] sm:$0xff] %v4483
          %4516 = vst [vmem:[%s383 + $0x30] sm:$0xff] %v4484
          %4517 = vst [vmem:[%s383 + $0x38] sm:$0xff] %v4485
          %4518 = vst [vmem:[%s383 + $0x40] sm:$0xff] %v4486
          %4519 = vst [vmem:[%s383 + $0x48] sm:$0xff] %v4487
          %4520 = vst [vmem:[%s383 + $0x50] sm:$0xff] %v4488
          %4521 = vst [vmem:[%s383 + $0x58] sm:$0xff] %v4489
          %4522 = vst [vmem:[%s383 + $0x60] sm:$0xff] %v4490
          %4523 = vst [vmem:[%s383 + $0x68] sm:$0xff] %v4491
          %4524 = vst [vmem:[%s383 + $0x70] sm:$0xff] %v4492
          %4525 = vst [vmem:[%s383 + $0x78] sm:$0xff] %v4493
          %4526 = vst [vmem:[%s383 + $0x80] sm:$0xff] %v4494
          %4527 = vst [vmem:[%s383 + $0x88] sm:$0xff] %v4495
          %4528 = vst [vmem:[%s383 + $0x90] sm:$0xff] %v4496
          %4529 = vst [vmem:[%s383 + $0x98] sm:$0xff] %v4497
          %4530 = vst [vmem:[%s383 + $0xa0] sm:$0xff] %v4498
          %4531 = vst [vmem:[%s383 + $0xa8] sm:$0xff] %v4499
          %4532 = vst [vmem:[%s383 + $0xb0] sm:$0xff] %v4500
          %4533 = vst [vmem:[%s383 + $0xb8] sm:$0xff] %v4501
          %4534 = vst [vmem:[%s383 + $0xc0] sm:$0xff] %v4502
          %4535 = vst [vmem:[%s383 + $0xc8] sm:$0xff] %v4503
          %4536 = vst [vmem:[%s383 + $0xd0] sm:$0xff] %v4504
          %4537 = vst [vmem:[%s383 + $0xd8] sm:$0xff] %v4505
          %4538 = vst [vmem:[%s383 + $0xe0] sm:$0xff] %v4506
          %4539 = vst [vmem:[%s383 + $0xe8] sm:$0xff] %v4507
          %4540 = vst [vmem:[%s383 + $0xf0] sm:$0xff] %v4508
          %4541 = vst [vmem:[%s383 + $0xf8] sm:$0xff] %v4509
        $region76: #{tpu_custom_call.1} parent=55 // pred_fallthru
          _
        %s4542 = sand.u32 %s261, 1
        %s4543 = scalar_lea.sflag [#allocation6], %s4542
        %s4544 = sand.u32 %s261, 1
        %s4545 = smul.addr %s4544, 256
        %s4546 = scalar_lea.vmem [#allocation7], %s4545
        // Predicated region
        $region77: #{tpu_custom_call.1} parent=55 // pred_check
          %p4547 = pneg %p271
        $region78: #{tpu_custom_call.1} parent=55 // pred_check_branch
          %4549 = sbr.rel (%p4547) target = $region80
        $region79: #{tpu_custom_call.1} parent=55 // pred_region
          %s4550 = smul.u32 %s30, %s31
          %s4551 = smul.u32 32, %s4550
          %4553 = vsyncadd %s4543, 0
          %s4554 = sadd.s32 %s29, %s4551
          %s4555 = smul.addr %s4554, 8
          %s4556 = scalar_lea.hbm %s9, %s4555
          %s4557 = sshll.u32 %s4546, 4
          %s4558 = int_to_ptr.vmem [resolvable:$true] %s4557
          %s4559 = sshll.u32 %s4556, 4
          %s4560 = int_to_ptr.hbm [resolvable:$true] %s4559
          %4565 = dma.vmem_to_hbm [thread:$0]  %s4558, 4096, %s4560, %s4543, 128, 128, 8
        $region80: #{tpu_custom_call.1} parent=55 // pred_fallthru
          _
      $region56: #{tpu_custom_call.1} parent=5 // pred_fallthru
        _
      %p4566 = scmp.le.s32.totalorder 2, %s19
      // Predicated region
      $region81: #{tpu_custom_call.1} parent=5 // pred_check
        %p4567 = pneg %p4566
      $region82: #{tpu_custom_call.1} parent=5 // pred_check_branch
        %4569 = sbr.rel (%p4567) target = $region84
      $region83: #{tpu_custom_call.1} parent=5 // pred_region
        %s4570 = ssub.s32 %s19, 2
        // Predicated region
        $region85: #{tpu_custom_call.1} parent=83 // pred_check
          %p4571 = pneg %p277
        $region86: #{tpu_custom_call.1} parent=83 // pred_check_branch
          %4573 = sbr.rel (%p4571) target = $region88
        $region87: #{tpu_custom_call.1} parent=83 // pred_region
          %s4574 = sand.u32 %s262, 1
          %s4575 = scalar_lea.sflag [#allocation6], %s4574
          %s4576 = sand.u32 %s262, 1
          %s4577 = smul.addr %s4576, 256
          %s4578 = scalar_lea.vmem [#allocation7], %s4577
          %4580 = dma.done %s4575, 4096
        $region88: #{tpu_custom_call.1} parent=83 // pred_fallthru
          _
      $region84: #{tpu_custom_call.1} parent=5 // pred_fallthru
        _
    $region6: #{tpu_custom_call.1} parent=1 // loop_footer
      %s23 = sadd.s32 1, %s19
    $region7: #{tpu_custom_call.1} parent=1 // loop_footer_branch
      %18 = sbr.rel target = $region3
    $region8: #{tpu_custom_call.1} parent=1 // loop_exit
      _
    %4581 = vsyncpa [#allocation5], 1
    %s4582 = scalar_lea.sflag [#allocation5], 1
    %4583 = vsyncpa %s4582, 1
    %4584 = vsyncpa [#allocation6], 1
    %s4585 = scalar_lea.sflag [#allocation6], 1
    %4586 = vsyncpa %s4585, 1

</llo_original>
